<compile_context>
chip_gen: v7x
topology: tpu7x:2x2x1
jax: 0.10.0
libtpu: 0.0.40
codegen_flags: <defaults>
</compile_context>

<pallas_src>
import jax
import jax.numpy as jnp
from jax.experimental import pallas as pl
from jax.experimental.pallas import tpu as pltpu

VMEM = pltpu.MemorySpace.VMEM


# ----------------------------------------------------------------------------
# In-kernel helper: fused fwd+bwd LSTM with hoisted input projection
# ----------------------------------------------------------------------------
def _bilstm_steps(x_bf16, wih, whh_f, whh_b, bias, S, B, H):
    """Bidirectional LSTM over a time-major flattened input.

    x_bf16      : (S*B, Din) bf16, row r = t*B + b.
    wih         : (Din, 8H) bf16 = [Wih_f^T | Wih_b^T] (both directions).
    whh_f/whh_b : (H, 4H) bf16 recurrent weights (pre-transposed).
    bias        : (1, 8H) f32 = [b_f | b_b], b = b_ih + b_hh per direction.
    Returns (hf_list, hb_list): Python lists (length S) of (B, H) f32 hidden
    states in time order.  PyTorch gate order i, f, g, o; carries kept in f32.
    """
    f32, bf16 = jnp.float32, jnp.bfloat16

    # Hoisted input projection for BOTH directions + bias: one lane-dense
    # matmul outside the serial recurrence.
    xw = jnp.dot(x_bf16, wih, preferred_element_type=f32) + bias   # (S*B, 8H)

    zero = jnp.zeros((B, H), f32)
    hf, cf, hb, cb = zero, zero, zero, zero
    hf_list = [None] * S
    hb_list = [None] * S

    for t in range(S):                      # static unroll: S is small
        tr = S - 1 - t                      # backward-direction position
        # per-step gates: precomputed x-projection + h @ Whh (bf16 MXU, f32 acc)
        zf = xw[t * B:(t + 1) * B, 0:4 * H] + jnp.dot(
            hf.astype(bf16), whh_f, preferred_element_type=f32)
        zb = xw[tr * B:(tr + 1) * B, 4 * H:8 * H] + jnp.dot(
            hb.astype(bf16), whh_b, preferred_element_type=f32)
        # full-width EUP, then lane-slice (gate order i, f, g, o)
        sig_f, tanh_zf = jax.nn.sigmoid(zf), jnp.tanh(zf)
        sig_b, tanh_zb = jax.nn.sigmoid(zb), jnp.tanh(zb)
        cf = sig_f[:, H:2 * H] * cf + sig_f[:, 0:H] * tanh_zf[:, 2 * H:3 * H]
        hf = sig_f[:, 3 * H:4 * H] * jnp.tanh(cf)
        cb = sig_b[:, H:2 * H] * cb + sig_b[:, 0:H] * tanh_zb[:, 2 * H:3 * H]
        hb = sig_b[:, 3 * H:4 * H] * jnp.tanh(cb)
        hf_list[t] = hf
        hb_list[tr] = hb
    return hf_list, hb_list


# ----------------------------------------------------------------------------
# Fused forward kernel
# ----------------------------------------------------------------------------
def graph_state_kernel(trig_ref,                         # (B, 1) int32
                       x_ref, adjb_ref,                  # (S*B, Din) bf16, (S*B, S*B) bf16
                       wih1_ref, whh1f_ref, whh1b_ref, b1_ref,
                       linw_ref, linb_ref, gcnw_ref, gcnb_ref,
                       wih2_ref, whh2f_ref, whh2b_ref, b2_ref,
                       p1w_ref, p1b_ref, p2w_ref, p2b_ref,
                       out_ref,                          # (B, out) f32
                       h1_ref):                          # (2*S*B, H1) f32 scratch
    f32, bf16 = jnp.float32, jnp.bfloat16
    B = trig_ref.shape[0]
    SB = x_ref.shape[0]
    S = SB // B
    H1 = whh1f_ref.shape[0]
    H2 = whh2f_ref.shape[0]

    # ---- stage 1: biLSTM #1 over embedded tokens -----------------------------
    hf1, hb1 = _bilstm_steps(x_ref[...], wih1_ref[...], whh1f_ref[...],
                             whh1b_ref[...], b1_ref[...], S, B, H1)
    # direction-major assembly: full-row (B, H1) stores, then two dense loads
    for t in range(S):
        h1_ref[t * B:(t + 1) * B, :] = hf1[t]
        h1_ref[SB + t * B:SB + (t + 1) * B, :] = hb1[t]
    h_bi = jnp.concatenate([h1_ref[0:SB, :], h1_ref[SB:2 * SB, :]],
                           axis=-1).astype(bf16)                 # (S*B, 2*H1)

    # ---- stage 2: Linear + ReLU, then batched GCN (dropout = eval identity) --
    lin = jnp.maximum(
        jnp.dot(h_bi, linw_ref[...], preferred_element_type=f32) + linb_ref[...],
        0.0)                                                     # (S*B, 2*H1)
    xw = jnp.dot(lin.astype(bf16), gcnw_ref[...],
                 preferred_element_type=f32)                     # (S*B, G)
    g = jnp.maximum(
        jnp.dot(adjb_ref[...], xw.astype(bf16), preferred_element_type=f32)
        + gcnb_ref[...], 0.0)                                    # (S*B, G)

    # ---- stage 3: biLSTM #2 over GCN features --------------------------------
    hf2, hb2 = _bilstm_steps(g.astype(bf16), wih2_ref[...], whh2f_ref[...],
                             whh2b_ref[...], b2_ref[...], S, B, H2)

    # ---- stage 4: trigger-token gather (compare/select) + 2-layer MLP head ---
    trig = trig_ref[...]                                         # (B, 1) int32
    tx_f = jnp.zeros((B, H2), f32)
    tx_b = jnp.zeros((B, H2), f32)
    for t in range(S):
        hit = trig == t                                          # (B, 1) bool
        tx_f = jnp.where(hit, hf2[t], tx_f)
        tx_b = jnp.where(hit, hb2[t], tx_b)
    tx = jnp.concatenate([tx_f, tx_b], axis=-1).astype(bf16)      # (B, 2*H2)

    hmid = jnp.maximum(
        jnp.dot(tx, p1w_ref[...], preferred_element_type=f32) + p1b_ref[...],
        0.0)
    y = jnp.dot(hmid.astype(bf16), p2w_ref[...],
                preferred_element_type=f32) + p2b_ref[...]
    out_ref[...] = y.astype(out_ref.dtype)


# ----------------------------------------------------------------------------
# Parameters
# ----------------------------------------------------------------------------
def init_params(key, vocab, d_in, g_out, l_h, out_size):
    """Raw parameters in PyTorch conventions ((out,in) Linear, (4H,in)/(4H,H)
    LSTM weights, gate order i,f,g,o, single combined bias b = b_ih + b_hh)."""
    ks = jax.random.split(key, 20)

    def nrm(k, shape, scale=0.1):
        return scale * jax.random.normal(k, shape, jnp.float32)

    H1 = d_in          # first LSTM hidden size
    D1 = 2 * d_in      # bidirectional output size
    H2 = 2 * d_in      # Encoder LSTM hidden size (= in_size * 2)
    return dict(
        emb=nrm(ks[0], (vocab, d_in)),
        l1_wih_f=nrm(ks[1], (4 * H1, d_in)), l1_whh_f=nrm(ks[2], (4 * H1, H1)),
        l1_b_f=nrm(ks[3], (4 * H1,)),
        l1_wih_b=nrm(ks[4], (4 * H1, d_in)), l1_whh_b=nrm(ks[5], (4 * H1, H1)),
        l1_b_b=nrm(ks[6], (4 * H1,)),
        lin_w=nrm(ks[7], (D1, D1)), lin_b=nrm(ks[8], (D1,)),
        gcn_w=nrm(ks[9], (D1, g_out)), gcn_b=nrm(ks[10], (g_out,)),
        l2_wih_f=nrm(ks[11], (4 * H2, g_out)), l2_whh_f=nrm(ks[12], (4 * H2, H2)),
        l2_b_f=nrm(ks[13], (4 * H2,)),
        l2_wih_b=nrm(ks[14], (4 * H2, g_out)), l2_whh_b=nrm(ks[15], (4 * H2, H2)),
        l2_b_b=nrm(ks[16], (4 * H2,)),
        p1_w=nrm(ks[17], (l_h, 2 * H2)), p1_b=nrm(ks[18], (l_h,)),
        p2_w=nrm(ks[19], (out_size, l_h)), p2_b=jnp.zeros((out_size,), jnp.float32),
    )


def pack_params(p):
    """One-time weight prep (outside jit): stack [Wih_f | Wih_b] along lanes,
    pre-transpose everything to (in, out), merge per-direction biases into one
    (1, 8H) row, and cast every MXU operand to bf16 (f32 accumulation happens
    in-kernel; biases stay f32)."""
    f32, bf16 = jnp.float32, jnp.bfloat16

    def wih_pack(wf, wb):                       # -> (Din, 8H) bf16
        return jnp.concatenate([wf.T, wb.T], axis=1).astype(bf16)

    def whh_pack(w):                            # -> (H, 4H) bf16
        return w.T.astype(bf16)

    def b_pack(bf_, bb_):                       # -> (1, 8H) f32
        return jnp.concatenate([bf_, bb_]).reshape(1, -1).astype(f32)

    return dict(
        emb=p["emb"].astype(bf16),
        wih1=wih_pack(p["l1_wih_f"], p["l1_wih_b"]),
        whh1f=whh_pack(p["l1_whh_f"]), whh1b=whh_pack(p["l1_whh_b"]),
        b1=b_pack(p["l1_b_f"], p["l1_b_b"]),
        lin_w=p["lin_w"].T.astype(bf16), lin_b=p["lin_b"].reshape(1, -1).astype(f32),
        gcn_w=p["gcn_w"].astype(bf16), gcn_b=p["gcn_b"].reshape(1, -1).astype(f32),
        wih2=wih_pack(p["l2_wih_f"], p["l2_wih_b"]),
        whh2f=whh_pack(p["l2_whh_f"]), whh2b=whh_pack(p["l2_whh_b"]),
        b2=b_pack(p["l2_b_f"], p["l2_b_b"]),
        p1_w=p["p1_w"].T.astype(bf16), p1_b=p["p1_b"].reshape(1, -1).astype(f32),
        p2_w=p["p2_w"].T.astype(bf16), p2_b=p["p2_b"].reshape(1, -1).astype(f32),
    )


# ----------------------------------------------------------------------------
# Forward pass (single fused pallas_call)
# ----------------------------------------------------------------------------
def graph_state_2eep_forward(packed, x_ids, adj, trigger):
    B, S = x_ids.shape
    d_in = packed["emb"].shape[1]
    H1 = d_in
    out_size = packed["p2_w"].shape[1]

    # TODO(synk): embedding lookup stays as an XLA gather (dynamic vocab
    # indexing); done directly in time-major flattened layout (row = t*B + b)
    # so no transpose / reshape glue ops are needed around the kernel.
    x2d = packed["emb"][x_ids.T].reshape(S * B, d_in)          # (S*B, Din) bf16

    # Interleaved block-diagonal adjacency matching row order r = t*B + b:
    # A_big[(t,b),(s,c)] = adj[b,t,s] * (b == c); pre-cast to bf16 once.
    eye_b = jnp.eye(B, dtype=adj.dtype)
    adj_big = jnp.einsum("bts,bc->tbsc", adj, eye_b).reshape(
        S * B, S * B).astype(jnp.bfloat16)

    trig = trigger.reshape(B, 1).astype(jnp.int32)

    y = pl.pallas_call(
        graph_state_kernel,
        out_shape=jax.ShapeDtypeStruct((B, out_size), jnp.float32),
        in_specs=[pl.BlockSpec(memory_space=VMEM)] * 19,
        out_specs=pl.BlockSpec(memory_space=VMEM),
        scratch_shapes=[
            pltpu.VMEM((2 * S * B, H1), jnp.float32),   # biLSTM #1 states (dir-major)
        ],
    )(trig, x2d, adj_big,
      packed["wih1"], packed["whh1f"], packed["whh1b"], packed["b1"],
      packed["lin_w"], packed["lin_b"], packed["gcn_w"], packed["gcn_b"],
      packed["wih2"], packed["whh2f"], packed["whh2b"], packed["b2"],
      packed["p1_w"], packed["p1_b"], packed["p2_w"], packed["p2_b"])

    # torch `.squeeze()` parity: (B,) when out_size == 1, (B, out) otherwise.
    return jnp.squeeze(y)


if __name__ == "__main__":
    B, S = 2, 8
    vocab, d_in, g_out, l_h, out_size = 50, 32, 32, 32, 1

    key = jax.random.PRNGKey(0)
    kp, kx, ka, kt = jax.random.split(key, 4)

    params = init_params(kp, vocab, d_in, g_out, l_h, out_size)
    packed = pack_params(params)                          # one-time weight prep

    x_ids = jax.random.randint(kx, (B, S), 0, vocab, dtype=jnp.int32)
    adj = (jax.random.uniform(ka, (B, S, S)) > 0.5).astype(jnp.float32)
    adj = adj + jnp.eye(S, dtype=jnp.float32)[None]
    adj = adj / jnp.sum(adj, axis=-1, keepdims=True)      # row-normalised A
    trigger = jax.random.randint(kt, (B,), 0, S, dtype=jnp.int32)

    out = jax.jit(graph_state_2eep_forward)(packed, x_ids, adj, trigger)
    out = jax.block_until_ready(out)
    assert out.shape == (B,)
    print("KERNEL_OK")
</pallas_src>

<mosaic_0001>
module attributes {stable_mosaic.version = 11 : i64} {
  func.func @graph_state_kernel(%arg0: memref<2x1xi32, #tpu.memory_space<vmem>>, %arg1: memref<16x32xbf16, #tpu.memory_space<vmem>>, %arg2: memref<16x16xbf16, #tpu.memory_space<vmem>>, %arg3: memref<32x256xbf16, #tpu.memory_space<vmem>>, %arg4: memref<32x128xbf16, #tpu.memory_space<vmem>>, %arg5: memref<32x128xbf16, #tpu.memory_space<vmem>>, %arg6: memref<1x256xf32, #tpu.memory_space<vmem>>, %arg7: memref<64x64xbf16, #tpu.memory_space<vmem>>, %arg8: memref<1x64xf32, #tpu.memory_space<vmem>>, %arg9: memref<64x32xbf16, #tpu.memory_space<vmem>>, %arg10: memref<1x32xf32, #tpu.memory_space<vmem>>, %arg11: memref<32x512xbf16, #tpu.memory_space<vmem>>, %arg12: memref<64x256xbf16, #tpu.memory_space<vmem>>, %arg13: memref<64x256xbf16, #tpu.memory_space<vmem>>, %arg14: memref<1x512xf32, #tpu.memory_space<vmem>>, %arg15: memref<128x32xbf16, #tpu.memory_space<vmem>>, %arg16: memref<1x32xf32, #tpu.memory_space<vmem>>, %arg17: memref<32x1xbf16, #tpu.memory_space<vmem>>, %arg18: memref<1x1xf32, #tpu.memory_space<vmem>>, %arg19: memref<2x1xf32, #tpu.memory_space<vmem>>, %arg20: memref<32x32xf32, #tpu.memory_space<vmem>>) attributes {dimension_semantics = [], scalar_prefetch = 0 : i64, scratch_operands = 1 : i64, tpu.core_type = #tpu.core_type<tc>} {
    %c0 = arith.constant 0 : index
    %c0_0 = arith.constant 0 : index
    %0 = vector.load %arg1[%c0, %c0_0] : memref<16x32xbf16, #tpu.memory_space<vmem>>, vector<16x32xbf16>
    %c0_1 = arith.constant 0 : index
    %c0_2 = arith.constant 0 : index
    %1 = vector.load %arg3[%c0_1, %c0_2] : memref<32x256xbf16, #tpu.memory_space<vmem>>, vector<32x256xbf16>
    %c0_3 = arith.constant 0 : index
    %c0_4 = arith.constant 0 : index
    %2 = vector.load %arg4[%c0_3, %c0_4] : memref<32x128xbf16, #tpu.memory_space<vmem>>, vector<32x128xbf16>
    %c0_5 = arith.constant 0 : index
    %c0_6 = arith.constant 0 : index
    %3 = vector.load %arg5[%c0_5, %c0_6] : memref<32x128xbf16, #tpu.memory_space<vmem>>, vector<32x128xbf16>
    %c0_7 = arith.constant 0 : index
    %c0_8 = arith.constant 0 : index
    %4 = vector.load %arg6[%c0_7, %c0_8] : memref<1x256xf32, #tpu.memory_space<vmem>>, vector<1x256xf32>
    %cst = arith.constant dense<0.000000e+00> : vector<16x256xf32>
    %5 = tpu.matmul %0, %1, %cst {dimension_numbers = #tpu.dot_dimension_numbers<[1], [0], [0], [1], [0, 0, 1, 1], [], []>} : vector<16x32xbf16>, vector<32x256xbf16>, vector<16x256xf32> -> vector<16x256xf32>
    %6 = vector.broadcast %4 : vector<1x256xf32> to vector<16x256xf32>
    %7 = arith.addf %5, %6 : vector<16x256xf32>
    %cst_9 = arith.constant 0.000000e+00 : f32
    %8 = vector.broadcast %cst_9 : f32 to vector<2x32xf32>
    %9 = vector.extract_strided_slice %7 {offsets = [0, 0], sizes = [2, 128], strides = [1, 1]} : vector<16x256xf32> to vector<2x128xf32>
    %10 = arith.truncf %8 : vector<2x32xf32> to vector<2x32xbf16>
    %cst_10 = arith.constant dense<0.000000e+00> : vector<2x128xf32>
    %11 = tpu.matmul %10, %2, %cst_10 {dimension_numbers = #tpu.dot_dimension_numbers<[1], [0], [0], [1], [0, 0, 1, 1], [], []>} : vector<2x32xbf16>, vector<32x128xbf16>, vector<2x128xf32> -> vector<2x128xf32>
    %12 = arith.addf %9, %11 : vector<2x128xf32>
    %13 = vector.extract_strided_slice %7 {offsets = [14, 128], sizes = [2, 128], strides = [1, 1]} : vector<16x256xf32> to vector<2x128xf32>
    %14 = arith.truncf %8 : vector<2x32xf32> to vector<2x32xbf16>
    %cst_11 = arith.constant dense<0.000000e+00> : vector<2x128xf32>
    %15 = tpu.matmul %14, %3, %cst_11 {dimension_numbers = #tpu.dot_dimension_numbers<[1], [0], [0], [1], [0, 0, 1, 1], [], []>} : vector<2x32xbf16>, vector<32x128xbf16>, vector<2x128xf32> -> vector<2x128xf32>
    %16 = arith.addf %13, %15 : vector<2x128xf32>
    %17 = arith.negf %12 : vector<2x128xf32>
    %18 = math.exp %17 : vector<2x128xf32>
    %cst_12 = arith.constant 1.000000e+00 : f32
    %19 = vector.broadcast %cst_12 : f32 to vector<2x128xf32>
    %20 = arith.addf %19, %18 : vector<2x128xf32>
    %21 = arith.divf %19, %20 : vector<2x128xf32>
    %22 = math.tanh %12 : vector<2x128xf32>
    %23 = arith.negf %16 : vector<2x128xf32>
    %24 = math.exp %23 : vector<2x128xf32>
    %cst_13 = arith.constant 1.000000e+00 : f32
    %25 = vector.broadcast %cst_13 : f32 to vector<2x128xf32>
    %26 = arith.addf %25, %24 : vector<2x128xf32>
    %27 = arith.divf %25, %26 : vector<2x128xf32>
    %28 = math.tanh %16 : vector<2x128xf32>
    %29 = vector.extract_strided_slice %21 {offsets = [0, 32], sizes = [2, 32], strides = [1, 1]} : vector<2x128xf32> to vector<2x32xf32>
    %30 = arith.mulf %29, %8 : vector<2x32xf32>
    %31 = vector.extract_strided_slice %21 {offsets = [0, 0], sizes = [2, 32], strides = [1, 1]} : vector<2x128xf32> to vector<2x32xf32>
    %32 = vector.extract_strided_slice %22 {offsets = [0, 64], sizes = [2, 32], strides = [1, 1]} : vector<2x128xf32> to vector<2x32xf32>
    %33 = arith.mulf %31, %32 : vector<2x32xf32>
    %34 = arith.addf %30, %33 : vector<2x32xf32>
    %35 = vector.extract_strided_slice %21 {offsets = [0, 96], sizes = [2, 32], strides = [1, 1]} : vector<2x128xf32> to vector<2x32xf32>
    %36 = math.tanh %34 : vector<2x32xf32>
    %37 = arith.mulf %35, %36 : vector<2x32xf32>
    %38 = vector.extract_strided_slice %27 {offsets = [0, 32], sizes = [2, 32], strides = [1, 1]} : vector<2x128xf32> to vector<2x32xf32>
    %39 = arith.mulf %38, %8 : vector<2x32xf32>
    %40 = vector.extract_strided_slice %27 {offsets = [0, 0], sizes = [2, 32], strides = [1, 1]} : vector<2x128xf32> to vector<2x32xf32>
    %41 = vector.extract_strided_slice %28 {offsets = [0, 64], sizes = [2, 32], strides = [1, 1]} : vector<2x128xf32> to vector<2x32xf32>
    %42 = arith.mulf %40, %41 : vector<2x32xf32>
    %43 = arith.addf %39, %42 : vector<2x32xf32>
    %44 = vector.extract_strided_slice %27 {offsets = [0, 96], sizes = [2, 32], strides = [1, 1]} : vector<2x128xf32> to vector<2x32xf32>
    %45 = math.tanh %43 : vector<2x32xf32>
    %46 = arith.mulf %44, %45 : vector<2x32xf32>
    %47 = vector.extract_strided_slice %7 {offsets = [2, 0], sizes = [2, 128], strides = [1, 1]} : vector<16x256xf32> to vector<2x128xf32>
    %48 = arith.truncf %37 : vector<2x32xf32> to vector<2x32xbf16>
    %cst_14 = arith.constant dense<0.000000e+00> : vector<2x128xf32>
    %49 = tpu.matmul %48, %2, %cst_14 {dimension_numbers = #tpu.dot_dimension_numbers<[1], [0], [0], [1], [0, 0, 1, 1], [], []>} : vector<2x32xbf16>, vector<32x128xbf16>, vector<2x128xf32> -> vector<2x128xf32>
    %50 = arith.addf %47, %49 : vector<2x128xf32>
    %51 = vector.extract_strided_slice %7 {offsets = [12, 128], sizes = [2, 128], strides = [1, 1]} : vector<16x256xf32> to vector<2x128xf32>
    %52 = arith.truncf %46 : vector<2x32xf32> to vector<2x32xbf16>
    %cst_15 = arith.constant dense<0.000000e+00> : vector<2x128xf32>
    %53 = tpu.matmul %52, %3, %cst_15 {dimension_numbers = #tpu.dot_dimension_numbers<[1], [0], [0], [1], [0, 0, 1, 1], [], []>} : vector<2x32xbf16>, vector<32x128xbf16>, vector<2x128xf32> -> vector<2x128xf32>
    %54 = arith.addf %51, %53 : vector<2x128xf32>
    %55 = arith.negf %50 : vector<2x128xf32>
    %56 = math.exp %55 : vector<2x128xf32>
    %cst_16 = arith.constant 1.000000e+00 : f32
    %57 = vector.broadcast %cst_16 : f32 to vector<2x128xf32>
    %58 = arith.addf %57, %56 : vector<2x128xf32>
    %59 = arith.divf %57, %58 : vector<2x128xf32>
    %60 = math.tanh %50 : vector<2x128xf32>
    %61 = arith.negf %54 : vector<2x128xf32>
    %62 = math.exp %61 : vector<2x128xf32>
    %cst_17 = arith.constant 1.000000e+00 : f32
    %63 = vector.broadcast %cst_17 : f32 to vector<2x128xf32>
    %64 = arith.addf %63, %62 : vector<2x128xf32>
    %65 = arith.divf %63, %64 : vector<2x128xf32>
    %66 = math.tanh %54 : vector<2x128xf32>
    %67 = vector.extract_strided_slice %59 {offsets = [0, 32], sizes = [2, 32], strides = [1, 1]} : vector<2x128xf32> to vector<2x32xf32>
    %68 = arith.mulf %67, %34 : vector<2x32xf32>
    %69 = vector.extract_strided_slice %59 {offsets = [0, 0], sizes = [2, 32], strides = [1, 1]} : vector<2x128xf32> to vector<2x32xf32>
    %70 = vector.extract_strided_slice %60 {offsets = [0, 64], sizes = [2, 32], strides = [1, 1]} : vector<2x128xf32> to vector<2x32xf32>
    %71 = arith.mulf %69, %70 : vector<2x32xf32>
    %72 = arith.addf %68, %71 : vector<2x32xf32>
    %73 = vector.extract_strided_slice %59 {offsets = [0, 96], sizes = [2, 32], strides = [1, 1]} : vector<2x128xf32> to vector<2x32xf32>
    %74 = math.tanh %72 : vector<2x32xf32>
    %75 = arith.mulf %73, %74 : vector<2x32xf32>
    %76 = vector.extract_strided_slice %65 {offsets = [0, 32], sizes = [2, 32], strides = [1, 1]} : vector<2x128xf32> to vector<2x32xf32>
    %77 = arith.mulf %76, %43 : vector<2x32xf32>
    %78 = vector.extract_strided_slice %65 {offsets = [0, 0], sizes = [2, 32], strides = [1, 1]} : vector<2x128xf32> to vector<2x32xf32>
    %79 = vector.extract_strided_slice %66 {offsets = [0, 64], sizes = [2, 32], strides = [1, 1]} : vector<2x128xf32> to vector<2x32xf32>
    %80 = arith.mulf %78, %79 : vector<2x32xf32>
    %81 = arith.addf %77, %80 : vector<2x32xf32>
    %82 = vector.extract_strided_slice %65 {offsets = [0, 96], sizes = [2, 32], strides = [1, 1]} : vector<2x128xf32> to vector<2x32xf32>
    %83 = math.tanh %81 : vector<2x32xf32>
    %84 = arith.mulf %82, %83 : vector<2x32xf32>
    %85 = vector.extract_strided_slice %7 {offsets = [4, 0], sizes = [2, 128], strides = [1, 1]} : vector<16x256xf32> to vector<2x128xf32>
    %86 = arith.truncf %75 : vector<2x32xf32> to vector<2x32xbf16>
    %cst_18 = arith.constant dense<0.000000e+00> : vector<2x128xf32>
    %87 = tpu.matmul %86, %2, %cst_18 {dimension_numbers = #tpu.dot_dimension_numbers<[1], [0], [0], [1], [0, 0, 1, 1], [], []>} : vector<2x32xbf16>, vector<32x128xbf16>, vector<2x128xf32> -> vector<2x128xf32>
    %88 = arith.addf %85, %87 : vector<2x128xf32>
    %89 = vector.extract_strided_slice %7 {offsets = [10, 128], sizes = [2, 128], strides = [1, 1]} : vector<16x256xf32> to vector<2x128xf32>
    %90 = arith.truncf %84 : vector<2x32xf32> to vector<2x32xbf16>
    %cst_19 = arith.constant dense<0.000000e+00> : vector<2x128xf32>
    %91 = tpu.matmul %90, %3, %cst_19 {dimension_numbers = #tpu.dot_dimension_numbers<[1], [0], [0], [1], [0, 0, 1, 1], [], []>} : vector<2x32xbf16>, vector<32x128xbf16>, vector<2x128xf32> -> vector<2x128xf32>
    %92 = arith.addf %89, %91 : vector<2x128xf32>
    %93 = arith.negf %88 : vector<2x128xf32>
    %94 = math.exp %93 : vector<2x128xf32>
    %cst_20 = arith.constant 1.000000e+00 : f32
    %95 = vector.broadcast %cst_20 : f32 to vector<2x128xf32>
    %96 = arith.addf %95, %94 : vector<2x128xf32>
    %97 = arith.divf %95, %96 : vector<2x128xf32>
    %98 = math.tanh %88 : vector<2x128xf32>
    %99 = arith.negf %92 : vector<2x128xf32>
    %100 = math.exp %99 : vector<2x128xf32>
    %cst_21 = arith.constant 1.000000e+00 : f32
    %101 = vector.broadcast %cst_21 : f32 to vector<2x128xf32>
    %102 = arith.addf %101, %100 : vector<2x128xf32>
    %103 = arith.divf %101, %102 : vector<2x128xf32>
    %104 = math.tanh %92 : vector<2x128xf32>
    %105 = vector.extract_strided_slice %97 {offsets = [0, 32], sizes = [2, 32], strides = [1, 1]} : vector<2x128xf32> to vector<2x32xf32>
    %106 = arith.mulf %105, %72 : vector<2x32xf32>
    %107 = vector.extract_strided_slice %97 {offsets = [0, 0], sizes = [2, 32], strides = [1, 1]} : vector<2x128xf32> to vector<2x32xf32>
    %108 = vector.extract_strided_slice %98 {offsets = [0, 64], sizes = [2, 32], strides = [1, 1]} : vector<2x128xf32> to vector<2x32xf32>
    %109 = arith.mulf %107, %108 : vector<2x32xf32>
    %110 = arith.addf %106, %109 : vector<2x32xf32>
    %111 = vector.extract_strided_slice %97 {offsets = [0, 96], sizes = [2, 32], strides = [1, 1]} : vector<2x128xf32> to vector<2x32xf32>
    %112 = math.tanh %110 : vector<2x32xf32>
    %113 = arith.mulf %111, %112 : vector<2x32xf32>
    %114 = vector.extract_strided_slice %103 {offsets = [0, 32], sizes = [2, 32], strides = [1, 1]} : vector<2x128xf32> to vector<2x32xf32>
    %115 = arith.mulf %114, %81 : vector<2x32xf32>
    %116 = vector.extract_strided_slice %103 {offsets = [0, 0], sizes = [2, 32], strides = [1, 1]} : vector<2x128xf32> to vector<2x32xf32>
    %117 = vector.extract_strided_slice %104 {offsets = [0, 64], sizes = [2, 32], strides = [1, 1]} : vector<2x128xf32> to vector<2x32xf32>
    %118 = arith.mulf %116, %117 : vector<2x32xf32>
    %119 = arith.addf %115, %118 : vector<2x32xf32>
    %120 = vector.extract_strided_slice %103 {offsets = [0, 96], sizes = [2, 32], strides = [1, 1]} : vector<2x128xf32> to vector<2x32xf32>
    %121 = math.tanh %119 : vector<2x32xf32>
    %122 = arith.mulf %120, %121 : vector<2x32xf32>
    %123 = vector.extract_strided_slice %7 {offsets = [6, 0], sizes = [2, 128], strides = [1, 1]} : vector<16x256xf32> to vector<2x128xf32>
    %124 = arith.truncf %113 : vector<2x32xf32> to vector<2x32xbf16>
    %cst_22 = arith.constant dense<0.000000e+00> : vector<2x128xf32>
    %125 = tpu.matmul %124, %2, %cst_22 {dimension_numbers = #tpu.dot_dimension_numbers<[1], [0], [0], [1], [0, 0, 1, 1], [], []>} : vector<2x32xbf16>, vector<32x128xbf16>, vector<2x128xf32> -> vector<2x128xf32>
    %126 = arith.addf %123, %125 : vector<2x128xf32>
    %127 = vector.extract_strided_slice %7 {offsets = [8, 128], sizes = [2, 128], strides = [1, 1]} : vector<16x256xf32> to vector<2x128xf32>
    %128 = arith.truncf %122 : vector<2x32xf32> to vector<2x32xbf16>
    %cst_23 = arith.constant dense<0.000000e+00> : vector<2x128xf32>
    %129 = tpu.matmul %128, %3, %cst_23 {dimension_numbers = #tpu.dot_dimension_numbers<[1], [0], [0], [1], [0, 0, 1, 1], [], []>} : vector<2x32xbf16>, vector<32x128xbf16>, vector<2x128xf32> -> vector<2x128xf32>
    %130 = arith.addf %127, %129 : vector<2x128xf32>
    %131 = arith.negf %126 : vector<2x128xf32>
    %132 = math.exp %131 : vector<2x128xf32>
    %cst_24 = arith.constant 1.000000e+00 : f32
    %133 = vector.broadcast %cst_24 : f32 to vector<2x128xf32>
    %134 = arith.addf %133, %132 : vector<2x128xf32>
    %135 = arith.divf %133, %134 : vector<2x128xf32>
    %136 = math.tanh %126 : vector<2x128xf32>
    %137 = arith.negf %130 : vector<2x128xf32>
    %138 = math.exp %137 : vector<2x128xf32>
    %cst_25 = arith.constant 1.000000e+00 : f32
    %139 = vector.broadcast %cst_25 : f32 to vector<2x128xf32>
    %140 = arith.addf %139, %138 : vector<2x128xf32>
    %141 = arith.divf %139, %140 : vector<2x128xf32>
    %142 = math.tanh %130 : vector<2x128xf32>
    %143 = vector.extract_strided_slice %135 {offsets = [0, 32], sizes = [2, 32], strides = [1, 1]} : vector<2x128xf32> to vector<2x32xf32>
    %144 = arith.mulf %143, %110 : vector<2x32xf32>
    %145 = vector.extract_strided_slice %135 {offsets = [0, 0], sizes = [2, 32], strides = [1, 1]} : vector<2x128xf32> to vector<2x32xf32>
    %146 = vector.extract_strided_slice %136 {offsets = [0, 64], sizes = [2, 32], strides = [1, 1]} : vector<2x128xf32> to vector<2x32xf32>
    %147 = arith.mulf %145, %146 : vector<2x32xf32>
    %148 = arith.addf %144, %147 : vector<2x32xf32>
    %149 = vector.extract_strided_slice %135 {offsets = [0, 96], sizes = [2, 32], strides = [1, 1]} : vector<2x128xf32> to vector<2x32xf32>
    %150 = math.tanh %148 : vector<2x32xf32>
    %151 = arith.mulf %149, %150 : vector<2x32xf32>
    %152 = vector.extract_strided_slice %141 {offsets = [0, 32], sizes = [2, 32], strides = [1, 1]} : vector<2x128xf32> to vector<2x32xf32>
    %153 = arith.mulf %152, %119 : vector<2x32xf32>
    %154 = vector.extract_strided_slice %141 {offsets = [0, 0], sizes = [2, 32], strides = [1, 1]} : vector<2x128xf32> to vector<2x32xf32>
    %155 = vector.extract_strided_slice %142 {offsets = [0, 64], sizes = [2, 32], strides = [1, 1]} : vector<2x128xf32> to vector<2x32xf32>
    %156 = arith.mulf %154, %155 : vector<2x32xf32>
    %157 = arith.addf %153, %156 : vector<2x32xf32>
    %158 = vector.extract_strided_slice %141 {offsets = [0, 96], sizes = [2, 32], strides = [1, 1]} : vector<2x128xf32> to vector<2x32xf32>
    %159 = math.tanh %157 : vector<2x32xf32>
    %160 = arith.mulf %158, %159 : vector<2x32xf32>
    %161 = vector.extract_strided_slice %7 {offsets = [8, 0], sizes = [2, 128], strides = [1, 1]} : vector<16x256xf32> to vector<2x128xf32>
    %162 = arith.truncf %151 : vector<2x32xf32> to vector<2x32xbf16>
    %cst_26 = arith.constant dense<0.000000e+00> : vector<2x128xf32>
    %163 = tpu.matmul %162, %2, %cst_26 {dimension_numbers = #tpu.dot_dimension_numbers<[1], [0], [0], [1], [0, 0, 1, 1], [], []>} : vector<2x32xbf16>, vector<32x128xbf16>, vector<2x128xf32> -> vector<2x128xf32>
    %164 = arith.addf %161, %163 : vector<2x128xf32>
    %165 = vector.extract_strided_slice %7 {offsets = [6, 128], sizes = [2, 128], strides = [1, 1]} : vector<16x256xf32> to vector<2x128xf32>
    %166 = arith.truncf %160 : vector<2x32xf32> to vector<2x32xbf16>
    %cst_27 = arith.constant dense<0.000000e+00> : vector<2x128xf32>
    %167 = tpu.matmul %166, %3, %cst_27 {dimension_numbers = #tpu.dot_dimension_numbers<[1], [0], [0], [1], [0, 0, 1, 1], [], []>} : vector<2x32xbf16>, vector<32x128xbf16>, vector<2x128xf32> -> vector<2x128xf32>
    %168 = arith.addf %165, %167 : vector<2x128xf32>
    %169 = arith.negf %164 : vector<2x128xf32>
    %170 = math.exp %169 : vector<2x128xf32>
    %cst_28 = arith.constant 1.000000e+00 : f32
    %171 = vector.broadcast %cst_28 : f32 to vector<2x128xf32>
    %172 = arith.addf %171, %170 : vector<2x128xf32>
    %173 = arith.divf %171, %172 : vector<2x128xf32>
    %174 = math.tanh %164 : vector<2x128xf32>
    %175 = arith.negf %168 : vector<2x128xf32>
    %176 = math.exp %175 : vector<2x128xf32>
    %cst_29 = arith.constant 1.000000e+00 : f32
    %177 = vector.broadcast %cst_29 : f32 to vector<2x128xf32>
    %178 = arith.addf %177, %176 : vector<2x128xf32>
    %179 = arith.divf %177, %178 : vector<2x128xf32>
    %180 = math.tanh %168 : vector<2x128xf32>
    %181 = vector.extract_strided_slice %173 {offsets = [0, 32], sizes = [2, 32], strides = [1, 1]} : vector<2x128xf32> to vector<2x32xf32>
    %182 = arith.mulf %181, %148 : vector<2x32xf32>
    %183 = vector.extract_strided_slice %173 {offsets = [0, 0], sizes = [2, 32], strides = [1, 1]} : vector<2x128xf32> to vector<2x32xf32>
    %184 = vector.extract_strided_slice %174 {offsets = [0, 64], sizes = [2, 32], strides = [1, 1]} : vector<2x128xf32> to vector<2x32xf32>
    %185 = arith.mulf %183, %184 : vector<2x32xf32>
    %186 = arith.addf %182, %185 : vector<2x32xf32>
    %187 = vector.extract_strided_slice %173 {offsets = [0, 96], sizes = [2, 32], strides = [1, 1]} : vector<2x128xf32> to vector<2x32xf32>
    %188 = math.tanh %186 : vector<2x32xf32>
    %189 = arith.mulf %187, %188 : vector<2x32xf32>
    %190 = vector.extract_strided_slice %179 {offsets = [0, 32], sizes = [2, 32], strides = [1, 1]} : vector<2x128xf32> to vector<2x32xf32>
    %191 = arith.mulf %190, %157 : vector<2x32xf32>
    %192 = vector.extract_strided_slice %179 {offsets = [0, 0], sizes = [2, 32], strides = [1, 1]} : vector<2x128xf32> to vector<2x32xf32>
    %193 = vector.extract_strided_slice %180 {offsets = [0, 64], sizes = [2, 32], strides = [1, 1]} : vector<2x128xf32> to vector<2x32xf32>
    %194 = arith.mulf %192, %193 : vector<2x32xf32>
    %195 = arith.addf %191, %194 : vector<2x32xf32>
    %196 = vector.extract_strided_slice %179 {offsets = [0, 96], sizes = [2, 32], strides = [1, 1]} : vector<2x128xf32> to vector<2x32xf32>
    %197 = math.tanh %195 : vector<2x32xf32>
    %198 = arith.mulf %196, %197 : vector<2x32xf32>
    %199 = vector.extract_strided_slice %7 {offsets = [10, 0], sizes = [2, 128], strides = [1, 1]} : vector<16x256xf32> to vector<2x128xf32>
    %200 = arith.truncf %189 : vector<2x32xf32> to vector<2x32xbf16>
    %cst_30 = arith.constant dense<0.000000e+00> : vector<2x128xf32>
    %201 = tpu.matmul %200, %2, %cst_30 {dimension_numbers = #tpu.dot_dimension_numbers<[1], [0], [0], [1], [0, 0, 1, 1], [], []>} : vector<2x32xbf16>, vector<32x128xbf16>, vector<2x128xf32> -> vector<2x128xf32>
    %202 = arith.addf %199, %201 : vector<2x128xf32>
    %203 = vector.extract_strided_slice %7 {offsets = [4, 128], sizes = [2, 128], strides = [1, 1]} : vector<16x256xf32> to vector<2x128xf32>
    %204 = arith.truncf %198 : vector<2x32xf32> to vector<2x32xbf16>
    %cst_31 = arith.constant dense<0.000000e+00> : vector<2x128xf32>
    %205 = tpu.matmul %204, %3, %cst_31 {dimension_numbers = #tpu.dot_dimension_numbers<[1], [0], [0], [1], [0, 0, 1, 1], [], []>} : vector<2x32xbf16>, vector<32x128xbf16>, vector<2x128xf32> -> vector<2x128xf32>
    %206 = arith.addf %203, %205 : vector<2x128xf32>
    %207 = arith.negf %202 : vector<2x128xf32>
    %208 = math.exp %207 : vector<2x128xf32>
    %cst_32 = arith.constant 1.000000e+00 : f32
    %209 = vector.broadcast %cst_32 : f32 to vector<2x128xf32>
    %210 = arith.addf %209, %208 : vector<2x128xf32>
    %211 = arith.divf %209, %210 : vector<2x128xf32>
    %212 = math.tanh %202 : vector<2x128xf32>
    %213 = arith.negf %206 : vector<2x128xf32>
    %214 = math.exp %213 : vector<2x128xf32>
    %cst_33 = arith.constant 1.000000e+00 : f32
    %215 = vector.broadcast %cst_33 : f32 to vector<2x128xf32>
    %216 = arith.addf %215, %214 : vector<2x128xf32>
    %217 = arith.divf %215, %216 : vector<2x128xf32>
    %218 = math.tanh %206 : vector<2x128xf32>
    %219 = vector.extract_strided_slice %211 {offsets = [0, 32], sizes = [2, 32], strides = [1, 1]} : vector<2x128xf32> to vector<2x32xf32>
    %220 = arith.mulf %219, %186 : vector<2x32xf32>
    %221 = vector.extract_strided_slice %211 {offsets = [0, 0], sizes = [2, 32], strides = [1, 1]} : vector<2x128xf32> to vector<2x32xf32>
    %222 = vector.extract_strided_slice %212 {offsets = [0, 64], sizes = [2, 32], strides = [1, 1]} : vector<2x128xf32> to vector<2x32xf32>
    %223 = arith.mulf %221, %222 : vector<2x32xf32>
    %224 = arith.addf %220, %223 : vector<2x32xf32>
    %225 = vector.extract_strided_slice %211 {offsets = [0, 96], sizes = [2, 32], strides = [1, 1]} : vector<2x128xf32> to vector<2x32xf32>
    %226 = math.tanh %224 : vector<2x32xf32>
    %227 = arith.mulf %225, %226 : vector<2x32xf32>
    %228 = vector.extract_strided_slice %217 {offsets = [0, 32], sizes = [2, 32], strides = [1, 1]} : vector<2x128xf32> to vector<2x32xf32>
    %229 = arith.mulf %228, %195 : vector<2x32xf32>
    %230 = vector.extract_strided_slice %217 {offsets = [0, 0], sizes = [2, 32], strides = [1, 1]} : vector<2x128xf32> to vector<2x32xf32>
    %231 = vector.extract_strided_slice %218 {offsets = [0, 64], sizes = [2, 32], strides = [1, 1]} : vector<2x128xf32> to vector<2x32xf32>
    %232 = arith.mulf %230, %231 : vector<2x32xf32>
    %233 = arith.addf %229, %232 : vector<2x32xf32>
    %234 = vector.extract_strided_slice %217 {offsets = [0, 96], sizes = [2, 32], strides = [1, 1]} : vector<2x128xf32> to vector<2x32xf32>
    %235 = math.tanh %233 : vector<2x32xf32>
    %236 = arith.mulf %234, %235 : vector<2x32xf32>
    %237 = vector.extract_strided_slice %7 {offsets = [12, 0], sizes = [2, 128], strides = [1, 1]} : vector<16x256xf32> to vector<2x128xf32>
    %238 = arith.truncf %227 : vector<2x32xf32> to vector<2x32xbf16>
    %cst_34 = arith.constant dense<0.000000e+00> : vector<2x128xf32>
    %239 = tpu.matmul %238, %2, %cst_34 {dimension_numbers = #tpu.dot_dimension_numbers<[1], [0], [0], [1], [0, 0, 1, 1], [], []>} : vector<2x32xbf16>, vector<32x128xbf16>, vector<2x128xf32> -> vector<2x128xf32>
    %240 = arith.addf %237, %239 : vector<2x128xf32>
    %241 = vector.extract_strided_slice %7 {offsets = [2, 128], sizes = [2, 128], strides = [1, 1]} : vector<16x256xf32> to vector<2x128xf32>
    %242 = arith.truncf %236 : vector<2x32xf32> to vector<2x32xbf16>
    %cst_35 = arith.constant dense<0.000000e+00> : vector<2x128xf32>
    %243 = tpu.matmul %242, %3, %cst_35 {dimension_numbers = #tpu.dot_dimension_numbers<[1], [0], [0], [1], [0, 0, 1, 1], [], []>} : vector<2x32xbf16>, vector<32x128xbf16>, vector<2x128xf32> -> vector<2x128xf32>
    %244 = arith.addf %241, %243 : vector<2x128xf32>
    %245 = arith.negf %240 : vector<2x128xf32>
    %246 = math.exp %245 : vector<2x128xf32>
    %cst_36 = arith.constant 1.000000e+00 : f32
    %247 = vector.broadcast %cst_36 : f32 to vector<2x128xf32>
    %248 = arith.addf %247, %246 : vector<2x128xf32>
    %249 = arith.divf %247, %248 : vector<2x128xf32>
    %250 = math.tanh %240 : vector<2x128xf32>
    %251 = arith.negf %244 : vector<2x128xf32>
    %252 = math.exp %251 : vector<2x128xf32>
    %cst_37 = arith.constant 1.000000e+00 : f32
    %253 = vector.broadcast %cst_37 : f32 to vector<2x128xf32>
    %254 = arith.addf %253, %252 : vector<2x128xf32>
    %255 = arith.divf %253, %254 : vector<2x128xf32>
    %256 = math.tanh %244 : vector<2x128xf32>
    %257 = vector.extract_strided_slice %249 {offsets = [0, 32], sizes = [2, 32], strides = [1, 1]} : vector<2x128xf32> to vector<2x32xf32>
    %258 = arith.mulf %257, %224 : vector<2x32xf32>
    %259 = vector.extract_strided_slice %249 {offsets = [0, 0], sizes = [2, 32], strides = [1, 1]} : vector<2x128xf32> to vector<2x32xf32>
    %260 = vector.extract_strided_slice %250 {offsets = [0, 64], sizes = [2, 32], strides = [1, 1]} : vector<2x128xf32> to vector<2x32xf32>
    %261 = arith.mulf %259, %260 : vector<2x32xf32>
    %262 = arith.addf %258, %261 : vector<2x32xf32>
    %263 = vector.extract_strided_slice %249 {offsets = [0, 96], sizes = [2, 32], strides = [1, 1]} : vector<2x128xf32> to vector<2x32xf32>
    %264 = math.tanh %262 : vector<2x32xf32>
    %265 = arith.mulf %263, %264 : vector<2x32xf32>
    %266 = vector.extract_strided_slice %255 {offsets = [0, 32], sizes = [2, 32], strides = [1, 1]} : vector<2x128xf32> to vector<2x32xf32>
    %267 = arith.mulf %266, %233 : vector<2x32xf32>
    %268 = vector.extract_strided_slice %255 {offsets = [0, 0], sizes = [2, 32], strides = [1, 1]} : vector<2x128xf32> to vector<2x32xf32>
    %269 = vector.extract_strided_slice %256 {offsets = [0, 64], sizes = [2, 32], strides = [1, 1]} : vector<2x128xf32> to vector<2x32xf32>
    %270 = arith.mulf %268, %269 : vector<2x32xf32>
    %271 = arith.addf %267, %270 : vector<2x32xf32>
    %272 = vector.extract_strided_slice %255 {offsets = [0, 96], sizes = [2, 32], strides = [1, 1]} : vector<2x128xf32> to vector<2x32xf32>
    %273 = math.tanh %271 : vector<2x32xf32>
    %274 = arith.mulf %272, %273 : vector<2x32xf32>
    %275 = vector.extract_strided_slice %7 {offsets = [14, 0], sizes = [2, 128], strides = [1, 1]} : vector<16x256xf32> to vector<2x128xf32>
    %276 = arith.truncf %265 : vector<2x32xf32> to vector<2x32xbf16>
    %cst_38 = arith.constant dense<0.000000e+00> : vector<2x128xf32>
    %277 = tpu.matmul %276, %2, %cst_38 {dimension_numbers = #tpu.dot_dimension_numbers<[1], [0], [0], [1], [0, 0, 1, 1], [], []>} : vector<2x32xbf16>, vector<32x128xbf16>, vector<2x128xf32> -> vector<2x128xf32>
    %278 = arith.addf %275, %277 : vector<2x128xf32>
    %279 = vector.extract_strided_slice %7 {offsets = [0, 128], sizes = [2, 128], strides = [1, 1]} : vector<16x256xf32> to vector<2x128xf32>
    %280 = arith.truncf %274 : vector<2x32xf32> to vector<2x32xbf16>
    %cst_39 = arith.constant dense<0.000000e+00> : vector<2x128xf32>
    %281 = tpu.matmul %280, %3, %cst_39 {dimension_numbers = #tpu.dot_dimension_numbers<[1], [0], [0], [1], [0, 0, 1, 1], [], []>} : vector<2x32xbf16>, vector<32x128xbf16>, vector<2x128xf32> -> vector<2x128xf32>
    %282 = arith.addf %279, %281 : vector<2x128xf32>
    %283 = arith.negf %278 : vector<2x128xf32>
    %284 = math.exp %283 : vector<2x128xf32>
    %cst_40 = arith.constant 1.000000e+00 : f32
    %285 = vector.broadcast %cst_40 : f32 to vector<2x128xf32>
    %286 = arith.addf %285, %284 : vector<2x128xf32>
    %287 = arith.divf %285, %286 : vector<2x128xf32>
    %288 = math.tanh %278 : vector<2x128xf32>
    %289 = arith.negf %282 : vector<2x128xf32>
    %290 = math.exp %289 : vector<2x128xf32>
    %cst_41 = arith.constant 1.000000e+00 : f32
    %291 = vector.broadcast %cst_41 : f32 to vector<2x128xf32>
    %292 = arith.addf %291, %290 : vector<2x128xf32>
    %293 = arith.divf %291, %292 : vector<2x128xf32>
    %294 = math.tanh %282 : vector<2x128xf32>
    %295 = vector.extract_strided_slice %287 {offsets = [0, 32], sizes = [2, 32], strides = [1, 1]} : vector<2x128xf32> to vector<2x32xf32>
    %296 = arith.mulf %295, %262 : vector<2x32xf32>
    %297 = vector.extract_strided_slice %287 {offsets = [0, 0], sizes = [2, 32], strides = [1, 1]} : vector<2x128xf32> to vector<2x32xf32>
    %298 = vector.extract_strided_slice %288 {offsets = [0, 64], sizes = [2, 32], strides = [1, 1]} : vector<2x128xf32> to vector<2x32xf32>
    %299 = arith.mulf %297, %298 : vector<2x32xf32>
    %300 = arith.addf %296, %299 : vector<2x32xf32>
    %301 = vector.extract_strided_slice %287 {offsets = [0, 96], sizes = [2, 32], strides = [1, 1]} : vector<2x128xf32> to vector<2x32xf32>
    %302 = math.tanh %300 : vector<2x32xf32>
    %303 = arith.mulf %301, %302 : vector<2x32xf32>
    %304 = vector.extract_strided_slice %293 {offsets = [0, 32], sizes = [2, 32], strides = [1, 1]} : vector<2x128xf32> to vector<2x32xf32>
    %305 = arith.mulf %304, %271 : vector<2x32xf32>
    %306 = vector.extract_strided_slice %293 {offsets = [0, 0], sizes = [2, 32], strides = [1, 1]} : vector<2x128xf32> to vector<2x32xf32>
    %307 = vector.extract_strided_slice %294 {offsets = [0, 64], sizes = [2, 32], strides = [1, 1]} : vector<2x128xf32> to vector<2x32xf32>
    %308 = arith.mulf %306, %307 : vector<2x32xf32>
    %309 = arith.addf %305, %308 : vector<2x32xf32>
    %310 = vector.extract_strided_slice %293 {offsets = [0, 96], sizes = [2, 32], strides = [1, 1]} : vector<2x128xf32> to vector<2x32xf32>
    %311 = math.tanh %309 : vector<2x32xf32>
    %312 = arith.mulf %310, %311 : vector<2x32xf32>
    %c0_42 = arith.constant 0 : index
    %c0_43 = arith.constant 0 : index
    %313 = vector.load %arg20[%c0_42, %c0_43] : memref<32x32xf32, #tpu.memory_space<vmem>>, vector<2x32xf32>
    tpu.vector_store %arg20[%c0_42, %c0_43], %37 {strides = array<i32>} : memref<32x32xf32, #tpu.memory_space<vmem>>, vector<2x32xf32>,
    %c16 = arith.constant 16 : index
    %c0_44 = arith.constant 0 : index
    %314 = vector.load %arg20[%c16, %c0_44] : memref<32x32xf32, #tpu.memory_space<vmem>>, vector<2x32xf32>
    tpu.vector_store %arg20[%c16, %c0_44], %312 {strides = array<i32>} : memref<32x32xf32, #tpu.memory_space<vmem>>, vector<2x32xf32>,
    %c2 = arith.constant 2 : index
    %c0_45 = arith.constant 0 : index
    %315 = vector.load %arg20[%c2, %c0_45] : memref<32x32xf32, #tpu.memory_space<vmem>>, vector<2x32xf32>
    tpu.vector_store %arg20[%c2, %c0_45], %75 {strides = array<i32>} : memref<32x32xf32, #tpu.memory_space<vmem>>, vector<2x32xf32>,
    %c18 = arith.constant 18 : index
    %c0_46 = arith.constant 0 : index
    %316 = vector.load %arg20[%c18, %c0_46] : memref<32x32xf32, #tpu.memory_space<vmem>>, vector<2x32xf32>
    tpu.vector_store %arg20[%c18, %c0_46], %274 {strides = array<i32>} : memref<32x32xf32, #tpu.memory_space<vmem>>, vector<2x32xf32>,
    %c4 = arith.constant 4 : index
    %c0_47 = arith.constant 0 : index
    %317 = vector.load %arg20[%c4, %c0_47] : memref<32x32xf32, #tpu.memory_space<vmem>>, vector<2x32xf32>
    tpu.vector_store %arg20[%c4, %c0_47], %113 {strides = array<i32>} : memref<32x32xf32, #tpu.memory_space<vmem>>, vector<2x32xf32>,
    %c20 = arith.constant 20 : index
    %c0_48 = arith.constant 0 : index
    %318 = vector.load %arg20[%c20, %c0_48] : memref<32x32xf32, #tpu.memory_space<vmem>>, vector<2x32xf32>
    tpu.vector_store %arg20[%c20, %c0_48], %236 {strides = array<i32>} : memref<32x32xf32, #tpu.memory_space<vmem>>, vector<2x32xf32>,
    %c6 = arith.constant 6 : index
    %c0_49 = arith.constant 0 : index
    %319 = vector.load %arg20[%c6, %c0_49] : memref<32x32xf32, #tpu.memory_space<vmem>>, vector<2x32xf32>
    tpu.vector_store %arg20[%c6, %c0_49], %151 {strides = array<i32>} : memref<32x32xf32, #tpu.memory_space<vmem>>, vector<2x32xf32>,
    %c22 = arith.constant 22 : index
    %c0_50 = arith.constant 0 : index
    %320 = vector.load %arg20[%c22, %c0_50] : memref<32x32xf32, #tpu.memory_space<vmem>>, vector<2x32xf32>
    tpu.vector_store %arg20[%c22, %c0_50], %198 {strides = array<i32>} : memref<32x32xf32, #tpu.memory_space<vmem>>, vector<2x32xf32>,
    %c8 = arith.constant 8 : index
    %c0_51 = arith.constant 0 : index
    %321 = vector.load %arg20[%c8, %c0_51] : memref<32x32xf32, #tpu.memory_space<vmem>>, vector<2x32xf32>
    tpu.vector_store %arg20[%c8, %c0_51], %189 {strides = array<i32>} : memref<32x32xf32, #tpu.memory_space<vmem>>, vector<2x32xf32>,
    %c24 = arith.constant 24 : index
    %c0_52 = arith.constant 0 : index
    %322 = vector.load %arg20[%c24, %c0_52] : memref<32x32xf32, #tpu.memory_space<vmem>>, vector<2x32xf32>
    tpu.vector_store %arg20[%c24, %c0_52], %160 {strides = array<i32>} : memref<32x32xf32, #tpu.memory_space<vmem>>, vector<2x32xf32>,
    %c10 = arith.constant 10 : index
    %c0_53 = arith.constant 0 : index
    %323 = vector.load %arg20[%c10, %c0_53] : memref<32x32xf32, #tpu.memory_space<vmem>>, vector<2x32xf32>
    tpu.vector_store %arg20[%c10, %c0_53], %227 {strides = array<i32>} : memref<32x32xf32, #tpu.memory_space<vmem>>, vector<2x32xf32>,
    %c26 = arith.constant 26 : index
    %c0_54 = arith.constant 0 : index
    %324 = vector.load %arg20[%c26, %c0_54] : memref<32x32xf32, #tpu.memory_space<vmem>>, vector<2x32xf32>
    tpu.vector_store %arg20[%c26, %c0_54], %122 {strides = array<i32>} : memref<32x32xf32, #tpu.memory_space<vmem>>, vector<2x32xf32>,
    %c12 = arith.constant 12 : index
    %c0_55 = arith.constant 0 : index
    %325 = vector.load %arg20[%c12, %c0_55] : memref<32x32xf32, #tpu.memory_space<vmem>>, vector<2x32xf32>
    tpu.vector_store %arg20[%c12, %c0_55], %265 {strides = array<i32>} : memref<32x32xf32, #tpu.memory_space<vmem>>, vector<2x32xf32>,
    %c28 = arith.constant 28 : index
    %c0_56 = arith.constant 0 : index
    %326 = vector.load %arg20[%c28, %c0_56] : memref<32x32xf32, #tpu.memory_space<vmem>>, vector<2x32xf32>
    tpu.vector_store %arg20[%c28, %c0_56], %84 {strides = array<i32>} : memref<32x32xf32, #tpu.memory_space<vmem>>, vector<2x32xf32>,
    %c14 = arith.constant 14 : index
    %c0_57 = arith.constant 0 : index
    %327 = vector.load %arg20[%c14, %c0_57] : memref<32x32xf32, #tpu.memory_space<vmem>>, vector<2x32xf32>
    tpu.vector_store %arg20[%c14, %c0_57], %303 {strides = array<i32>} : memref<32x32xf32, #tpu.memory_space<vmem>>, vector<2x32xf32>,
    %c30 = arith.constant 30 : index
    %c0_58 = arith.constant 0 : index
    %328 = vector.load %arg20[%c30, %c0_58] : memref<32x32xf32, #tpu.memory_space<vmem>>, vector<2x32xf32>
    tpu.vector_store %arg20[%c30, %c0_58], %46 {strides = array<i32>} : memref<32x32xf32, #tpu.memory_space<vmem>>, vector<2x32xf32>,
    %c0_59 = arith.constant 0 : index
    %c0_60 = arith.constant 0 : index
    %329 = vector.load %arg20[%c0_59, %c0_60] : memref<32x32xf32, #tpu.memory_space<vmem>>, vector<16x32xf32>
    %c16_61 = arith.constant 16 : index
    %c0_62 = arith.constant 0 : index
    %330 = vector.load %arg20[%c16_61, %c0_62] : memref<32x32xf32, #tpu.memory_space<vmem>>, vector<16x32xf32>
    %331 = tpu.concatenate %329, %330 in 1 : vector<16x32xf32>, vector<16x32xf32> -> vector<16x64xf32>
    %332 = arith.truncf %331 : vector<16x64xf32> to vector<16x64xbf16>
    %c0_63 = arith.constant 0 : index
    %c0_64 = arith.constant 0 : index
    %333 = vector.load %arg7[%c0_63, %c0_64] : memref<64x64xbf16, #tpu.memory_space<vmem>>, vector<64x64xbf16>
    %cst_65 = arith.constant dense<0.000000e+00> : vector<16x64xf32>
    %334 = tpu.matmul %332, %333, %cst_65 {dimension_numbers = #tpu.dot_dimension_numbers<[1], [0], [0], [1], [0, 0, 1, 1], [], []>} : vector<16x64xbf16>, vector<64x64xbf16>, vector<16x64xf32> -> vector<16x64xf32>
    %c0_66 = arith.constant 0 : index
    %c0_67 = arith.constant 0 : index
    %335 = vector.load %arg8[%c0_66, %c0_67] : memref<1x64xf32, #tpu.memory_space<vmem>>, vector<1x64xf32>
    %336 = vector.broadcast %335 : vector<1x64xf32> to vector<16x64xf32>
    %337 = arith.addf %334, %336 : vector<16x64xf32>
    %cst_68 = arith.constant 0.000000e+00 : f32
    %338 = vector.broadcast %cst_68 : f32 to vector<16x64xf32>
    %339 = arith.maximumf %337, %338 : vector<16x64xf32>
    %340 = arith.truncf %339 : vector<16x64xf32> to vector<16x64xbf16>
    %c0_69 = arith.constant 0 : index
    %c0_70 = arith.constant 0 : index
    %341 = vector.load %arg9[%c0_69, %c0_70] : memref<64x32xbf16, #tpu.memory_space<vmem>>, vector<64x32xbf16>
    %cst_71 = arith.constant dense<0.000000e+00> : vector<16x32xf32>
    %342 = tpu.matmul %340, %341, %cst_71 {dimension_numbers = #tpu.dot_dimension_numbers<[1], [0], [0], [1], [0, 0, 1, 1], [], []>} : vector<16x64xbf16>, vector<64x32xbf16>, vector<16x32xf32> -> vector<16x32xf32>
    %c0_72 = arith.constant 0 : index
    %c0_73 = arith.constant 0 : index
    %343 = vector.load %arg2[%c0_72, %c0_73] : memref<16x16xbf16, #tpu.memory_space<vmem>>, vector<16x16xbf16>
    %344 = arith.truncf %342 : vector<16x32xf32> to vector<16x32xbf16>
    %cst_74 = arith.constant dense<0.000000e+00> : vector<16x32xf32>
    %345 = tpu.matmul %343, %344, %cst_74 {dimension_numbers = #tpu.dot_dimension_numbers<[1], [0], [0], [1], [0, 0, 1, 1], [], []>} : vector<16x16xbf16>, vector<16x32xbf16>, vector<16x32xf32> -> vector<16x32xf32>
    %c0_75 = arith.constant 0 : index
    %c0_76 = arith.constant 0 : index
    %346 = vector.load %arg10[%c0_75, %c0_76] : memref<1x32xf32, #tpu.memory_space<vmem>>, vector<1x32xf32>
    %347 = vector.broadcast %346 : vector<1x32xf32> to vector<16x32xf32>
    %348 = arith.addf %345, %347 : vector<16x32xf32>
    %cst_77 = arith.constant 0.000000e+00 : f32
    %349 = vector.broadcast %cst_77 : f32 to vector<16x32xf32>
    %350 = arith.maximumf %348, %349 : vector<16x32xf32>
    %351 = arith.truncf %350 : vector<16x32xf32> to vector<16x32xbf16>
    %c0_78 = arith.constant 0 : index
    %c0_79 = arith.constant 0 : index
    %352 = vector.load %arg11[%c0_78, %c0_79] : memref<32x512xbf16, #tpu.memory_space<vmem>>, vector<32x512xbf16>
    %c0_80 = arith.constant 0 : index
    %c0_81 = arith.constant 0 : index
    %353 = vector.load %arg12[%c0_80, %c0_81] : memref<64x256xbf16, #tpu.memory_space<vmem>>, vector<64x256xbf16>
    %c0_82 = arith.constant 0 : index
    %c0_83 = arith.constant 0 : index
    %354 = vector.load %arg13[%c0_82, %c0_83] : memref<64x256xbf16, #tpu.memory_space<vmem>>, vector<64x256xbf16>
    %c0_84 = arith.constant 0 : index
    %c0_85 = arith.constant 0 : index
    %355 = vector.load %arg14[%c0_84, %c0_85] : memref<1x512xf32, #tpu.memory_space<vmem>>, vector<1x512xf32>
    %cst_86 = arith.constant dense<0.000000e+00> : vector<16x512xf32>
    %356 = tpu.matmul %351, %352, %cst_86 {dimension_numbers = #tpu.dot_dimension_numbers<[1], [0], [0], [1], [0, 0, 1, 1], [], []>} : vector<16x32xbf16>, vector<32x512xbf16>, vector<16x512xf32> -> vector<16x512xf32>
    %357 = vector.broadcast %355 : vector<1x512xf32> to vector<16x512xf32>
    %358 = arith.addf %356, %357 : vector<16x512xf32>
    %cst_87 = arith.constant 0.000000e+00 : f32
    %359 = vector.broadcast %cst_87 : f32 to vector<2x64xf32>
    %360 = vector.extract_strided_slice %358 {offsets = [0, 0], sizes = [2, 256], strides = [1, 1]} : vector<16x512xf32> to vector<2x256xf32>
    %361 = arith.truncf %359 : vector<2x64xf32> to vector<2x64xbf16>
    %cst_88 = arith.constant dense<0.000000e+00> : vector<2x256xf32>
    %362 = tpu.matmul %361, %353, %cst_88 {dimension_numbers = #tpu.dot_dimension_numbers<[1], [0], [0], [1], [0, 0, 1, 1], [], []>} : vector<2x64xbf16>, vector<64x256xbf16>, vector<2x256xf32> -> vector<2x256xf32>
    %363 = arith.addf %360, %362 : vector<2x256xf32>
    %364 = vector.extract_strided_slice %358 {offsets = [14, 256], sizes = [2, 256], strides = [1, 1]} : vector<16x512xf32> to vector<2x256xf32>
    %365 = arith.truncf %359 : vector<2x64xf32> to vector<2x64xbf16>
    %cst_89 = arith.constant dense<0.000000e+00> : vector<2x256xf32>
    %366 = tpu.matmul %365, %354, %cst_89 {dimension_numbers = #tpu.dot_dimension_numbers<[1], [0], [0], [1], [0, 0, 1, 1], [], []>} : vector<2x64xbf16>, vector<64x256xbf16>, vector<2x256xf32> -> vector<2x256xf32>
    %367 = arith.addf %364, %366 : vector<2x256xf32>
    %368 = arith.negf %363 : vector<2x256xf32>
    %369 = math.exp %368 : vector<2x256xf32>
    %cst_90 = arith.constant 1.000000e+00 : f32
    %370 = vector.broadcast %cst_90 : f32 to vector<2x256xf32>
    %371 = arith.addf %370, %369 : vector<2x256xf32>
    %372 = arith.divf %370, %371 : vector<2x256xf32>
    %373 = math.tanh %363 : vector<2x256xf32>
    %374 = arith.negf %367 : vector<2x256xf32>
    %375 = math.exp %374 : vector<2x256xf32>
    %cst_91 = arith.constant 1.000000e+00 : f32
    %376 = vector.broadcast %cst_91 : f32 to vector<2x256xf32>
    %377 = arith.addf %376, %375 : vector<2x256xf32>
    %378 = arith.divf %376, %377 : vector<2x256xf32>
    %379 = math.tanh %367 : vector<2x256xf32>
    %380 = vector.extract_strided_slice %372 {offsets = [0, 64], sizes = [2, 64], strides = [1, 1]} : vector<2x256xf32> to vector<2x64xf32>
    %381 = arith.mulf %380, %359 : vector<2x64xf32>
    %382 = vector.extract_strided_slice %372 {offsets = [0, 0], sizes = [2, 64], strides = [1, 1]} : vector<2x256xf32> to vector<2x64xf32>
    %383 = vector.extract_strided_slice %373 {offsets = [0, 128], sizes = [2, 64], strides = [1, 1]} : vector<2x256xf32> to vector<2x64xf32>
    %384 = arith.mulf %382, %383 : vector<2x64xf32>
    %385 = arith.addf %381, %384 : vector<2x64xf32>
    %386 = vector.extract_strided_slice %372 {offsets = [0, 192], sizes = [2, 64], strides = [1, 1]} : vector<2x256xf32> to vector<2x64xf32>
    %387 = math.tanh %385 : vector<2x64xf32>
    %388 = arith.mulf %386, %387 : vector<2x64xf32>
    %389 = vector.extract_strided_slice %378 {offsets = [0, 64], sizes = [2, 64], strides = [1, 1]} : vector<2x256xf32> to vector<2x64xf32>
    %390 = arith.mulf %389, %359 : vector<2x64xf32>
    %391 = vector.extract_strided_slice %378 {offsets = [0, 0], sizes = [2, 64], strides = [1, 1]} : vector<2x256xf32> to vector<2x64xf32>
    %392 = vector.extract_strided_slice %379 {offsets = [0, 128], sizes = [2, 64], strides = [1, 1]} : vector<2x256xf32> to vector<2x64xf32>
    %393 = arith.mulf %391, %392 : vector<2x64xf32>
    %394 = arith.addf %390, %393 : vector<2x64xf32>
    %395 = vector.extract_strided_slice %378 {offsets = [0, 192], sizes = [2, 64], strides = [1, 1]} : vector<2x256xf32> to vector<2x64xf32>
    %396 = math.tanh %394 : vector<2x64xf32>
    %397 = arith.mulf %395, %396 : vector<2x64xf32>
    %398 = vector.extract_strided_slice %358 {offsets = [2, 0], sizes = [2, 256], strides = [1, 1]} : vector<16x512xf32> to vector<2x256xf32>
    %399 = arith.truncf %388 : vector<2x64xf32> to vector<2x64xbf16>
    %cst_92 = arith.constant dense<0.000000e+00> : vector<2x256xf32>
    %400 = tpu.matmul %399, %353, %cst_92 {dimension_numbers = #tpu.dot_dimension_numbers<[1], [0], [0], [1], [0, 0, 1, 1], [], []>} : vector<2x64xbf16>, vector<64x256xbf16>, vector<2x256xf32> -> vector<2x256xf32>
    %401 = arith.addf %398, %400 : vector<2x256xf32>
    %402 = vector.extract_strided_slice %358 {offsets = [12, 256], sizes = [2, 256], strides = [1, 1]} : vector<16x512xf32> to vector<2x256xf32>
    %403 = arith.truncf %397 : vector<2x64xf32> to vector<2x64xbf16>
    %cst_93 = arith.constant dense<0.000000e+00> : vector<2x256xf32>
    %404 = tpu.matmul %403, %354, %cst_93 {dimension_numbers = #tpu.dot_dimension_numbers<[1], [0], [0], [1], [0, 0, 1, 1], [], []>} : vector<2x64xbf16>, vector<64x256xbf16>, vector<2x256xf32> -> vector<2x256xf32>
    %405 = arith.addf %402, %404 : vector<2x256xf32>
    %406 = arith.negf %401 : vector<2x256xf32>
    %407 = math.exp %406 : vector<2x256xf32>
    %cst_94 = arith.constant 1.000000e+00 : f32
    %408 = vector.broadcast %cst_94 : f32 to vector<2x256xf32>
    %409 = arith.addf %408, %407 : vector<2x256xf32>
    %410 = arith.divf %408, %409 : vector<2x256xf32>
    %411 = math.tanh %401 : vector<2x256xf32>
    %412 = arith.negf %405 : vector<2x256xf32>
    %413 = math.exp %412 : vector<2x256xf32>
    %cst_95 = arith.constant 1.000000e+00 : f32
    %414 = vector.broadcast %cst_95 : f32 to vector<2x256xf32>
    %415 = arith.addf %414, %413 : vector<2x256xf32>
    %416 = arith.divf %414, %415 : vector<2x256xf32>
    %417 = math.tanh %405 : vector<2x256xf32>
    %418 = vector.extract_strided_slice %410 {offsets = [0, 64], sizes = [2, 64], strides = [1, 1]} : vector<2x256xf32> to vector<2x64xf32>
    %419 = arith.mulf %418, %385 : vector<2x64xf32>
    %420 = vector.extract_strided_slice %410 {offsets = [0, 0], sizes = [2, 64], strides = [1, 1]} : vector<2x256xf32> to vector<2x64xf32>
    %421 = vector.extract_strided_slice %411 {offsets = [0, 128], sizes = [2, 64], strides = [1, 1]} : vector<2x256xf32> to vector<2x64xf32>
    %422 = arith.mulf %420, %421 : vector<2x64xf32>
    %423 = arith.addf %419, %422 : vector<2x64xf32>
    %424 = vector.extract_strided_slice %410 {offsets = [0, 192], sizes = [2, 64], strides = [1, 1]} : vector<2x256xf32> to vector<2x64xf32>
    %425 = math.tanh %423 : vector<2x64xf32>
    %426 = arith.mulf %424, %425 : vector<2x64xf32>
    %427 = vector.extract_strided_slice %416 {offsets = [0, 64], sizes = [2, 64], strides = [1, 1]} : vector<2x256xf32> to vector<2x64xf32>
    %428 = arith.mulf %427, %394 : vector<2x64xf32>
    %429 = vector.extract_strided_slice %416 {offsets = [0, 0], sizes = [2, 64], strides = [1, 1]} : vector<2x256xf32> to vector<2x64xf32>
    %430 = vector.extract_strided_slice %417 {offsets = [0, 128], sizes = [2, 64], strides = [1, 1]} : vector<2x256xf32> to vector<2x64xf32>
    %431 = arith.mulf %429, %430 : vector<2x64xf32>
    %432 = arith.addf %428, %431 : vector<2x64xf32>
    %433 = vector.extract_strided_slice %416 {offsets = [0, 192], sizes = [2, 64], strides = [1, 1]} : vector<2x256xf32> to vector<2x64xf32>
    %434 = math.tanh %432 : vector<2x64xf32>
    %435 = arith.mulf %433, %434 : vector<2x64xf32>
    %436 = vector.extract_strided_slice %358 {offsets = [4, 0], sizes = [2, 256], strides = [1, 1]} : vector<16x512xf32> to vector<2x256xf32>
    %437 = arith.truncf %426 : vector<2x64xf32> to vector<2x64xbf16>
    %cst_96 = arith.constant dense<0.000000e+00> : vector<2x256xf32>
    %438 = tpu.matmul %437, %353, %cst_96 {dimension_numbers = #tpu.dot_dimension_numbers<[1], [0], [0], [1], [0, 0, 1, 1], [], []>} : vector<2x64xbf16>, vector<64x256xbf16>, vector<2x256xf32> -> vector<2x256xf32>
    %439 = arith.addf %436, %438 : vector<2x256xf32>
    %440 = vector.extract_strided_slice %358 {offsets = [10, 256], sizes = [2, 256], strides = [1, 1]} : vector<16x512xf32> to vector<2x256xf32>
    %441 = arith.truncf %435 : vector<2x64xf32> to vector<2x64xbf16>
    %cst_97 = arith.constant dense<0.000000e+00> : vector<2x256xf32>
    %442 = tpu.matmul %441, %354, %cst_97 {dimension_numbers = #tpu.dot_dimension_numbers<[1], [0], [0], [1], [0, 0, 1, 1], [], []>} : vector<2x64xbf16>, vector<64x256xbf16>, vector<2x256xf32> -> vector<2x256xf32>
    %443 = arith.addf %440, %442 : vector<2x256xf32>
    %444 = arith.negf %439 : vector<2x256xf32>
    %445 = math.exp %444 : vector<2x256xf32>
    %cst_98 = arith.constant 1.000000e+00 : f32
    %446 = vector.broadcast %cst_98 : f32 to vector<2x256xf32>
    %447 = arith.addf %446, %445 : vector<2x256xf32>
    %448 = arith.divf %446, %447 : vector<2x256xf32>
    %449 = math.tanh %439 : vector<2x256xf32>
    %450 = arith.negf %443 : vector<2x256xf32>
    %451 = math.exp %450 : vector<2x256xf32>
    %cst_99 = arith.constant 1.000000e+00 : f32
    %452 = vector.broadcast %cst_99 : f32 to vector<2x256xf32>
    %453 = arith.addf %452, %451 : vector<2x256xf32>
    %454 = arith.divf %452, %453 : vector<2x256xf32>
    %455 = math.tanh %443 : vector<2x256xf32>
    %456 = vector.extract_strided_slice %448 {offsets = [0, 64], sizes = [2, 64], strides = [1, 1]} : vector<2x256xf32> to vector<2x64xf32>
    %457 = arith.mulf %456, %423 : vector<2x64xf32>
    %458 = vector.extract_strided_slice %448 {offsets = [0, 0], sizes = [2, 64], strides = [1, 1]} : vector<2x256xf32> to vector<2x64xf32>
    %459 = vector.extract_strided_slice %449 {offsets = [0, 128], sizes = [2, 64], strides = [1, 1]} : vector<2x256xf32> to vector<2x64xf32>
    %460 = arith.mulf %458, %459 : vector<2x64xf32>
    %461 = arith.addf %457, %460 : vector<2x64xf32>
    %462 = vector.extract_strided_slice %448 {offsets = [0, 192], sizes = [2, 64], strides = [1, 1]} : vector<2x256xf32> to vector<2x64xf32>
    %463 = math.tanh %461 : vector<2x64xf32>
    %464 = arith.mulf %462, %463 : vector<2x64xf32>
    %465 = vector.extract_strided_slice %454 {offsets = [0, 64], sizes = [2, 64], strides = [1, 1]} : vector<2x256xf32> to vector<2x64xf32>
    %466 = arith.mulf %465, %432 : vector<2x64xf32>
    %467 = vector.extract_strided_slice %454 {offsets = [0, 0], sizes = [2, 64], strides = [1, 1]} : vector<2x256xf32> to vector<2x64xf32>
    %468 = vector.extract_strided_slice %455 {offsets = [0, 128], sizes = [2, 64], strides = [1, 1]} : vector<2x256xf32> to vector<2x64xf32>
    %469 = arith.mulf %467, %468 : vector<2x64xf32>
    %470 = arith.addf %466, %469 : vector<2x64xf32>
    %471 = vector.extract_strided_slice %454 {offsets = [0, 192], sizes = [2, 64], strides = [1, 1]} : vector<2x256xf32> to vector<2x64xf32>
    %472 = math.tanh %470 : vector<2x64xf32>
    %473 = arith.mulf %471, %472 : vector<2x64xf32>
    %474 = vector.extract_strided_slice %358 {offsets = [6, 0], sizes = [2, 256], strides = [1, 1]} : vector<16x512xf32> to vector<2x256xf32>
    %475 = arith.truncf %464 : vector<2x64xf32> to vector<2x64xbf16>
    %cst_100 = arith.constant dense<0.000000e+00> : vector<2x256xf32>
    %476 = tpu.matmul %475, %353, %cst_100 {dimension_numbers = #tpu.dot_dimension_numbers<[1], [0], [0], [1], [0, 0, 1, 1], [], []>} : vector<2x64xbf16>, vector<64x256xbf16>, vector<2x256xf32> -> vector<2x256xf32>
    %477 = arith.addf %474, %476 : vector<2x256xf32>
    %478 = vector.extract_strided_slice %358 {offsets = [8, 256], sizes = [2, 256], strides = [1, 1]} : vector<16x512xf32> to vector<2x256xf32>
    %479 = arith.truncf %473 : vector<2x64xf32> to vector<2x64xbf16>
    %cst_101 = arith.constant dense<0.000000e+00> : vector<2x256xf32>
    %480 = tpu.matmul %479, %354, %cst_101 {dimension_numbers = #tpu.dot_dimension_numbers<[1], [0], [0], [1], [0, 0, 1, 1], [], []>} : vector<2x64xbf16>, vector<64x256xbf16>, vector<2x256xf32> -> vector<2x256xf32>
    %481 = arith.addf %478, %480 : vector<2x256xf32>
    %482 = arith.negf %477 : vector<2x256xf32>
    %483 = math.exp %482 : vector<2x256xf32>
    %cst_102 = arith.constant 1.000000e+00 : f32
    %484 = vector.broadcast %cst_102 : f32 to vector<2x256xf32>
    %485 = arith.addf %484, %483 : vector<2x256xf32>
    %486 = arith.divf %484, %485 : vector<2x256xf32>
    %487 = math.tanh %477 : vector<2x256xf32>
    %488 = arith.negf %481 : vector<2x256xf32>
    %489 = math.exp %488 : vector<2x256xf32>
    %cst_103 = arith.constant 1.000000e+00 : f32
    %490 = vector.broadcast %cst_103 : f32 to vector<2x256xf32>
    %491 = arith.addf %490, %489 : vector<2x256xf32>
    %492 = arith.divf %490, %491 : vector<2x256xf32>
    %493 = math.tanh %481 : vector<2x256xf32>
    %494 = vector.extract_strided_slice %486 {offsets = [0, 64], sizes = [2, 64], strides = [1, 1]} : vector<2x256xf32> to vector<2x64xf32>
    %495 = arith.mulf %494, %461 : vector<2x64xf32>
    %496 = vector.extract_strided_slice %486 {offsets = [0, 0], sizes = [2, 64], strides = [1, 1]} : vector<2x256xf32> to vector<2x64xf32>
    %497 = vector.extract_strided_slice %487 {offsets = [0, 128], sizes = [2, 64], strides = [1, 1]} : vector<2x256xf32> to vector<2x64xf32>
    %498 = arith.mulf %496, %497 : vector<2x64xf32>
    %499 = arith.addf %495, %498 : vector<2x64xf32>
    %500 = vector.extract_strided_slice %486 {offsets = [0, 192], sizes = [2, 64], strides = [1, 1]} : vector<2x256xf32> to vector<2x64xf32>
    %501 = math.tanh %499 : vector<2x64xf32>
    %502 = arith.mulf %500, %501 : vector<2x64xf32>
    %503 = vector.extract_strided_slice %492 {offsets = [0, 64], sizes = [2, 64], strides = [1, 1]} : vector<2x256xf32> to vector<2x64xf32>
    %504 = arith.mulf %503, %470 : vector<2x64xf32>
    %505 = vector.extract_strided_slice %492 {offsets = [0, 0], sizes = [2, 64], strides = [1, 1]} : vector<2x256xf32> to vector<2x64xf32>
    %506 = vector.extract_strided_slice %493 {offsets = [0, 128], sizes = [2, 64], strides = [1, 1]} : vector<2x256xf32> to vector<2x64xf32>
    %507 = arith.mulf %505, %506 : vector<2x64xf32>
    %508 = arith.addf %504, %507 : vector<2x64xf32>
    %509 = vector.extract_strided_slice %492 {offsets = [0, 192], sizes = [2, 64], strides = [1, 1]} : vector<2x256xf32> to vector<2x64xf32>
    %510 = math.tanh %508 : vector<2x64xf32>
    %511 = arith.mulf %509, %510 : vector<2x64xf32>
    %512 = vector.extract_strided_slice %358 {offsets = [8, 0], sizes = [2, 256], strides = [1, 1]} : vector<16x512xf32> to vector<2x256xf32>
    %513 = arith.truncf %502 : vector<2x64xf32> to vector<2x64xbf16>
    %cst_104 = arith.constant dense<0.000000e+00> : vector<2x256xf32>
    %514 = tpu.matmul %513, %353, %cst_104 {dimension_numbers = #tpu.dot_dimension_numbers<[1], [0], [0], [1], [0, 0, 1, 1], [], []>} : vector<2x64xbf16>, vector<64x256xbf16>, vector<2x256xf32> -> vector<2x256xf32>
    %515 = arith.addf %512, %514 : vector<2x256xf32>
    %516 = vector.extract_strided_slice %358 {offsets = [6, 256], sizes = [2, 256], strides = [1, 1]} : vector<16x512xf32> to vector<2x256xf32>
    %517 = arith.truncf %511 : vector<2x64xf32> to vector<2x64xbf16>
    %cst_105 = arith.constant dense<0.000000e+00> : vector<2x256xf32>
    %518 = tpu.matmul %517, %354, %cst_105 {dimension_numbers = #tpu.dot_dimension_numbers<[1], [0], [0], [1], [0, 0, 1, 1], [], []>} : vector<2x64xbf16>, vector<64x256xbf16>, vector<2x256xf32> -> vector<2x256xf32>
    %519 = arith.addf %516, %518 : vector<2x256xf32>
    %520 = arith.negf %515 : vector<2x256xf32>
    %521 = math.exp %520 : vector<2x256xf32>
    %cst_106 = arith.constant 1.000000e+00 : f32
    %522 = vector.broadcast %cst_106 : f32 to vector<2x256xf32>
    %523 = arith.addf %522, %521 : vector<2x256xf32>
    %524 = arith.divf %522, %523 : vector<2x256xf32>
    %525 = math.tanh %515 : vector<2x256xf32>
    %526 = arith.negf %519 : vector<2x256xf32>
    %527 = math.exp %526 : vector<2x256xf32>
    %cst_107 = arith.constant 1.000000e+00 : f32
    %528 = vector.broadcast %cst_107 : f32 to vector<2x256xf32>
    %529 = arith.addf %528, %527 : vector<2x256xf32>
    %530 = arith.divf %528, %529 : vector<2x256xf32>
    %531 = math.tanh %519 : vector<2x256xf32>
    %532 = vector.extract_strided_slice %524 {offsets = [0, 64], sizes = [2, 64], strides = [1, 1]} : vector<2x256xf32> to vector<2x64xf32>
    %533 = arith.mulf %532, %499 : vector<2x64xf32>
    %534 = vector.extract_strided_slice %524 {offsets = [0, 0], sizes = [2, 64], strides = [1, 1]} : vector<2x256xf32> to vector<2x64xf32>
    %535 = vector.extract_strided_slice %525 {offsets = [0, 128], sizes = [2, 64], strides = [1, 1]} : vector<2x256xf32> to vector<2x64xf32>
    %536 = arith.mulf %534, %535 : vector<2x64xf32>
    %537 = arith.addf %533, %536 : vector<2x64xf32>
    %538 = vector.extract_strided_slice %524 {offsets = [0, 192], sizes = [2, 64], strides = [1, 1]} : vector<2x256xf32> to vector<2x64xf32>
    %539 = math.tanh %537 : vector<2x64xf32>
    %540 = arith.mulf %538, %539 : vector<2x64xf32>
    %541 = vector.extract_strided_slice %530 {offsets = [0, 64], sizes = [2, 64], strides = [1, 1]} : vector<2x256xf32> to vector<2x64xf32>
    %542 = arith.mulf %541, %508 : vector<2x64xf32>
    %543 = vector.extract_strided_slice %530 {offsets = [0, 0], sizes = [2, 64], strides = [1, 1]} : vector<2x256xf32> to vector<2x64xf32>
    %544 = vector.extract_strided_slice %531 {offsets = [0, 128], sizes = [2, 64], strides = [1, 1]} : vector<2x256xf32> to vector<2x64xf32>
    %545 = arith.mulf %543, %544 : vector<2x64xf32>
    %546 = arith.addf %542, %545 : vector<2x64xf32>
    %547 = vector.extract_strided_slice %530 {offsets = [0, 192], sizes = [2, 64], strides = [1, 1]} : vector<2x256xf32> to vector<2x64xf32>
    %548 = math.tanh %546 : vector<2x64xf32>
    %549 = arith.mulf %547, %548 : vector<2x64xf32>
    %550 = vector.extract_strided_slice %358 {offsets = [10, 0], sizes = [2, 256], strides = [1, 1]} : vector<16x512xf32> to vector<2x256xf32>
    %551 = arith.truncf %540 : vector<2x64xf32> to vector<2x64xbf16>
    %cst_108 = arith.constant dense<0.000000e+00> : vector<2x256xf32>
    %552 = tpu.matmul %551, %353, %cst_108 {dimension_numbers = #tpu.dot_dimension_numbers<[1], [0], [0], [1], [0, 0, 1, 1], [], []>} : vector<2x64xbf16>, vector<64x256xbf16>, vector<2x256xf32> -> vector<2x256xf32>
    %553 = arith.addf %550, %552 : vector<2x256xf32>
    %554 = vector.extract_strided_slice %358 {offsets = [4, 256], sizes = [2, 256], strides = [1, 1]} : vector<16x512xf32> to vector<2x256xf32>
    %555 = arith.truncf %549 : vector<2x64xf32> to vector<2x64xbf16>
    %cst_109 = arith.constant dense<0.000000e+00> : vector<2x256xf32>
    %556 = tpu.matmul %555, %354, %cst_109 {dimension_numbers = #tpu.dot_dimension_numbers<[1], [0], [0], [1], [0, 0, 1, 1], [], []>} : vector<2x64xbf16>, vector<64x256xbf16>, vector<2x256xf32> -> vector<2x256xf32>
    %557 = arith.addf %554, %556 : vector<2x256xf32>
    %558 = arith.negf %553 : vector<2x256xf32>
    %559 = math.exp %558 : vector<2x256xf32>
    %cst_110 = arith.constant 1.000000e+00 : f32
    %560 = vector.broadcast %cst_110 : f32 to vector<2x256xf32>
    %561 = arith.addf %560, %559 : vector<2x256xf32>
    %562 = arith.divf %560, %561 : vector<2x256xf32>
    %563 = math.tanh %553 : vector<2x256xf32>
    %564 = arith.negf %557 : vector<2x256xf32>
    %565 = math.exp %564 : vector<2x256xf32>
    %cst_111 = arith.constant 1.000000e+00 : f32
    %566 = vector.broadcast %cst_111 : f32 to vector<2x256xf32>
    %567 = arith.addf %566, %565 : vector<2x256xf32>
    %568 = arith.divf %566, %567 : vector<2x256xf32>
    %569 = math.tanh %557 : vector<2x256xf32>
    %570 = vector.extract_strided_slice %562 {offsets = [0, 64], sizes = [2, 64], strides = [1, 1]} : vector<2x256xf32> to vector<2x64xf32>
    %571 = arith.mulf %570, %537 : vector<2x64xf32>
    %572 = vector.extract_strided_slice %562 {offsets = [0, 0], sizes = [2, 64], strides = [1, 1]} : vector<2x256xf32> to vector<2x64xf32>
    %573 = vector.extract_strided_slice %563 {offsets = [0, 128], sizes = [2, 64], strides = [1, 1]} : vector<2x256xf32> to vector<2x64xf32>
    %574 = arith.mulf %572, %573 : vector<2x64xf32>
    %575 = arith.addf %571, %574 : vector<2x64xf32>
    %576 = vector.extract_strided_slice %562 {offsets = [0, 192], sizes = [2, 64], strides = [1, 1]} : vector<2x256xf32> to vector<2x64xf32>
    %577 = math.tanh %575 : vector<2x64xf32>
    %578 = arith.mulf %576, %577 : vector<2x64xf32>
    %579 = vector.extract_strided_slice %568 {offsets = [0, 64], sizes = [2, 64], strides = [1, 1]} : vector<2x256xf32> to vector<2x64xf32>
    %580 = arith.mulf %579, %546 : vector<2x64xf32>
    %581 = vector.extract_strided_slice %568 {offsets = [0, 0], sizes = [2, 64], strides = [1, 1]} : vector<2x256xf32> to vector<2x64xf32>
    %582 = vector.extract_strided_slice %569 {offsets = [0, 128], sizes = [2, 64], strides = [1, 1]} : vector<2x256xf32> to vector<2x64xf32>
    %583 = arith.mulf %581, %582 : vector<2x64xf32>
    %584 = arith.addf %580, %583 : vector<2x64xf32>
    %585 = vector.extract_strided_slice %568 {offsets = [0, 192], sizes = [2, 64], strides = [1, 1]} : vector<2x256xf32> to vector<2x64xf32>
    %586 = math.tanh %584 : vector<2x64xf32>
    %587 = arith.mulf %585, %586 : vector<2x64xf32>
    %588 = vector.extract_strided_slice %358 {offsets = [12, 0], sizes = [2, 256], strides = [1, 1]} : vector<16x512xf32> to vector<2x256xf32>
    %589 = arith.truncf %578 : vector<2x64xf32> to vector<2x64xbf16>
    %cst_112 = arith.constant dense<0.000000e+00> : vector<2x256xf32>
    %590 = tpu.matmul %589, %353, %cst_112 {dimension_numbers = #tpu.dot_dimension_numbers<[1], [0], [0], [1], [0, 0, 1, 1], [], []>} : vector<2x64xbf16>, vector<64x256xbf16>, vector<2x256xf32> -> vector<2x256xf32>
    %591 = arith.addf %588, %590 : vector<2x256xf32>
    %592 = vector.extract_strided_slice %358 {offsets = [2, 256], sizes = [2, 256], strides = [1, 1]} : vector<16x512xf32> to vector<2x256xf32>
    %593 = arith.truncf %587 : vector<2x64xf32> to vector<2x64xbf16>
    %cst_113 = arith.constant dense<0.000000e+00> : vector<2x256xf32>
    %594 = tpu.matmul %593, %354, %cst_113 {dimension_numbers = #tpu.dot_dimension_numbers<[1], [0], [0], [1], [0, 0, 1, 1], [], []>} : vector<2x64xbf16>, vector<64x256xbf16>, vector<2x256xf32> -> vector<2x256xf32>
    %595 = arith.addf %592, %594 : vector<2x256xf32>
    %596 = arith.negf %591 : vector<2x256xf32>
    %597 = math.exp %596 : vector<2x256xf32>
    %cst_114 = arith.constant 1.000000e+00 : f32
    %598 = vector.broadcast %cst_114 : f32 to vector<2x256xf32>
    %599 = arith.addf %598, %597 : vector<2x256xf32>
    %600 = arith.divf %598, %599 : vector<2x256xf32>
    %601 = math.tanh %591 : vector<2x256xf32>
    %602 = arith.negf %595 : vector<2x256xf32>
    %603 = math.exp %602 : vector<2x256xf32>
    %cst_115 = arith.constant 1.000000e+00 : f32
    %604 = vector.broadcast %cst_115 : f32 to vector<2x256xf32>
    %605 = arith.addf %604, %603 : vector<2x256xf32>
    %606 = arith.divf %604, %605 : vector<2x256xf32>
    %607 = math.tanh %595 : vector<2x256xf32>
    %608 = vector.extract_strided_slice %600 {offsets = [0, 64], sizes = [2, 64], strides = [1, 1]} : vector<2x256xf32> to vector<2x64xf32>
    %609 = arith.mulf %608, %575 : vector<2x64xf32>
    %610 = vector.extract_strided_slice %600 {offsets = [0, 0], sizes = [2, 64], strides = [1, 1]} : vector<2x256xf32> to vector<2x64xf32>
    %611 = vector.extract_strided_slice %601 {offsets = [0, 128], sizes = [2, 64], strides = [1, 1]} : vector<2x256xf32> to vector<2x64xf32>
    %612 = arith.mulf %610, %611 : vector<2x64xf32>
    %613 = arith.addf %609, %612 : vector<2x64xf32>
    %614 = vector.extract_strided_slice %600 {offsets = [0, 192], sizes = [2, 64], strides = [1, 1]} : vector<2x256xf32> to vector<2x64xf32>
    %615 = math.tanh %613 : vector<2x64xf32>
    %616 = arith.mulf %614, %615 : vector<2x64xf32>
    %617 = vector.extract_strided_slice %606 {offsets = [0, 64], sizes = [2, 64], strides = [1, 1]} : vector<2x256xf32> to vector<2x64xf32>
    %618 = arith.mulf %617, %584 : vector<2x64xf32>
    %619 = vector.extract_strided_slice %606 {offsets = [0, 0], sizes = [2, 64], strides = [1, 1]} : vector<2x256xf32> to vector<2x64xf32>
    %620 = vector.extract_strided_slice %607 {offsets = [0, 128], sizes = [2, 64], strides = [1, 1]} : vector<2x256xf32> to vector<2x64xf32>
    %621 = arith.mulf %619, %620 : vector<2x64xf32>
    %622 = arith.addf %618, %621 : vector<2x64xf32>
    %623 = vector.extract_strided_slice %606 {offsets = [0, 192], sizes = [2, 64], strides = [1, 1]} : vector<2x256xf32> to vector<2x64xf32>
    %624 = math.tanh %622 : vector<2x64xf32>
    %625 = arith.mulf %623, %624 : vector<2x64xf32>
    %626 = vector.extract_strided_slice %358 {offsets = [14, 0], sizes = [2, 256], strides = [1, 1]} : vector<16x512xf32> to vector<2x256xf32>
    %627 = arith.truncf %616 : vector<2x64xf32> to vector<2x64xbf16>
    %cst_116 = arith.constant dense<0.000000e+00> : vector<2x256xf32>
    %628 = tpu.matmul %627, %353, %cst_116 {dimension_numbers = #tpu.dot_dimension_numbers<[1], [0], [0], [1], [0, 0, 1, 1], [], []>} : vector<2x64xbf16>, vector<64x256xbf16>, vector<2x256xf32> -> vector<2x256xf32>
    %629 = arith.addf %626, %628 : vector<2x256xf32>
    %630 = vector.extract_strided_slice %358 {offsets = [0, 256], sizes = [2, 256], strides = [1, 1]} : vector<16x512xf32> to vector<2x256xf32>
    %631 = arith.truncf %625 : vector<2x64xf32> to vector<2x64xbf16>
    %cst_117 = arith.constant dense<0.000000e+00> : vector<2x256xf32>
    %632 = tpu.matmul %631, %354, %cst_117 {dimension_numbers = #tpu.dot_dimension_numbers<[1], [0], [0], [1], [0, 0, 1, 1], [], []>} : vector<2x64xbf16>, vector<64x256xbf16>, vector<2x256xf32> -> vector<2x256xf32>
    %633 = arith.addf %630, %632 : vector<2x256xf32>
    %634 = arith.negf %629 : vector<2x256xf32>
    %635 = math.exp %634 : vector<2x256xf32>
    %cst_118 = arith.constant 1.000000e+00 : f32
    %636 = vector.broadcast %cst_118 : f32 to vector<2x256xf32>
    %637 = arith.addf %636, %635 : vector<2x256xf32>
    %638 = arith.divf %636, %637 : vector<2x256xf32>
    %639 = math.tanh %629 : vector<2x256xf32>
    %640 = arith.negf %633 : vector<2x256xf32>
    %641 = math.exp %640 : vector<2x256xf32>
    %cst_119 = arith.constant 1.000000e+00 : f32
    %642 = vector.broadcast %cst_119 : f32 to vector<2x256xf32>
    %643 = arith.addf %642, %641 : vector<2x256xf32>
    %644 = arith.divf %642, %643 : vector<2x256xf32>
    %645 = math.tanh %633 : vector<2x256xf32>
    %646 = vector.extract_strided_slice %638 {offsets = [0, 64], sizes = [2, 64], strides = [1, 1]} : vector<2x256xf32> to vector<2x64xf32>
    %647 = arith.mulf %646, %613 : vector<2x64xf32>
    %648 = vector.extract_strided_slice %638 {offsets = [0, 0], sizes = [2, 64], strides = [1, 1]} : vector<2x256xf32> to vector<2x64xf32>
    %649 = vector.extract_strided_slice %639 {offsets = [0, 128], sizes = [2, 64], strides = [1, 1]} : vector<2x256xf32> to vector<2x64xf32>
    %650 = arith.mulf %648, %649 : vector<2x64xf32>
    %651 = arith.addf %647, %650 : vector<2x64xf32>
    %652 = vector.extract_strided_slice %638 {offsets = [0, 192], sizes = [2, 64], strides = [1, 1]} : vector<2x256xf32> to vector<2x64xf32>
    %653 = math.tanh %651 : vector<2x64xf32>
    %654 = arith.mulf %652, %653 : vector<2x64xf32>
    %655 = vector.extract_strided_slice %644 {offsets = [0, 64], sizes = [2, 64], strides = [1, 1]} : vector<2x256xf32> to vector<2x64xf32>
    %656 = arith.mulf %655, %622 : vector<2x64xf32>
    %657 = vector.extract_strided_slice %644 {offsets = [0, 0], sizes = [2, 64], strides = [1, 1]} : vector<2x256xf32> to vector<2x64xf32>
    %658 = vector.extract_strided_slice %645 {offsets = [0, 128], sizes = [2, 64], strides = [1, 1]} : vector<2x256xf32> to vector<2x64xf32>
    %659 = arith.mulf %657, %658 : vector<2x64xf32>
    %660 = arith.addf %656, %659 : vector<2x64xf32>
    %661 = vector.extract_strided_slice %644 {offsets = [0, 192], sizes = [2, 64], strides = [1, 1]} : vector<2x256xf32> to vector<2x64xf32>
    %662 = math.tanh %660 : vector<2x64xf32>
    %663 = arith.mulf %661, %662 : vector<2x64xf32>
    %c0_120 = arith.constant 0 : index
    %c0_121 = arith.constant 0 : index
    %664 = vector.load %arg0[%c0_120, %c0_121] : memref<2x1xi32, #tpu.memory_space<vmem>>, vector<2x1xi32>
    %cst_122 = arith.constant 0.000000e+00 : f32
    %665 = vector.broadcast %cst_122 : f32 to vector<2x64xf32>
    %cst_123 = arith.constant 0.000000e+00 : f32
    %666 = vector.broadcast %cst_123 : f32 to vector<2x64xf32>
    %c0_i32 = arith.constant 0 : i32
    %667 = vector.broadcast %c0_i32 : i32 to vector<2x1xi32>
    %668 = arith.cmpi eq, %664, %667 : vector<2x1xi32>
    %669 = vector.shape_cast %668 : vector<2x1xi1> to vector<2x1xi1>
    %670 = vector.broadcast %669 : vector<2x1xi1> to vector<2x64xi1>
    %671 = arith.select %670, %388, %665 : vector<2x64xi1>, vector<2x64xf32>
    %672 = vector.shape_cast %668 : vector<2x1xi1> to vector<2x1xi1>
    %673 = vector.broadcast %672 : vector<2x1xi1> to vector<2x64xi1>
    %674 = arith.select %673, %663, %666 : vector<2x64xi1>, vector<2x64xf32>
    %c1_i32 = arith.constant 1 : i32
    %675 = vector.broadcast %c1_i32 : i32 to vector<2x1xi32>
    %676 = arith.cmpi eq, %664, %675 : vector<2x1xi32>
    %677 = vector.shape_cast %676 : vector<2x1xi1> to vector<2x1xi1>
    %678 = vector.broadcast %677 : vector<2x1xi1> to vector<2x64xi1>
    %679 = arith.select %678, %426, %671 : vector<2x64xi1>, vector<2x64xf32>
    %680 = vector.shape_cast %676 : vector<2x1xi1> to vector<2x1xi1>
    %681 = vector.broadcast %680 : vector<2x1xi1> to vector<2x64xi1>
    %682 = arith.select %681, %625, %674 : vector<2x64xi1>, vector<2x64xf32>
    %c2_i32 = arith.constant 2 : i32
    %683 = vector.broadcast %c2_i32 : i32 to vector<2x1xi32>
    %684 = arith.cmpi eq, %664, %683 : vector<2x1xi32>
    %685 = vector.shape_cast %684 : vector<2x1xi1> to vector<2x1xi1>
    %686 = vector.broadcast %685 : vector<2x1xi1> to vector<2x64xi1>
    %687 = arith.select %686, %464, %679 : vector<2x64xi1>, vector<2x64xf32>
    %688 = vector.shape_cast %684 : vector<2x1xi1> to vector<2x1xi1>
    %689 = vector.broadcast %688 : vector<2x1xi1> to vector<2x64xi1>
    %690 = arith.select %689, %587, %682 : vector<2x64xi1>, vector<2x64xf32>
    %c3_i32 = arith.constant 3 : i32
    %691 = vector.broadcast %c3_i32 : i32 to vector<2x1xi32>
    %692 = arith.cmpi eq, %664, %691 : vector<2x1xi32>
    %693 = vector.shape_cast %692 : vector<2x1xi1> to vector<2x1xi1>
    %694 = vector.broadcast %693 : vector<2x1xi1> to vector<2x64xi1>
    %695 = arith.select %694, %502, %687 : vector<2x64xi1>, vector<2x64xf32>
    %696 = vector.shape_cast %692 : vector<2x1xi1> to vector<2x1xi1>
    %697 = vector.broadcast %696 : vector<2x1xi1> to vector<2x64xi1>
    %698 = arith.select %697, %549, %690 : vector<2x64xi1>, vector<2x64xf32>
    %c4_i32 = arith.constant 4 : i32
    %699 = vector.broadcast %c4_i32 : i32 to vector<2x1xi32>
    %700 = arith.cmpi eq, %664, %699 : vector<2x1xi32>
    %701 = vector.shape_cast %700 : vector<2x1xi1> to vector<2x1xi1>
    %702 = vector.broadcast %701 : vector<2x1xi1> to vector<2x64xi1>
    %703 = arith.select %702, %540, %695 : vector<2x64xi1>, vector<2x64xf32>
    %704 = vector.shape_cast %700 : vector<2x1xi1> to vector<2x1xi1>
    %705 = vector.broadcast %704 : vector<2x1xi1> to vector<2x64xi1>
    %706 = arith.select %705, %511, %698 : vector<2x64xi1>, vector<2x64xf32>
    %c5_i32 = arith.constant 5 : i32
    %707 = vector.broadcast %c5_i32 : i32 to vector<2x1xi32>
    %708 = arith.cmpi eq, %664, %707 : vector<2x1xi32>
    %709 = vector.shape_cast %708 : vector<2x1xi1> to vector<2x1xi1>
    %710 = vector.broadcast %709 : vector<2x1xi1> to vector<2x64xi1>
    %711 = arith.select %710, %578, %703 : vector<2x64xi1>, vector<2x64xf32>
    %712 = vector.shape_cast %708 : vector<2x1xi1> to vector<2x1xi1>
    %713 = vector.broadcast %712 : vector<2x1xi1> to vector<2x64xi1>
    %714 = arith.select %713, %473, %706 : vector<2x64xi1>, vector<2x64xf32>
    %c6_i32 = arith.constant 6 : i32
    %715 = vector.broadcast %c6_i32 : i32 to vector<2x1xi32>
    %716 = arith.cmpi eq, %664, %715 : vector<2x1xi32>
    %717 = vector.shape_cast %716 : vector<2x1xi1> to vector<2x1xi1>
    %718 = vector.broadcast %717 : vector<2x1xi1> to vector<2x64xi1>
    %719 = arith.select %718, %616, %711 : vector<2x64xi1>, vector<2x64xf32>
    %720 = vector.shape_cast %716 : vector<2x1xi1> to vector<2x1xi1>
    %721 = vector.broadcast %720 : vector<2x1xi1> to vector<2x64xi1>
    %722 = arith.select %721, %435, %714 : vector<2x64xi1>, vector<2x64xf32>
    %c7_i32 = arith.constant 7 : i32
    %723 = vector.broadcast %c7_i32 : i32 to vector<2x1xi32>
    %724 = arith.cmpi eq, %664, %723 : vector<2x1xi32>
    %725 = vector.shape_cast %724 : vector<2x1xi1> to vector<2x1xi1>
    %726 = vector.broadcast %725 : vector<2x1xi1> to vector<2x64xi1>
    %727 = arith.select %726, %654, %719 : vector<2x64xi1>, vector<2x64xf32>
    %728 = vector.shape_cast %724 : vector<2x1xi1> to vector<2x1xi1>
    %729 = vector.broadcast %728 : vector<2x1xi1> to vector<2x64xi1>
    %730 = arith.select %729, %397, %722 : vector<2x64xi1>, vector<2x64xf32>
    %731 = tpu.concatenate %727, %730 in 1 : vector<2x64xf32>, vector<2x64xf32> -> vector<2x128xf32>
    %732 = arith.truncf %731 : vector<2x128xf32> to vector<2x128xbf16>
    %c0_124 = arith.constant 0 : index
    %c0_125 = arith.constant 0 : index
    %733 = vector.load %arg15[%c0_124, %c0_125] : memref<128x32xbf16, #tpu.memory_space<vmem>>, vector<128x32xbf16>
    %cst_126 = arith.constant dense<0.000000e+00> : vector<2x32xf32>
    %734 = tpu.matmul %732, %733, %cst_126 {dimension_numbers = #tpu.dot_dimension_numbers<[1], [0], [0], [1], [0, 0, 1, 1], [], []>} : vector<2x128xbf16>, vector<128x32xbf16>, vector<2x32xf32> -> vector<2x32xf32>
    %c0_127 = arith.constant 0 : index
    %c0_128 = arith.constant 0 : index
    %735 = vector.load %arg16[%c0_127, %c0_128] : memref<1x32xf32, #tpu.memory_space<vmem>>, vector<1x32xf32>
    %736 = vector.broadcast %735 : vector<1x32xf32> to vector<2x32xf32>
    %737 = arith.addf %734, %736 : vector<2x32xf32>
    %cst_129 = arith.constant 0.000000e+00 : f32
    %738 = vector.broadcast %cst_129 : f32 to vector<2x32xf32>
    %739 = arith.maximumf %737, %738 : vector<2x32xf32>
    %740 = arith.truncf %739 : vector<2x32xf32> to vector<2x32xbf16>
    %c0_130 = arith.constant 0 : index
    %c0_131 = arith.constant 0 : index
    %741 = vector.load %arg17[%c0_130, %c0_131] : memref<32x1xbf16, #tpu.memory_space<vmem>>, vector<32x1xbf16>
    %cst_132 = arith.constant dense<0.000000e+00> : vector<2x1xf32>
    %742 = tpu.matmul %740, %741, %cst_132 {dimension_numbers = #tpu.dot_dimension_numbers<[1], [0], [0], [1], [0, 0, 1, 1], [], []>} : vector<2x32xbf16>, vector<32x1xbf16>, vector<2x1xf32> -> vector<2x1xf32>
    %c0_133 = arith.constant 0 : index
    %c0_134 = arith.constant 0 : index
    %743 = vector.load %arg18[%c0_133, %c0_134] : memref<1x1xf32, #tpu.memory_space<vmem>>, vector<1x1xf32>
    %744 = vector.broadcast %743 : vector<1x1xf32> to vector<2x1xf32>
    %745 = arith.addf %742, %744 : vector<2x1xf32>
    %c0_135 = arith.constant 0 : index
    %c0_136 = arith.constant 0 : index
    %746 = vector.load %arg19[%c0_135, %c0_136] : memref<2x1xf32, #tpu.memory_space<vmem>>, vector<2x1xf32>
    tpu.vector_store %arg19[%c0_135, %c0_136], %745 {strides = array<i32>} : memref<2x1xf32, #tpu.memory_space<vmem>>, vector<2x1xf32>,
    return
  }
}

</mosaic_0001>

<llo_original>
// kernel: graph_state_2eep_forward.1
$region0: #{graph_state_2eep_forward.1}
  #allocation0 [shape = 'u32[]', space=smem, size = 0x4, offset = 0x4, fixed_abs, tag = 'smem constant byte address 0x4 - core index']
  #allocation1 [shape = 'u32[144,128]{1,0:T(1,128)}', space=vmem, size = 0x12000, scoped, tag = 'internal scratch']
  #allocation2 [shape = 'f32[32,32]{1,0:T(8,128)}', space=vmem, size = 0x4000, scoped, tag = 'scratch operand']
  #allocation3 [shape = 'f32[1,1]{1,0:T(1,128)S(1)}', space=vmem, size = 0x200, scoped, tag = 'scoped memory for graph_state_2eep_forward.1']
  %s0 = inlined_call_operand.vmem [shape: s32[2,1], index: 0, kind: input, shape index: {}]
  %s1 = inlined_call_operand.vmem [shape: bf16[16,32], index: 1, kind: input, shape index: {}]
  %s2 = inlined_call_operand.vmem [shape: bf16[16,16], index: 2, kind: input, shape index: {}]
  %s3 = inlined_call_operand.vmem [shape: bf16[32,256], index: 3, kind: input, shape index: {}]
  %s4 = inlined_call_operand.vmem [shape: bf16[32,128], index: 4, kind: input, shape index: {}]
  %s5 = inlined_call_operand.vmem [shape: bf16[32,128], index: 5, kind: input, shape index: {}]
  %s6 = inlined_call_operand.vmem [shape: f32[1,256], index: 6, kind: input, shape index: {}]
  %s7 = inlined_call_operand.vmem [shape: bf16[64,64], index: 7, kind: input, shape index: {}]
  %s8 = inlined_call_operand.vmem [shape: f32[1,64], index: 8, kind: input, shape index: {}]
  %s9 = inlined_call_operand.vmem [shape: bf16[64,32], index: 9, kind: input, shape index: {}]
  %s10 = inlined_call_operand.vmem [shape: f32[1,32], index: 10, kind: input, shape index: {}]
  %s11 = inlined_call_operand.vmem [shape: bf16[32,512], index: 11, kind: input, shape index: {}]
  %s12 = inlined_call_operand.vmem [shape: bf16[64,256], index: 12, kind: input, shape index: {}]
  %s13 = inlined_call_operand.vmem [shape: bf16[64,256], index: 13, kind: input, shape index: {}]
  %s14 = inlined_call_operand.vmem [shape: f32[1,512], index: 14, kind: input, shape index: {}]
  %s15 = inlined_call_operand.vmem [shape: bf16[128,32], index: 15, kind: input, shape index: {}]
  %s16 = inlined_call_operand.vmem [shape: f32[1,32], index: 16, kind: input, shape index: {}]
  %s17 = inlined_call_operand.vmem [shape: bf16[32,1], index: 17, kind: input, shape index: {}]
  %s18 = inlined_call_operand.<no memory space> [shape: f32[1,1], index: 18, kind: input, shape index: {}]
  %s19 = inlined_call_operand.vmem [shape: f32[2,1], index: 19, kind: output, shape index: {}]
  %s20 = sld [smem:[#allocation0]]
  $region86: #{graph_state_2eep_forward.1} parent=0
    _
  %s22 = ssub.s32 1, %s20
  %s23 = scalar_select 0, %s22, %s20
  %v24 = vstv %s18
  %25 = vst [vmem:[#allocation3] sm:$0x1] %v24
  // Predicated region
  $region2: #{graph_state_2eep_forward.1} parent=0 // pred_check
    _
  $region3: #{graph_state_2eep_forward.1} parent=0 // pred_check_branch
    %27 = sbr.rel (0) target = $region5
  $region4: #{graph_state_2eep_forward.1} parent=0 // pred_region
    _
  $region5: #{graph_state_2eep_forward.1} parent=0 // pred_fallthru
    _
  // Predicated region
  $region6: #{graph_state_2eep_forward.1} parent=0 // pred_check
    _
  $region7: #{graph_state_2eep_forward.1} parent=0 // pred_check_branch
    %29 = sbr.rel (0) target = $region9
  $region8: #{graph_state_2eep_forward.1} parent=0 // pred_region
    _
  $region9: #{graph_state_2eep_forward.1} parent=0 // pred_fallthru
    _
  // Predicated region
  $region10: #{graph_state_2eep_forward.1} parent=0 // pred_check
    _
  $region11: #{graph_state_2eep_forward.1} parent=0 // pred_check_branch
    %31 = sbr.rel (0) target = $region13
  $region12: #{graph_state_2eep_forward.1} parent=0 // pred_region
    _
  $region13: #{graph_state_2eep_forward.1} parent=0 // pred_fallthru
    _
  // Predicated region
  $region14: #{graph_state_2eep_forward.1} parent=0 // pred_check
    _
  $region15: #{graph_state_2eep_forward.1} parent=0 // pred_check_branch
    %33 = sbr.rel (0) target = $region17
  $region16: #{graph_state_2eep_forward.1} parent=0 // pred_region
    _
  $region17: #{graph_state_2eep_forward.1} parent=0 // pred_fallthru
    _
  // Predicated region
  $region18: #{graph_state_2eep_forward.1} parent=0 // pred_check
    _
  $region19: #{graph_state_2eep_forward.1} parent=0 // pred_check_branch
    %35 = sbr.rel (0) target = $region21
  $region20: #{graph_state_2eep_forward.1} parent=0 // pred_region
    _
  $region21: #{graph_state_2eep_forward.1} parent=0 // pred_fallthru
    _
  // Predicated region
  $region22: #{graph_state_2eep_forward.1} parent=0 // pred_check
    _
  $region23: #{graph_state_2eep_forward.1} parent=0 // pred_check_branch
    %37 = sbr.rel (0) target = $region25
  $region24: #{graph_state_2eep_forward.1} parent=0 // pred_region
    _
  $region25: #{graph_state_2eep_forward.1} parent=0 // pred_fallthru
    _
  // Predicated region
  $region26: #{graph_state_2eep_forward.1} parent=0 // pred_check
    _
  $region27: #{graph_state_2eep_forward.1} parent=0 // pred_check_branch
    %39 = sbr.rel (0) target = $region29
  $region28: #{graph_state_2eep_forward.1} parent=0 // pred_region
    _
  $region29: #{graph_state_2eep_forward.1} parent=0 // pred_fallthru
    _
  // Predicated region
  $region30: #{graph_state_2eep_forward.1} parent=0 // pred_check
    _
  $region31: #{graph_state_2eep_forward.1} parent=0 // pred_check_branch
    %41 = sbr.rel (0) target = $region33
  $region32: #{graph_state_2eep_forward.1} parent=0 // pred_region
    _
  $region33: #{graph_state_2eep_forward.1} parent=0 // pred_fallthru
    _
  // Predicated region
  $region34: #{graph_state_2eep_forward.1} parent=0 // pred_check
    _
  $region35: #{graph_state_2eep_forward.1} parent=0 // pred_check_branch
    %43 = sbr.rel (0) target = $region37
  $region36: #{graph_state_2eep_forward.1} parent=0 // pred_region
    _
  $region37: #{graph_state_2eep_forward.1} parent=0 // pred_fallthru
    _
  // Predicated region
  $region38: #{graph_state_2eep_forward.1} parent=0 // pred_check
    _
  $region39: #{graph_state_2eep_forward.1} parent=0 // pred_check_branch
    %45 = sbr.rel (0) target = $region41
  $region40: #{graph_state_2eep_forward.1} parent=0 // pred_region
    _
  $region41: #{graph_state_2eep_forward.1} parent=0 // pred_fallthru
    _
  // Predicated region
  $region42: #{graph_state_2eep_forward.1} parent=0 // pred_check
    _
  $region43: #{graph_state_2eep_forward.1} parent=0 // pred_check_branch
    %47 = sbr.rel (0) target = $region45
  $region44: #{graph_state_2eep_forward.1} parent=0 // pred_region
    _
  $region45: #{graph_state_2eep_forward.1} parent=0 // pred_fallthru
    _
  // Predicated region
  $region46: #{graph_state_2eep_forward.1} parent=0 // pred_check
    _
  $region47: #{graph_state_2eep_forward.1} parent=0 // pred_check_branch
    %49 = sbr.rel (0) target = $region49
  $region48: #{graph_state_2eep_forward.1} parent=0 // pred_region
    _
  $region49: #{graph_state_2eep_forward.1} parent=0 // pred_fallthru
    _
  // Predicated region
  $region50: #{graph_state_2eep_forward.1} parent=0 // pred_check
    _
  $region51: #{graph_state_2eep_forward.1} parent=0 // pred_check_branch
    %51 = sbr.rel (0) target = $region53
  $region52: #{graph_state_2eep_forward.1} parent=0 // pred_region
    _
  $region53: #{graph_state_2eep_forward.1} parent=0 // pred_fallthru
    _
  // Predicated region
  $region54: #{graph_state_2eep_forward.1} parent=0 // pred_check
    _
  $region55: #{graph_state_2eep_forward.1} parent=0 // pred_check_branch
    %53 = sbr.rel (0) target = $region57
  $region56: #{graph_state_2eep_forward.1} parent=0 // pred_region
    _
  $region57: #{graph_state_2eep_forward.1} parent=0 // pred_fallthru
    _
  // Predicated region
  $region58: #{graph_state_2eep_forward.1} parent=0 // pred_check
    _
  $region59: #{graph_state_2eep_forward.1} parent=0 // pred_check_branch
    %55 = sbr.rel (0) target = $region61
  $region60: #{graph_state_2eep_forward.1} parent=0 // pred_region
    _
  $region61: #{graph_state_2eep_forward.1} parent=0 // pred_fallthru
    _
  // Predicated region
  $region62: #{graph_state_2eep_forward.1} parent=0 // pred_check
    _
  $region63: #{graph_state_2eep_forward.1} parent=0 // pred_check_branch
    %57 = sbr.rel (0) target = $region65
  $region64: #{graph_state_2eep_forward.1} parent=0 // pred_region
    _
  $region65: #{graph_state_2eep_forward.1} parent=0 // pred_fallthru
    _
  // Predicated region
  $region66: #{graph_state_2eep_forward.1} parent=0 // pred_check
    _
  $region67: #{graph_state_2eep_forward.1} parent=0 // pred_check_branch
    %59 = sbr.rel (0) target = $region69
  $region68: #{graph_state_2eep_forward.1} parent=0 // pred_region
    _
  $region69: #{graph_state_2eep_forward.1} parent=0 // pred_fallthru
    _
  // Predicated region
  $region70: #{graph_state_2eep_forward.1} parent=0 // pred_check
    _
  $region71: #{graph_state_2eep_forward.1} parent=0 // pred_check_branch
    %61 = sbr.rel (0) target = $region73
  $region72: #{graph_state_2eep_forward.1} parent=0 // pred_region
    _
  $region73: #{graph_state_2eep_forward.1} parent=0 // pred_fallthru
    _
  // Predicated region
  $region74: #{graph_state_2eep_forward.1} parent=0 // pred_check
    _
  $region75: #{graph_state_2eep_forward.1} parent=0 // pred_check_branch
    %63 = sbr.rel (0) target = $region77
  $region76: #{graph_state_2eep_forward.1} parent=0 // pred_region
    _
  $region77: #{graph_state_2eep_forward.1} parent=0 // pred_fallthru
    _
  %v65 = vld [vmem:[%s1] sm:$0xf]
  %v66 = vld [vmem:[%s1 + $0x4] sm:$0xf]
  %v67 = vld [vmem:[%s3] sm:$0xff]
  %v68 = vld [vmem:[%s3 + $0x8] sm:$0xff]
  %v69 = vld [vmem:[%s3 + $0x10] sm:$0xff]
  %v70 = vld [vmem:[%s3 + $0x18] sm:$0xff]
  %v71 = vld [vmem:[%s4] sm:$0xf]
  %v72 = vld [vmem:[%s4 + $0x4] sm:$0xf]
  %v73 = vld [vmem:[%s4 + $0x8] sm:$0xf]
  %v74 = vld [vmem:[%s4 + $0xc] sm:$0xf]
  %v75 = vld [vmem:[%s5] sm:$0xf]
  %v76 = vld [vmem:[%s5 + $0x4] sm:$0xf]
  %v77 = vld [vmem:[%s5 + $0x8] sm:$0xf]
  %v78 = vld [vmem:[%s5 + $0xc] sm:$0xf]
  %v79 = vld [vmem:[%s6] sm:$0x3]
  %v81 = vlaneseq
  %v82 = vshrl.u32 %v81, 7
  %v83 = vsub.s32 0, %v82
  %v84 = vrot.slane %v79, %v83
  %v85 = vlaneseq
  %v86 = vshrl.u32 %v85, 7
  %v87 = vsub.s32 1, %v86
  %v88 = vrot.slane %v79, %v87
  %v93 = vunpack.c.l.b16 %v65
  %v94 = vunpack.c.l.b16 %v66
  %v95 = vpack.c.b16 %v94, %v93
  %v100 = vunpack.c.l.b16 %v67
  %v101 = vunpack.c.h.b16 %v67
  %v102 = vunpack.c.l.b16 %v68
  %v103 = vunpack.c.h.b16 %v68
  %v104 = vunpack.c.l.b16 %v69
  %v105 = vunpack.c.h.b16 %v69
  %v106 = vunpack.c.l.b16 %v70
  %v107 = vunpack.c.h.b16 %v70
  %v108 = vpack.c.b16 %v102, %v100
  %v109 = vpack.c.b16 %v103, %v101
  %v110 = vpack.c.b16 %v106, %v104
  %v111 = vpack.c.b16 %v107, %v105
  %vm116 = vcmask 261120
  %v118 = vsel %vm116, %v95, 0
  %120 = vmatprep.subr.bf16.mxu0 %v109
  %121 = vmatpush1.bf16.msra.mxu0 %v108
  %122 = vmatprep.subr.bf16.mxu0 %v111
  %123 = vmatpush1.bf16.msra.mxu0 %v110
  %124 = vmatprep.subr.bf16.mxu0 0
  %125 = vmatpush1.bf16.msra.mxu0 0
  %126 = vmatprep.subr.bf16.mxu0 0
  %127 = vmatpush1.bf16.msra.mxu0 0
  %128 = vmatprep.subr.bf16.mxu0 0
  %129 = vmatpush1.bf16.msra.mxu0 0
  %130 = vmatprep.subr.bf16.mxu0 0
  %131 = vmatpush1.bf16.msra.mxu0 0
  %132 = vmatprep.subr.bf16.mxu0 0
  %133 = vmatpush1.bf16.msra.mxu0 0
  %134 = vmatprep.subr.bf16.mxu0 0
  %135 = vmatpush1.bf16.msra.mxu0 0
  %136 = vmatprep.subr.bf16.mxu0 0
  %137 = vmatpush1.bf16.msra.mxu0 0
  %138 = vmatprep.subr.bf16.mxu0 0
  %139 = vmatpush1.bf16.msra.mxu0 0
  %140 = vmatprep.subr.bf16.mxu0 0
  %141 = vmatpush1.bf16.msra.mxu0 0
  %142 = vmatprep.subr.bf16.mxu0 0
  %143 = vmatpush1.bf16.msra.mxu0 0
  %144 = vmatprep.subr.bf16.mxu0 0
  %145 = vmatpush1.bf16.msra.mxu0 0
  %146 = vmatprep.subr.bf16.mxu0 0
  %147 = vmatpush1.bf16.msra.mxu0 0
  %148 = vmatprep.subr.bf16.mxu0 0
  %149 = vmatpush1.bf16.msra.mxu0 0
  %150 = vmatprep.subr.bf16.mxu0 0
  %151 = vmatpush1.bf16.msra.mxu0 0
  %152 = vmatprep.mubr.bf16.mxu0 0
  %153 = vmatmul.mubr.bf16.gmra.mrb[0].mxu0 %v118
  %v154 = vpop.f32.mrb[0].mxu0
  %v155 = vadd.f32 %v84, %v154
  %v156 = vpop.f32.mrb[0].mxu0
  %v157 = vadd.f32 %v88, %v156
  %v158 = vpop.f32.mrb[0].mxu0
  %v159 = vadd.f32 %v84, %v158
  %v160 = vpop.f32.mrb[0].mxu0
  %v161 = vadd.f32 %v88, %v160
  %162 = vdwg.mxu0
  %v167 = vunpack.c.l.b16 %v71
  %v168 = vunpack.c.l.b16 %v72
  %v169 = vunpack.c.l.b16 %v73
  %v170 = vunpack.c.l.b16 %v74
  %v171 = vpack.c.b16 %v168, %v167
  %v172 = vpack.c.b16 %v170, %v169
  %v176 = vsel %vm116, 0, 0
  %178 = vmatprep.subr.bf16.mxu0 0
  %179 = vmatpush1.bf16.msra.mxu0 %v171
  %180 = vmatprep.subr.bf16.mxu0 0
  %181 = vmatpush1.bf16.msra.mxu0 %v172
  %182 = vmatprep.subr.bf16.mxu0 0
  %183 = vmatpush1.bf16.msra.mxu0 0
  %184 = vmatprep.subr.bf16.mxu0 0
  %185 = vmatpush1.bf16.msra.mxu0 0
  %186 = vmatprep.subr.bf16.mxu0 0
  %187 = vmatpush1.bf16.msra.mxu0 0
  %188 = vmatprep.subr.bf16.mxu0 0
  %189 = vmatpush1.bf16.msra.mxu0 0
  %190 = vmatprep.subr.bf16.mxu0 0
  %191 = vmatpush1.bf16.msra.mxu0 0
  %192 = vmatprep.subr.bf16.mxu0 0
  %193 = vmatpush1.bf16.msra.mxu0 0
  %194 = vmatprep.subr.bf16.mxu0 0
  %195 = vmatpush1.bf16.msra.mxu0 0
  %196 = vmatprep.subr.bf16.mxu0 0
  %197 = vmatpush1.bf16.msra.mxu0 0
  %198 = vmatprep.subr.bf16.mxu0 0
  %199 = vmatpush1.bf16.msra.mxu0 0
  %200 = vmatprep.subr.bf16.mxu0 0
  %201 = vmatpush1.bf16.msra.mxu0 0
  %202 = vmatprep.subr.bf16.mxu0 0
  %203 = vmatpush1.bf16.msra.mxu0 0
  %204 = vmatprep.subr.bf16.mxu0 0
  %205 = vmatpush1.bf16.msra.mxu0 0
  %206 = vmatprep.subr.bf16.mxu0 0
  %207 = vmatpush1.bf16.msra.mxu0 0
  %208 = vmatprep.subr.bf16.mxu0 0
  %209 = vmatpush1.bf16.msra.mxu0 0
  %210 = vmatprep.mubr.bf16.mxu0 0
  %211 = vmatmul.mubr.bf16.gmra.mrb[0].mxu0 %v176
  %v212 = vpop.f32.mrb[0].mxu0
  %v213 = vadd.f32 0.0, %v212
  %v214 = vpop.f32.mrb[0].mxu0
  %v215 = vpop.f32.mrb[0].mxu0
  %v216 = vpop.f32.mrb[0].mxu0
  %217 = vdwg.mxu0
  %v218 = vadd.f32 %v155, %v213
  %v223 = vunpack.c.l.b16 %v75
  %v224 = vunpack.c.l.b16 %v76
  %v225 = vunpack.c.l.b16 %v77
  %v226 = vunpack.c.l.b16 %v78
  %v227 = vpack.c.b16 %v224, %v223
  %v228 = vpack.c.b16 %v226, %v225
  %231 = vmatprep.subr.bf16.mxu0 0
  %232 = vmatpush1.bf16.msra.mxu0 %v227
  %233 = vmatprep.subr.bf16.mxu0 0
  %234 = vmatpush1.bf16.msra.mxu0 %v228
  %235 = vmatprep.subr.bf16.mxu0 0
  %236 = vmatpush1.bf16.msra.mxu0 0
  %237 = vmatprep.subr.bf16.mxu0 0
  %238 = vmatpush1.bf16.msra.mxu0 0
  %239 = vmatprep.subr.bf16.mxu0 0
  %240 = vmatpush1.bf16.msra.mxu0 0
  %241 = vmatprep.subr.bf16.mxu0 0
  %242 = vmatpush1.bf16.msra.mxu0 0
  %243 = vmatprep.subr.bf16.mxu0 0
  %244 = vmatpush1.bf16.msra.mxu0 0
  %245 = vmatprep.subr.bf16.mxu0 0
  %246 = vmatpush1.bf16.msra.mxu0 0
  %247 = vmatprep.subr.bf16.mxu0 0
  %248 = vmatpush1.bf16.msra.mxu0 0
  %249 = vmatprep.subr.bf16.mxu0 0
  %250 = vmatpush1.bf16.msra.mxu0 0
  %251 = vmatprep.subr.bf16.mxu0 0
  %252 = vmatpush1.bf16.msra.mxu0 0
  %253 = vmatprep.subr.bf16.mxu0 0
  %254 = vmatpush1.bf16.msra.mxu0 0
  %255 = vmatprep.subr.bf16.mxu0 0
  %256 = vmatpush1.bf16.msra.mxu0 0
  %257 = vmatprep.subr.bf16.mxu0 0
  %258 = vmatpush1.bf16.msra.mxu0 0
  %259 = vmatprep.subr.bf16.mxu0 0
  %260 = vmatpush1.bf16.msra.mxu0 0
  %261 = vmatprep.subr.bf16.mxu0 0
  %262 = vmatpush1.bf16.msra.mxu0 0
  %263 = vmatprep.mubr.bf16.mxu0 0
  %264 = vmatmul.mubr.bf16.gmra.mrb[0].mxu0 %v176
  %v265 = vpop.f32.mrb[0].mxu0
  %v266 = vadd.f32 0.0, %v265
  %v267 = vpop.f32.mrb[0].mxu0
  %v268 = vpop.f32.mrb[0].mxu0
  %v269 = vpop.f32.mrb[0].mxu0
  %270 = vdwg.mxu0
  %v272 = vrot.slane %v266, 2
  %v274 = vadd.f32 %v161, %v272
  %v275 = vxor.u32 %v218, 2147483648
  %v276 = vmul.f32 %v275, 1.442695
  %v277 = vpow.pop %v276
  %v278 = vadd.f32 %v277, 1.0
  %v279 = vrcp.pop %v278
  %v280 = vmul.f32 1.0, %v279
  %v281 = vtanh.pop %v218
  %v282 = vxor.u32 %v274, 2147483648
  %v283 = vmul.f32 %v282, 1.442695
  %v284 = vpow.pop %v283
  %v285 = vadd.f32 %v284, 1.0
  %v286 = vrcp.pop %v285
  %v287 = vmul.f32 1.0, %v286
  %v288 = vtanh.pop %v274
  %v289 = vmul.f32 %v280, 0.0
  %291 = vrot.lane.b32.xlu0 %v281, 64
  %v292 = vpop.permute.xlu0 %291
  %v294 = vmul.f32 %v280, %v292
  %296 = vrot.lane.b32.xlu0 %v294, 32
  %v297 = vpop.permute.xlu0 %296
  %v299 = vadd.f32 %v289, %v297
  %v300 = vtanh.pop %v299
  %302 = vrot.lane.b32.xlu0 %v300, 64
  %v303 = vpop.permute.xlu0 %302
  %v305 = vmul.f32 %v280, %v303
  %v306 = vmul.f32 %v287, 0.0
  %308 = vrot.lane.b32.xlu0 %v288, 64
  %v309 = vpop.permute.xlu0 %308
  %v311 = vmul.f32 %v287, %v309
  %313 = vrot.lane.b32.xlu0 %v311, 32
  %v314 = vpop.permute.xlu0 %313
  %v316 = vadd.f32 %v306, %v314
  %v317 = vtanh.pop %v316
  %319 = vrot.lane.b32.xlu0 %v317, 64
  %v320 = vpop.permute.xlu0 %319
  %v322 = vmul.f32 %v287, %v320
  %v323 = vpack.c.bf16 %v305, %v305
  %325 = vrot.lane.b32.xlu0 %v323, 32
  %v326 = vpop.permute.xlu0 %325
  %v328 = vsel %vm116, %v326, 0
  %330 = vmatprep.subr.bf16.mxu0 0
  %331 = vmatpush1.bf16.msra.mxu0 %v171
  %332 = vmatprep.subr.bf16.mxu0 0
  %333 = vmatpush1.bf16.msra.mxu0 %v172
  %334 = vmatprep.subr.bf16.mxu0 0
  %335 = vmatpush1.bf16.msra.mxu0 0
  %336 = vmatprep.subr.bf16.mxu0 0
  %337 = vmatpush1.bf16.msra.mxu0 0
  %338 = vmatprep.subr.bf16.mxu0 0
  %339 = vmatpush1.bf16.msra.mxu0 0
  %340 = vmatprep.subr.bf16.mxu0 0
  %341 = vmatpush1.bf16.msra.mxu0 0
  %342 = vmatprep.subr.bf16.mxu0 0
  %343 = vmatpush1.bf16.msra.mxu0 0
  %344 = vmatprep.subr.bf16.mxu0 0
  %345 = vmatpush1.bf16.msra.mxu0 0
  %346 = vmatprep.subr.bf16.mxu0 0
  %347 = vmatpush1.bf16.msra.mxu0 0
  %348 = vmatprep.subr.bf16.mxu0 0
  %349 = vmatpush1.bf16.msra.mxu0 0
  %350 = vmatprep.subr.bf16.mxu0 0
  %351 = vmatpush1.bf16.msra.mxu0 0
  %352 = vmatprep.subr.bf16.mxu0 0
  %353 = vmatpush1.bf16.msra.mxu0 0
  %354 = vmatprep.subr.bf16.mxu0 0
  %355 = vmatpush1.bf16.msra.mxu0 0
  %356 = vmatprep.subr.bf16.mxu0 0
  %357 = vmatpush1.bf16.msra.mxu0 0
  %358 = vmatprep.subr.bf16.mxu0 0
  %359 = vmatpush1.bf16.msra.mxu0 0
  %360 = vmatprep.subr.bf16.mxu0 0
  %361 = vmatpush1.bf16.msra.mxu0 0
  %362 = vmatprep.mubr.bf16.mxu0 0
  %363 = vmatmul.mubr.bf16.gmra.mrb[0].mxu0 %v328
  %v364 = vpop.f32.mrb[0].mxu0
  %v365 = vadd.f32 0.0, %v364
  %v366 = vpop.f32.mrb[0].mxu0
  %v367 = vpop.f32.mrb[0].mxu0
  %v368 = vpop.f32.mrb[0].mxu0
  %369 = vdwg.mxu0
  %v371 = vrot.slane %v365, 6
  %v373 = vadd.f32 %v155, %v371
  %v374 = vpack.c.bf16 %v322, %v322
  %v376 = vrot.slane %v374, 3
  %377 = vrot.lane.b32.xlu0 %v376, 32
  %v378 = vpop.permute.xlu0 %377
  %v380 = vsel %vm116, %v378, 0
  %382 = vmatprep.subr.bf16.mxu0 0
  %383 = vmatpush1.bf16.msra.mxu0 %v227
  %384 = vmatprep.subr.bf16.mxu0 0
  %385 = vmatpush1.bf16.msra.mxu0 %v228
  %386 = vmatprep.subr.bf16.mxu0 0
  %387 = vmatpush1.bf16.msra.mxu0 0
  %388 = vmatprep.subr.bf16.mxu0 0
  %389 = vmatpush1.bf16.msra.mxu0 0
  %390 = vmatprep.subr.bf16.mxu0 0
  %391 = vmatpush1.bf16.msra.mxu0 0
  %392 = vmatprep.subr.bf16.mxu0 0
  %393 = vmatpush1.bf16.msra.mxu0 0
  %394 = vmatprep.subr.bf16.mxu0 0
  %395 = vmatpush1.bf16.msra.mxu0 0
  %396 = vmatprep.subr.bf16.mxu0 0
  %397 = vmatpush1.bf16.msra.mxu0 0
  %398 = vmatprep.subr.bf16.mxu0 0
  %399 = vmatpush1.bf16.msra.mxu0 0
  %400 = vmatprep.subr.bf16.mxu0 0
  %401 = vmatpush1.bf16.msra.mxu0 0
  %402 = vmatprep.subr.bf16.mxu0 0
  %403 = vmatpush1.bf16.msra.mxu0 0
  %404 = vmatprep.subr.bf16.mxu0 0
  %405 = vmatpush1.bf16.msra.mxu0 0
  %406 = vmatprep.subr.bf16.mxu0 0
  %407 = vmatpush1.bf16.msra.mxu0 0
  %408 = vmatprep.subr.bf16.mxu0 0
  %409 = vmatpush1.bf16.msra.mxu0 0
  %410 = vmatprep.subr.bf16.mxu0 0
  %411 = vmatpush1.bf16.msra.mxu0 0
  %412 = vmatprep.subr.bf16.mxu0 0
  %413 = vmatpush1.bf16.msra.mxu0 0
  %414 = vmatprep.mubr.bf16.mxu0 0
  %415 = vmatmul.mubr.bf16.gmra.mrb[0].mxu0 %v380
  %v416 = vpop.f32.mrb[0].mxu0
  %v417 = vadd.f32 0.0, %v416
  %v418 = vpop.f32.mrb[0].mxu0
  %v419 = vpop.f32.mrb[0].mxu0
  %v420 = vpop.f32.mrb[0].mxu0
  %421 = vdwg.mxu0
  %v423 = vrot.slane %v417, 4
  %v425 = vadd.f32 %v161, %v423
  %v426 = vxor.u32 %v373, 2147483648
  %v427 = vmul.f32 %v426, 1.442695
  %v428 = vpow.pop %v427
  %v429 = vadd.f32 %v428, 1.0
  %v430 = vrcp.pop %v429
  %v431 = vmul.f32 1.0, %v430
  %v432 = vtanh.pop %v373
  %v433 = vxor.u32 %v425, 2147483648
  %v434 = vmul.f32 %v433, 1.442695
  %v435 = vpow.pop %v434
  %v436 = vadd.f32 %v435, 1.0
  %v437 = vrcp.pop %v436
  %v438 = vmul.f32 1.0, %v437
  %v439 = vtanh.pop %v425
  %v441 = vrot.slane %v299, 6
  %v443 = vmul.f32 %v431, %v441
  %445 = vrot.lane.b32.xlu0 %v432, 64
  %v446 = vpop.permute.xlu0 %445
  %v448 = vmul.f32 %v431, %v446
  %450 = vrot.lane.b32.xlu0 %v448, 32
  %v451 = vpop.permute.xlu0 %450
  %v453 = vadd.f32 %v443, %v451
  %v454 = vtanh.pop %v453
  %456 = vrot.lane.b32.xlu0 %v454, 64
  %v457 = vpop.permute.xlu0 %456
  %v459 = vmul.f32 %v431, %v457
  %v461 = vrot.slane %v316, 2
  %v463 = vmul.f32 %v438, %v461
  %465 = vrot.lane.b32.xlu0 %v439, 64
  %v466 = vpop.permute.xlu0 %465
  %v468 = vmul.f32 %v438, %v466
  %470 = vrot.lane.b32.xlu0 %v468, 32
  %v471 = vpop.permute.xlu0 %470
  %v473 = vadd.f32 %v463, %v471
  %v474 = vtanh.pop %v473
  %476 = vrot.lane.b32.xlu0 %v474, 64
  %v477 = vpop.permute.xlu0 %476
  %v479 = vmul.f32 %v438, %v477
  %v480 = vpack.c.bf16 %v459, %v459
  %v482 = vrot.slane %v480, 1
  %483 = vrot.lane.b32.xlu0 %v482, 32
  %v484 = vpop.permute.xlu0 %483
  %v486 = vsel %vm116, %v484, 0
  %488 = vmatprep.subr.bf16.mxu0 0
  %489 = vmatpush1.bf16.msra.mxu0 %v171
  %490 = vmatprep.subr.bf16.mxu0 0
  %491 = vmatpush1.bf16.msra.mxu0 %v172
  %492 = vmatprep.subr.bf16.mxu0 0
  %493 = vmatpush1.bf16.msra.mxu0 0
  %494 = vmatprep.subr.bf16.mxu0 0
  %495 = vmatpush1.bf16.msra.mxu0 0
  %496 = vmatprep.subr.bf16.mxu0 0
  %497 = vmatpush1.bf16.msra.mxu0 0
  %498 = vmatprep.subr.bf16.mxu0 0
  %499 = vmatpush1.bf16.msra.mxu0 0
  %500 = vmatprep.subr.bf16.mxu0 0
  %501 = vmatpush1.bf16.msra.mxu0 0
  %502 = vmatprep.subr.bf16.mxu0 0
  %503 = vmatpush1.bf16.msra.mxu0 0
  %504 = vmatprep.subr.bf16.mxu0 0
  %505 = vmatpush1.bf16.msra.mxu0 0
  %506 = vmatprep.subr.bf16.mxu0 0
  %507 = vmatpush1.bf16.msra.mxu0 0
  %508 = vmatprep.subr.bf16.mxu0 0
  %509 = vmatpush1.bf16.msra.mxu0 0
  %510 = vmatprep.subr.bf16.mxu0 0
  %511 = vmatpush1.bf16.msra.mxu0 0
  %512 = vmatprep.subr.bf16.mxu0 0
  %513 = vmatpush1.bf16.msra.mxu0 0
  %514 = vmatprep.subr.bf16.mxu0 0
  %515 = vmatpush1.bf16.msra.mxu0 0
  %516 = vmatprep.subr.bf16.mxu0 0
  %517 = vmatpush1.bf16.msra.mxu0 0
  %518 = vmatprep.subr.bf16.mxu0 0
  %519 = vmatpush1.bf16.msra.mxu0 0
  %520 = vmatprep.mubr.bf16.mxu0 0
  %521 = vmatmul.mubr.bf16.gmra.mrb[0].mxu0 %v486
  %v522 = vpop.f32.mrb[0].mxu0
  %v523 = vadd.f32 0.0, %v522
  %v524 = vpop.f32.mrb[0].mxu0
  %v525 = vpop.f32.mrb[0].mxu0
  %v526 = vpop.f32.mrb[0].mxu0
  %527 = vdwg.mxu0
  %v529 = vrot.slane %v523, 4
  %v531 = vadd.f32 %v155, %v529
  %v532 = vpack.c.bf16 %v479, %v479
  %v534 = vrot.slane %v532, 2
  %535 = vrot.lane.b32.xlu0 %v534, 32
  %v536 = vpop.permute.xlu0 %535
  %v538 = vsel %vm116, %v536, 0
  %540 = vmatprep.subr.bf16.mxu0 0
  %541 = vmatpush1.bf16.msra.mxu0 %v227
  %542 = vmatprep.subr.bf16.mxu0 0
  %543 = vmatpush1.bf16.msra.mxu0 %v228
  %544 = vmatprep.subr.bf16.mxu0 0
  %545 = vmatpush1.bf16.msra.mxu0 0
  %546 = vmatprep.subr.bf16.mxu0 0
  %547 = vmatpush1.bf16.msra.mxu0 0
  %548 = vmatprep.subr.bf16.mxu0 0
  %549 = vmatpush1.bf16.msra.mxu0 0
  %550 = vmatprep.subr.bf16.mxu0 0
  %551 = vmatpush1.bf16.msra.mxu0 0
  %552 = vmatprep.subr.bf16.mxu0 0
  %553 = vmatpush1.bf16.msra.mxu0 0
  %554 = vmatprep.subr.bf16.mxu0 0
  %555 = vmatpush1.bf16.msra.mxu0 0
  %556 = vmatprep.subr.bf16.mxu0 0
  %557 = vmatpush1.bf16.msra.mxu0 0
  %558 = vmatprep.subr.bf16.mxu0 0
  %559 = vmatpush1.bf16.msra.mxu0 0
  %560 = vmatprep.subr.bf16.mxu0 0
  %561 = vmatpush1.bf16.msra.mxu0 0
  %562 = vmatprep.subr.bf16.mxu0 0
  %563 = vmatpush1.bf16.msra.mxu0 0
  %564 = vmatprep.subr.bf16.mxu0 0
  %565 = vmatpush1.bf16.msra.mxu0 0
  %566 = vmatprep.subr.bf16.mxu0 0
  %567 = vmatpush1.bf16.msra.mxu0 0
  %568 = vmatprep.subr.bf16.mxu0 0
  %569 = vmatpush1.bf16.msra.mxu0 0
  %570 = vmatprep.subr.bf16.mxu0 0
  %571 = vmatpush1.bf16.msra.mxu0 0
  %572 = vmatprep.mubr.bf16.mxu0 0
  %573 = vmatmul.mubr.bf16.gmra.mrb[0].mxu0 %v538
  %v574 = vpop.f32.mrb[0].mxu0
  %v575 = vadd.f32 0.0, %v574
  %v576 = vpop.f32.mrb[0].mxu0
  %v577 = vpop.f32.mrb[0].mxu0
  %v578 = vpop.f32.mrb[0].mxu0
  %579 = vdwg.mxu0
  %v581 = vrot.slane %v575, 6
  %v583 = vadd.f32 %v161, %v581
  %v584 = vxor.u32 %v531, 2147483648
  %v585 = vmul.f32 %v584, 1.442695
  %v586 = vpow.pop %v585
  %v587 = vadd.f32 %v586, 1.0
  %v588 = vrcp.pop %v587
  %v589 = vmul.f32 1.0, %v588
  %v590 = vtanh.pop %v531
  %v591 = vxor.u32 %v583, 2147483648
  %v592 = vmul.f32 %v591, 1.442695
  %v593 = vpow.pop %v592
  %v594 = vadd.f32 %v593, 1.0
  %v595 = vrcp.pop %v594
  %v596 = vmul.f32 1.0, %v595
  %v597 = vtanh.pop %v583
  %v599 = vrot.slane %v453, 6
  %v601 = vmul.f32 %v589, %v599
  %603 = vrot.lane.b32.xlu0 %v590, 64
  %v604 = vpop.permute.xlu0 %603
  %v606 = vmul.f32 %v589, %v604
  %608 = vrot.lane.b32.xlu0 %v606, 32
  %v609 = vpop.permute.xlu0 %608
  %v611 = vadd.f32 %v601, %v609
  %v612 = vtanh.pop %v611
  %614 = vrot.lane.b32.xlu0 %v612, 64
  %v615 = vpop.permute.xlu0 %614
  %v617 = vmul.f32 %v589, %v615
  %v619 = vrot.slane %v473, 2
  %v621 = vmul.f32 %v596, %v619
  %623 = vrot.lane.b32.xlu0 %v597, 64
  %v624 = vpop.permute.xlu0 %623
  %v626 = vmul.f32 %v596, %v624
  %628 = vrot.lane.b32.xlu0 %v626, 32
  %v629 = vpop.permute.xlu0 %628
  %v631 = vadd.f32 %v621, %v629
  %v632 = vtanh.pop %v631
  %634 = vrot.lane.b32.xlu0 %v632, 64
  %v635 = vpop.permute.xlu0 %634
  %v637 = vmul.f32 %v596, %v635
  %v638 = vpack.c.bf16 %v617, %v617
  %v640 = vrot.slane %v638, 2
  %641 = vrot.lane.b32.xlu0 %v640, 32
  %v642 = vpop.permute.xlu0 %641
  %v644 = vsel %vm116, %v642, 0
  %646 = vmatprep.subr.bf16.mxu0 0
  %647 = vmatpush1.bf16.msra.mxu0 %v171
  %648 = vmatprep.subr.bf16.mxu0 0
  %649 = vmatpush1.bf16.msra.mxu0 %v172
  %650 = vmatprep.subr.bf16.mxu0 0
  %651 = vmatpush1.bf16.msra.mxu0 0
  %652 = vmatprep.subr.bf16.mxu0 0
  %653 = vmatpush1.bf16.msra.mxu0 0
  %654 = vmatprep.subr.bf16.mxu0 0
  %655 = vmatpush1.bf16.msra.mxu0 0
  %656 = vmatprep.subr.bf16.mxu0 0
  %657 = vmatpush1.bf16.msra.mxu0 0
  %658 = vmatprep.subr.bf16.mxu0 0
  %659 = vmatpush1.bf16.msra.mxu0 0
  %660 = vmatprep.subr.bf16.mxu0 0
  %661 = vmatpush1.bf16.msra.mxu0 0
  %662 = vmatprep.subr.bf16.mxu0 0
  %663 = vmatpush1.bf16.msra.mxu0 0
  %664 = vmatprep.subr.bf16.mxu0 0
  %665 = vmatpush1.bf16.msra.mxu0 0
  %666 = vmatprep.subr.bf16.mxu0 0
  %667 = vmatpush1.bf16.msra.mxu0 0
  %668 = vmatprep.subr.bf16.mxu0 0
  %669 = vmatpush1.bf16.msra.mxu0 0
  %670 = vmatprep.subr.bf16.mxu0 0
  %671 = vmatpush1.bf16.msra.mxu0 0
  %672 = vmatprep.subr.bf16.mxu0 0
  %673 = vmatpush1.bf16.msra.mxu0 0
  %674 = vmatprep.subr.bf16.mxu0 0
  %675 = vmatpush1.bf16.msra.mxu0 0
  %676 = vmatprep.subr.bf16.mxu0 0
  %677 = vmatpush1.bf16.msra.mxu0 0
  %678 = vmatprep.mubr.bf16.mxu0 0
  %679 = vmatmul.mubr.bf16.gmra.mrb[0].mxu0 %v644
  %v680 = vpop.f32.mrb[0].mxu0
  %v681 = vadd.f32 0.0, %v680
  %v682 = vpop.f32.mrb[0].mxu0
  %v683 = vpop.f32.mrb[0].mxu0
  %v684 = vpop.f32.mrb[0].mxu0
  %685 = vdwg.mxu0
  %v687 = vrot.slane %v681, 2
  %v689 = vadd.f32 %v155, %v687
  %v690 = vpack.c.bf16 %v637, %v637
  %v692 = vrot.slane %v690, 1
  %693 = vrot.lane.b32.xlu0 %v692, 32
  %v694 = vpop.permute.xlu0 %693
  %v696 = vsel %vm116, %v694, 0
  %698 = vmatprep.subr.bf16.mxu0 0
  %699 = vmatpush1.bf16.msra.mxu0 %v227
  %700 = vmatprep.subr.bf16.mxu0 0
  %701 = vmatpush1.bf16.msra.mxu0 %v228
  %702 = vmatprep.subr.bf16.mxu0 0
  %703 = vmatpush1.bf16.msra.mxu0 0
  %704 = vmatprep.subr.bf16.mxu0 0
  %705 = vmatpush1.bf16.msra.mxu0 0
  %706 = vmatprep.subr.bf16.mxu0 0
  %707 = vmatpush1.bf16.msra.mxu0 0
  %708 = vmatprep.subr.bf16.mxu0 0
  %709 = vmatpush1.bf16.msra.mxu0 0
  %710 = vmatprep.subr.bf16.mxu0 0
  %711 = vmatpush1.bf16.msra.mxu0 0
  %712 = vmatprep.subr.bf16.mxu0 0
  %713 = vmatpush1.bf16.msra.mxu0 0
  %714 = vmatprep.subr.bf16.mxu0 0
  %715 = vmatpush1.bf16.msra.mxu0 0
  %716 = vmatprep.subr.bf16.mxu0 0
  %717 = vmatpush1.bf16.msra.mxu0 0
  %718 = vmatprep.subr.bf16.mxu0 0
  %719 = vmatpush1.bf16.msra.mxu0 0
  %720 = vmatprep.subr.bf16.mxu0 0
  %721 = vmatpush1.bf16.msra.mxu0 0
  %722 = vmatprep.subr.bf16.mxu0 0
  %723 = vmatpush1.bf16.msra.mxu0 0
  %724 = vmatprep.subr.bf16.mxu0 0
  %725 = vmatpush1.bf16.msra.mxu0 0
  %726 = vmatprep.subr.bf16.mxu0 0
  %727 = vmatpush1.bf16.msra.mxu0 0
  %728 = vmatprep.subr.bf16.mxu0 0
  %729 = vmatpush1.bf16.msra.mxu0 0
  %730 = vmatprep.mubr.bf16.mxu0 0
  %731 = vmatmul.mubr.bf16.gmra.mrb[0].mxu0 %v696
  %v732 = vpop.f32.mrb[0].mxu0
  %v733 = vadd.f32 0.0, %v732
  %v734 = vpop.f32.mrb[0].mxu0
  %v735 = vpop.f32.mrb[0].mxu0
  %v736 = vpop.f32.mrb[0].mxu0
  %737 = vdwg.mxu0
  %v738 = vadd.f32 %v161, %v733
  %v739 = vxor.u32 %v689, 2147483648
  %v740 = vmul.f32 %v739, 1.442695
  %v741 = vpow.pop %v740
  %v742 = vadd.f32 %v741, 1.0
  %v743 = vrcp.pop %v742
  %v744 = vmul.f32 1.0, %v743
  %v745 = vtanh.pop %v689
  %v746 = vxor.u32 %v738, 2147483648
  %v747 = vmul.f32 %v746, 1.442695
  %v748 = vpow.pop %v747
  %v749 = vadd.f32 %v748, 1.0
  %v750 = vrcp.pop %v749
  %v751 = vmul.f32 1.0, %v750
  %v752 = vtanh.pop %v738
  %v754 = vrot.slane %v611, 6
  %v756 = vmul.f32 %v744, %v754
  %758 = vrot.lane.b32.xlu0 %v745, 64
  %v759 = vpop.permute.xlu0 %758
  %v761 = vmul.f32 %v744, %v759
  %763 = vrot.lane.b32.xlu0 %v761, 32
  %v764 = vpop.permute.xlu0 %763
  %v766 = vadd.f32 %v756, %v764
  %v767 = vtanh.pop %v766
  %769 = vrot.lane.b32.xlu0 %v767, 64
  %v770 = vpop.permute.xlu0 %769
  %v772 = vmul.f32 %v744, %v770
  %v774 = vrot.slane %v631, 2
  %v776 = vmul.f32 %v751, %v774
  %778 = vrot.lane.b32.xlu0 %v752, 64
  %v779 = vpop.permute.xlu0 %778
  %v781 = vmul.f32 %v751, %v779
  %783 = vrot.lane.b32.xlu0 %v781, 32
  %v784 = vpop.permute.xlu0 %783
  %v786 = vadd.f32 %v776, %v784
  %v787 = vtanh.pop %v786
  %789 = vrot.lane.b32.xlu0 %v787, 64
  %v790 = vpop.permute.xlu0 %789
  %v792 = vmul.f32 %v751, %v790
  %v793 = vpack.c.bf16 %v772, %v772
  %v795 = vrot.slane %v793, 3
  %796 = vrot.lane.b32.xlu0 %v795, 32
  %v797 = vpop.permute.xlu0 %796
  %v799 = vsel %vm116, %v797, 0
  %801 = vmatprep.subr.bf16.mxu0 0
  %802 = vmatpush1.bf16.msra.mxu0 %v171
  %803 = vmatprep.subr.bf16.mxu0 0
  %804 = vmatpush1.bf16.msra.mxu0 %v172
  %805 = vmatprep.subr.bf16.mxu0 0
  %806 = vmatpush1.bf16.msra.mxu0 0
  %807 = vmatprep.subr.bf16.mxu0 0
  %808 = vmatpush1.bf16.msra.mxu0 0
  %809 = vmatprep.subr.bf16.mxu0 0
  %810 = vmatpush1.bf16.msra.mxu0 0
  %811 = vmatprep.subr.bf16.mxu0 0
  %812 = vmatpush1.bf16.msra.mxu0 0
  %813 = vmatprep.subr.bf16.mxu0 0
  %814 = vmatpush1.bf16.msra.mxu0 0
  %815 = vmatprep.subr.bf16.mxu0 0
  %816 = vmatpush1.bf16.msra.mxu0 0
  %817 = vmatprep.subr.bf16.mxu0 0
  %818 = vmatpush1.bf16.msra.mxu0 0
  %819 = vmatprep.subr.bf16.mxu0 0
  %820 = vmatpush1.bf16.msra.mxu0 0
  %821 = vmatprep.subr.bf16.mxu0 0
  %822 = vmatpush1.bf16.msra.mxu0 0
  %823 = vmatprep.subr.bf16.mxu0 0
  %824 = vmatpush1.bf16.msra.mxu0 0
  %825 = vmatprep.subr.bf16.mxu0 0
  %826 = vmatpush1.bf16.msra.mxu0 0
  %827 = vmatprep.subr.bf16.mxu0 0
  %828 = vmatpush1.bf16.msra.mxu0 0
  %829 = vmatprep.subr.bf16.mxu0 0
  %830 = vmatpush1.bf16.msra.mxu0 0
  %831 = vmatprep.subr.bf16.mxu0 0
  %832 = vmatpush1.bf16.msra.mxu0 0
  %833 = vmatprep.mubr.bf16.mxu0 0
  %834 = vmatmul.mubr.bf16.gmra.mrb[0].mxu0 %v799
  %v835 = vpop.f32.mrb[0].mxu0
  %v836 = vadd.f32 0.0, %v835
  %v837 = vpop.f32.mrb[0].mxu0
  %v838 = vpop.f32.mrb[0].mxu0
  %v839 = vpop.f32.mrb[0].mxu0
  %840 = vdwg.mxu0
  %v841 = vadd.f32 %v159, %v836
  %v842 = vpack.c.bf16 %v792, %v792
  %844 = vrot.lane.b32.xlu0 %v842, 32
  %v845 = vpop.permute.xlu0 %844
  %v847 = vsel %vm116, %v845, 0
  %849 = vmatprep.subr.bf16.mxu0 0
  %850 = vmatpush1.bf16.msra.mxu0 %v227
  %851 = vmatprep.subr.bf16.mxu0 0
  %852 = vmatpush1.bf16.msra.mxu0 %v228
  %853 = vmatprep.subr.bf16.mxu0 0
  %854 = vmatpush1.bf16.msra.mxu0 0
  %855 = vmatprep.subr.bf16.mxu0 0
  %856 = vmatpush1.bf16.msra.mxu0 0
  %857 = vmatprep.subr.bf16.mxu0 0
  %858 = vmatpush1.bf16.msra.mxu0 0
  %859 = vmatprep.subr.bf16.mxu0 0
  %860 = vmatpush1.bf16.msra.mxu0 0
  %861 = vmatprep.subr.bf16.mxu0 0
  %862 = vmatpush1.bf16.msra.mxu0 0
  %863 = vmatprep.subr.bf16.mxu0 0
  %864 = vmatpush1.bf16.msra.mxu0 0
  %865 = vmatprep.subr.bf16.mxu0 0
  %866 = vmatpush1.bf16.msra.mxu0 0
  %867 = vmatprep.subr.bf16.mxu0 0
  %868 = vmatpush1.bf16.msra.mxu0 0
  %869 = vmatprep.subr.bf16.mxu0 0
  %870 = vmatpush1.bf16.msra.mxu0 0
  %871 = vmatprep.subr.bf16.mxu0 0
  %872 = vmatpush1.bf16.msra.mxu0 0
  %873 = vmatprep.subr.bf16.mxu0 0
  %874 = vmatpush1.bf16.msra.mxu0 0
  %875 = vmatprep.subr.bf16.mxu0 0
  %876 = vmatpush1.bf16.msra.mxu0 0
  %877 = vmatprep.subr.bf16.mxu0 0
  %878 = vmatpush1.bf16.msra.mxu0 0
  %879 = vmatprep.subr.bf16.mxu0 0
  %880 = vmatpush1.bf16.msra.mxu0 0
  %881 = vmatprep.mubr.bf16.mxu0 0
  %882 = vmatmul.mubr.bf16.gmra.mrb[0].mxu0 %v847
  %v883 = vpop.f32.mrb[0].mxu0
  %v884 = vadd.f32 0.0, %v883
  %v885 = vpop.f32.mrb[0].mxu0
  %v886 = vpop.f32.mrb[0].mxu0
  %v887 = vpop.f32.mrb[0].mxu0
  %888 = vdwg.mxu0
  %v890 = vrot.slane %v884, 2
  %v892 = vadd.f32 %v157, %v890
  %v893 = vxor.u32 %v841, 2147483648
  %v894 = vmul.f32 %v893, 1.442695
  %v895 = vpow.pop %v894
  %v896 = vadd.f32 %v895, 1.0
  %v897 = vrcp.pop %v896
  %v898 = vmul.f32 1.0, %v897
  %v899 = vtanh.pop %v841
  %v900 = vxor.u32 %v892, 2147483648
  %v901 = vmul.f32 %v900, 1.442695
  %v902 = vpow.pop %v901
  %v903 = vadd.f32 %v902, 1.0
  %v904 = vrcp.pop %v903
  %v905 = vmul.f32 1.0, %v904
  %v906 = vtanh.pop %v892
  %v908 = vrot.slane %v766, 6
  %v910 = vmul.f32 %v898, %v908
  %912 = vrot.lane.b32.xlu0 %v899, 64
  %v913 = vpop.permute.xlu0 %912
  %v915 = vmul.f32 %v898, %v913
  %917 = vrot.lane.b32.xlu0 %v915, 32
  %v918 = vpop.permute.xlu0 %917
  %v920 = vadd.f32 %v910, %v918
  %v921 = vtanh.pop %v920
  %923 = vrot.lane.b32.xlu0 %v921, 64
  %v924 = vpop.permute.xlu0 %923
  %v926 = vmul.f32 %v898, %v924
  %v928 = vrot.slane %v786, 2
  %v930 = vmul.f32 %v905, %v928
  %932 = vrot.lane.b32.xlu0 %v906, 64
  %v933 = vpop.permute.xlu0 %932
  %v935 = vmul.f32 %v905, %v933
  %937 = vrot.lane.b32.xlu0 %v935, 32
  %v938 = vpop.permute.xlu0 %937
  %v940 = vadd.f32 %v930, %v938
  %v941 = vtanh.pop %v940
  %943 = vrot.lane.b32.xlu0 %v941, 64
  %v944 = vpop.permute.xlu0 %943
  %v946 = vmul.f32 %v905, %v944
  %v947 = vpack.c.bf16 %v926, %v926
  %949 = vrot.lane.b32.xlu0 %v947, 32
  %v950 = vpop.permute.xlu0 %949
  %v952 = vsel %vm116, %v950, 0
  %954 = vmatprep.subr.bf16.mxu0 0
  %955 = vmatpush1.bf16.msra.mxu0 %v171
  %956 = vmatprep.subr.bf16.mxu0 0
  %957 = vmatpush1.bf16.msra.mxu0 %v172
  %958 = vmatprep.subr.bf16.mxu0 0
  %959 = vmatpush1.bf16.msra.mxu0 0
  %960 = vmatprep.subr.bf16.mxu0 0
  %961 = vmatpush1.bf16.msra.mxu0 0
  %962 = vmatprep.subr.bf16.mxu0 0
  %963 = vmatpush1.bf16.msra.mxu0 0
  %964 = vmatprep.subr.bf16.mxu0 0
  %965 = vmatpush1.bf16.msra.mxu0 0
  %966 = vmatprep.subr.bf16.mxu0 0
  %967 = vmatpush1.bf16.msra.mxu0 0
  %968 = vmatprep.subr.bf16.mxu0 0
  %969 = vmatpush1.bf16.msra.mxu0 0
  %970 = vmatprep.subr.bf16.mxu0 0
  %971 = vmatpush1.bf16.msra.mxu0 0
  %972 = vmatprep.subr.bf16.mxu0 0
  %973 = vmatpush1.bf16.msra.mxu0 0
  %974 = vmatprep.subr.bf16.mxu0 0
  %975 = vmatpush1.bf16.msra.mxu0 0
  %976 = vmatprep.subr.bf16.mxu0 0
  %977 = vmatpush1.bf16.msra.mxu0 0
  %978 = vmatprep.subr.bf16.mxu0 0
  %979 = vmatpush1.bf16.msra.mxu0 0
  %980 = vmatprep.subr.bf16.mxu0 0
  %981 = vmatpush1.bf16.msra.mxu0 0
  %982 = vmatprep.subr.bf16.mxu0 0
  %983 = vmatpush1.bf16.msra.mxu0 0
  %984 = vmatprep.subr.bf16.mxu0 0
  %985 = vmatpush1.bf16.msra.mxu0 0
  %986 = vmatprep.mubr.bf16.mxu0 0
  %987 = vmatmul.mubr.bf16.gmra.mrb[0].mxu0 %v952
  %v988 = vpop.f32.mrb[0].mxu0
  %v989 = vadd.f32 0.0, %v988
  %v990 = vpop.f32.mrb[0].mxu0
  %v991 = vpop.f32.mrb[0].mxu0
  %v992 = vpop.f32.mrb[0].mxu0
  %993 = vdwg.mxu0
  %v995 = vrot.slane %v989, 6
  %v997 = vadd.f32 %v159, %v995
  %v998 = vpack.c.bf16 %v946, %v946
  %v1000 = vrot.slane %v998, 3
  %1001 = vrot.lane.b32.xlu0 %v1000, 32
  %v1002 = vpop.permute.xlu0 %1001
  %v1004 = vsel %vm116, %v1002, 0
  %1006 = vmatprep.subr.bf16.mxu0 0
  %1007 = vmatpush1.bf16.msra.mxu0 %v227
  %1008 = vmatprep.subr.bf16.mxu0 0
  %1009 = vmatpush1.bf16.msra.mxu0 %v228
  %1010 = vmatprep.subr.bf16.mxu0 0
  %1011 = vmatpush1.bf16.msra.mxu0 0
  %1012 = vmatprep.subr.bf16.mxu0 0
  %1013 = vmatpush1.bf16.msra.mxu0 0
  %1014 = vmatprep.subr.bf16.mxu0 0
  %1015 = vmatpush1.bf16.msra.mxu0 0
  %1016 = vmatprep.subr.bf16.mxu0 0
  %1017 = vmatpush1.bf16.msra.mxu0 0
  %1018 = vmatprep.subr.bf16.mxu0 0
  %1019 = vmatpush1.bf16.msra.mxu0 0
  %1020 = vmatprep.subr.bf16.mxu0 0
  %1021 = vmatpush1.bf16.msra.mxu0 0
  %1022 = vmatprep.subr.bf16.mxu0 0
  %1023 = vmatpush1.bf16.msra.mxu0 0
  %1024 = vmatprep.subr.bf16.mxu0 0
  %1025 = vmatpush1.bf16.msra.mxu0 0
  %1026 = vmatprep.subr.bf16.mxu0 0
  %1027 = vmatpush1.bf16.msra.mxu0 0
  %1028 = vmatprep.subr.bf16.mxu0 0
  %1029 = vmatpush1.bf16.msra.mxu0 0
  %1030 = vmatprep.subr.bf16.mxu0 0
  %1031 = vmatpush1.bf16.msra.mxu0 0
  %1032 = vmatprep.subr.bf16.mxu0 0
  %1033 = vmatpush1.bf16.msra.mxu0 0
  %1034 = vmatprep.subr.bf16.mxu0 0
  %1035 = vmatpush1.bf16.msra.mxu0 0
  %1036 = vmatprep.subr.bf16.mxu0 0
  %1037 = vmatpush1.bf16.msra.mxu0 0
  %1038 = vmatprep.mubr.bf16.mxu0 0
  %1039 = vmatmul.mubr.bf16.gmra.mrb[0].mxu0 %v1004
  %v1040 = vpop.f32.mrb[0].mxu0
  %v1041 = vadd.f32 0.0, %v1040
  %v1042 = vpop.f32.mrb[0].mxu0
  %v1043 = vpop.f32.mrb[0].mxu0
  %v1044 = vpop.f32.mrb[0].mxu0
  %1045 = vdwg.mxu0
  %v1047 = vrot.slane %v1041, 4
  %v1049 = vadd.f32 %v157, %v1047
  %v1050 = vxor.u32 %v997, 2147483648
  %v1051 = vmul.f32 %v1050, 1.442695
  %v1052 = vpow.pop %v1051
  %v1053 = vadd.f32 %v1052, 1.0
  %v1054 = vrcp.pop %v1053
  %v1055 = vmul.f32 1.0, %v1054
  %v1056 = vtanh.pop %v997
  %v1057 = vxor.u32 %v1049, 2147483648
  %v1058 = vmul.f32 %v1057, 1.442695
  %v1059 = vpow.pop %v1058
  %v1060 = vadd.f32 %v1059, 1.0
  %v1061 = vrcp.pop %v1060
  %v1062 = vmul.f32 1.0, %v1061
  %v1063 = vtanh.pop %v1049
  %v1065 = vrot.slane %v920, 6
  %v1067 = vmul.f32 %v1055, %v1065
  %1069 = vrot.lane.b32.xlu0 %v1056, 64
  %v1070 = vpop.permute.xlu0 %1069
  %v1072 = vmul.f32 %v1055, %v1070
  %1074 = vrot.lane.b32.xlu0 %v1072, 32
  %v1075 = vpop.permute.xlu0 %1074
  %v1077 = vadd.f32 %v1067, %v1075
  %v1078 = vtanh.pop %v1077
  %1080 = vrot.lane.b32.xlu0 %v1078, 64
  %v1081 = vpop.permute.xlu0 %1080
  %v1083 = vmul.f32 %v1055, %v1081
  %v1085 = vrot.slane %v940, 2
  %v1087 = vmul.f32 %v1062, %v1085
  %1089 = vrot.lane.b32.xlu0 %v1063, 64
  %v1090 = vpop.permute.xlu0 %1089
  %v1092 = vmul.f32 %v1062, %v1090
  %1094 = vrot.lane.b32.xlu0 %v1092, 32
  %v1095 = vpop.permute.xlu0 %1094
  %v1097 = vadd.f32 %v1087, %v1095
  %v1098 = vtanh.pop %v1097
  %1100 = vrot.lane.b32.xlu0 %v1098, 64
  %v1101 = vpop.permute.xlu0 %1100
  %v1103 = vmul.f32 %v1062, %v1101
  %v1104 = vpack.c.bf16 %v1083, %v1083
  %v1106 = vrot.slane %v1104, 1
  %1107 = vrot.lane.b32.xlu0 %v1106, 32
  %v1108 = vpop.permute.xlu0 %1107
  %v1110 = vsel %vm116, %v1108, 0
  %1112 = vmatprep.subr.bf16.mxu0 0
  %1113 = vmatpush1.bf16.msra.mxu0 %v171
  %1114 = vmatprep.subr.bf16.mxu0 0
  %1115 = vmatpush1.bf16.msra.mxu0 %v172
  %1116 = vmatprep.subr.bf16.mxu0 0
  %1117 = vmatpush1.bf16.msra.mxu0 0
  %1118 = vmatprep.subr.bf16.mxu0 0
  %1119 = vmatpush1.bf16.msra.mxu0 0
  %1120 = vmatprep.subr.bf16.mxu0 0
  %1121 = vmatpush1.bf16.msra.mxu0 0
  %1122 = vmatprep.subr.bf16.mxu0 0
  %1123 = vmatpush1.bf16.msra.mxu0 0
  %1124 = vmatprep.subr.bf16.mxu0 0
  %1125 = vmatpush1.bf16.msra.mxu0 0
  %1126 = vmatprep.subr.bf16.mxu0 0
  %1127 = vmatpush1.bf16.msra.mxu0 0
  %1128 = vmatprep.subr.bf16.mxu0 0
  %1129 = vmatpush1.bf16.msra.mxu0 0
  %1130 = vmatprep.subr.bf16.mxu0 0
  %1131 = vmatpush1.bf16.msra.mxu0 0
  %1132 = vmatprep.subr.bf16.mxu0 0
  %1133 = vmatpush1.bf16.msra.mxu0 0
  %1134 = vmatprep.subr.bf16.mxu0 0
  %1135 = vmatpush1.bf16.msra.mxu0 0
  %1136 = vmatprep.subr.bf16.mxu0 0
  %1137 = vmatpush1.bf16.msra.mxu0 0
  %1138 = vmatprep.subr.bf16.mxu0 0
  %1139 = vmatpush1.bf16.msra.mxu0 0
  %1140 = vmatprep.subr.bf16.mxu0 0
  %1141 = vmatpush1.bf16.msra.mxu0 0
  %1142 = vmatprep.subr.bf16.mxu0 0
  %1143 = vmatpush1.bf16.msra.mxu0 0
  %1144 = vmatprep.mubr.bf16.mxu0 0
  %1145 = vmatmul.mubr.bf16.gmra.mrb[0].mxu0 %v1110
  %v1146 = vpop.f32.mrb[0].mxu0
  %v1147 = vadd.f32 0.0, %v1146
  %v1148 = vpop.f32.mrb[0].mxu0
  %v1149 = vpop.f32.mrb[0].mxu0
  %v1150 = vpop.f32.mrb[0].mxu0
  %1151 = vdwg.mxu0
  %v1153 = vrot.slane %v1147, 4
  %v1155 = vadd.f32 %v159, %v1153
  %v1156 = vpack.c.bf16 %v1103, %v1103
  %v1158 = vrot.slane %v1156, 2
  %1159 = vrot.lane.b32.xlu0 %v1158, 32
  %v1160 = vpop.permute.xlu0 %1159
  %v1162 = vsel %vm116, %v1160, 0
  %1164 = vmatprep.subr.bf16.mxu0 0
  %1165 = vmatpush1.bf16.msra.mxu0 %v227
  %1166 = vmatprep.subr.bf16.mxu0 0
  %1167 = vmatpush1.bf16.msra.mxu0 %v228
  %1168 = vmatprep.subr.bf16.mxu0 0
  %1169 = vmatpush1.bf16.msra.mxu0 0
  %1170 = vmatprep.subr.bf16.mxu0 0
  %1171 = vmatpush1.bf16.msra.mxu0 0
  %1172 = vmatprep.subr.bf16.mxu0 0
  %1173 = vmatpush1.bf16.msra.mxu0 0
  %1174 = vmatprep.subr.bf16.mxu0 0
  %1175 = vmatpush1.bf16.msra.mxu0 0
  %1176 = vmatprep.subr.bf16.mxu0 0
  %1177 = vmatpush1.bf16.msra.mxu0 0
  %1178 = vmatprep.subr.bf16.mxu0 0
  %1179 = vmatpush1.bf16.msra.mxu0 0
  %1180 = vmatprep.subr.bf16.mxu0 0
  %1181 = vmatpush1.bf16.msra.mxu0 0
  %1182 = vmatprep.subr.bf16.mxu0 0
  %1183 = vmatpush1.bf16.msra.mxu0 0
  %1184 = vmatprep.subr.bf16.mxu0 0
  %1185 = vmatpush1.bf16.msra.mxu0 0
  %1186 = vmatprep.subr.bf16.mxu0 0
  %1187 = vmatpush1.bf16.msra.mxu0 0
  %1188 = vmatprep.subr.bf16.mxu0 0
  %1189 = vmatpush1.bf16.msra.mxu0 0
  %1190 = vmatprep.subr.bf16.mxu0 0
  %1191 = vmatpush1.bf16.msra.mxu0 0
  %1192 = vmatprep.subr.bf16.mxu0 0
  %1193 = vmatpush1.bf16.msra.mxu0 0
  %1194 = vmatprep.subr.bf16.mxu0 0
  %1195 = vmatpush1.bf16.msra.mxu0 0
  %1196 = vmatprep.mubr.bf16.mxu0 0
  %1197 = vmatmul.mubr.bf16.gmra.mrb[0].mxu0 %v1162
  %v1198 = vpop.f32.mrb[0].mxu0
  %v1199 = vadd.f32 0.0, %v1198
  %v1200 = vpop.f32.mrb[0].mxu0
  %v1201 = vpop.f32.mrb[0].mxu0
  %v1202 = vpop.f32.mrb[0].mxu0
  %1203 = vdwg.mxu0
  %v1205 = vrot.slane %v1199, 6
  %v1207 = vadd.f32 %v157, %v1205
  %v1208 = vxor.u32 %v1155, 2147483648
  %v1209 = vmul.f32 %v1208, 1.442695
  %v1210 = vpow.pop %v1209
  %v1211 = vadd.f32 %v1210, 1.0
  %v1212 = vrcp.pop %v1211
  %v1213 = vmul.f32 1.0, %v1212
  %v1214 = vtanh.pop %v1155
  %v1215 = vxor.u32 %v1207, 2147483648
  %v1216 = vmul.f32 %v1215, 1.442695
  %v1217 = vpow.pop %v1216
  %v1218 = vadd.f32 %v1217, 1.0
  %v1219 = vrcp.pop %v1218
  %v1220 = vmul.f32 1.0, %v1219
  %v1221 = vtanh.pop %v1207
  %v1223 = vrot.slane %v1077, 6
  %v1225 = vmul.f32 %v1213, %v1223
  %1227 = vrot.lane.b32.xlu0 %v1214, 64
  %v1228 = vpop.permute.xlu0 %1227
  %v1230 = vmul.f32 %v1213, %v1228
  %1232 = vrot.lane.b32.xlu0 %v1230, 32
  %v1233 = vpop.permute.xlu0 %1232
  %v1235 = vadd.f32 %v1225, %v1233
  %v1236 = vtanh.pop %v1235
  %1238 = vrot.lane.b32.xlu0 %v1236, 64
  %v1239 = vpop.permute.xlu0 %1238
  %v1241 = vmul.f32 %v1213, %v1239
  %v1243 = vrot.slane %v1097, 2
  %v1245 = vmul.f32 %v1220, %v1243
  %1247 = vrot.lane.b32.xlu0 %v1221, 64
  %v1248 = vpop.permute.xlu0 %1247
  %v1250 = vmul.f32 %v1220, %v1248
  %1252 = vrot.lane.b32.xlu0 %v1250, 32
  %v1253 = vpop.permute.xlu0 %1252
  %v1255 = vadd.f32 %v1245, %v1253
  %v1256 = vtanh.pop %v1255
  %1258 = vrot.lane.b32.xlu0 %v1256, 64
  %v1259 = vpop.permute.xlu0 %1258
  %v1261 = vmul.f32 %v1220, %v1259
  %v1262 = vpack.c.bf16 %v1241, %v1241
  %v1264 = vrot.slane %v1262, 2
  %1265 = vrot.lane.b32.xlu0 %v1264, 32
  %v1266 = vpop.permute.xlu0 %1265
  %v1268 = vsel %vm116, %v1266, 0
  %1270 = vmatprep.subr.bf16.mxu0 0
  %1271 = vmatpush1.bf16.msra.mxu0 %v171
  %1272 = vmatprep.subr.bf16.mxu0 0
  %1273 = vmatpush1.bf16.msra.mxu0 %v172
  %1274 = vmatprep.subr.bf16.mxu0 0
  %1275 = vmatpush1.bf16.msra.mxu0 0
  %1276 = vmatprep.subr.bf16.mxu0 0
  %1277 = vmatpush1.bf16.msra.mxu0 0
  %1278 = vmatprep.subr.bf16.mxu0 0
  %1279 = vmatpush1.bf16.msra.mxu0 0
  %1280 = vmatprep.subr.bf16.mxu0 0
  %1281 = vmatpush1.bf16.msra.mxu0 0
  %1282 = vmatprep.subr.bf16.mxu0 0
  %1283 = vmatpush1.bf16.msra.mxu0 0
  %1284 = vmatprep.subr.bf16.mxu0 0
  %1285 = vmatpush1.bf16.msra.mxu0 0
  %1286 = vmatprep.subr.bf16.mxu0 0
  %1287 = vmatpush1.bf16.msra.mxu0 0
  %1288 = vmatprep.subr.bf16.mxu0 0
  %1289 = vmatpush1.bf16.msra.mxu0 0
  %1290 = vmatprep.subr.bf16.mxu0 0
  %1291 = vmatpush1.bf16.msra.mxu0 0
  %1292 = vmatprep.subr.bf16.mxu0 0
  %1293 = vmatpush1.bf16.msra.mxu0 0
  %1294 = vmatprep.subr.bf16.mxu0 0
  %1295 = vmatpush1.bf16.msra.mxu0 0
  %1296 = vmatprep.subr.bf16.mxu0 0
  %1297 = vmatpush1.bf16.msra.mxu0 0
  %1298 = vmatprep.subr.bf16.mxu0 0
  %1299 = vmatpush1.bf16.msra.mxu0 0
  %1300 = vmatprep.subr.bf16.mxu0 0
  %1301 = vmatpush1.bf16.msra.mxu0 0
  %1302 = vmatprep.mubr.bf16.mxu0 0
  %1303 = vmatmul.mubr.bf16.gmra.mrb[0].mxu0 %v1268
  %v1304 = vpop.f32.mrb[0].mxu0
  %v1305 = vadd.f32 0.0, %v1304
  %v1306 = vpop.f32.mrb[0].mxu0
  %v1307 = vpop.f32.mrb[0].mxu0
  %v1308 = vpop.f32.mrb[0].mxu0
  %1309 = vdwg.mxu0
  %v1311 = vrot.slane %v1305, 2
  %v1313 = vadd.f32 %v159, %v1311
  %v1314 = vpack.c.bf16 %v1261, %v1261
  %v1316 = vrot.slane %v1314, 1
  %1317 = vrot.lane.b32.xlu0 %v1316, 32
  %v1318 = vpop.permute.xlu0 %1317
  %v1320 = vsel %vm116, %v1318, 0
  %1322 = vmatprep.subr.bf16.mxu0 0
  %1323 = vmatpush1.bf16.msra.mxu0 %v227
  %1324 = vmatprep.subr.bf16.mxu0 0
  %1325 = vmatpush1.bf16.msra.mxu0 %v228
  %1326 = vmatprep.subr.bf16.mxu0 0
  %1327 = vmatpush1.bf16.msra.mxu0 0
  %1328 = vmatprep.subr.bf16.mxu0 0
  %1329 = vmatpush1.bf16.msra.mxu0 0
  %1330 = vmatprep.subr.bf16.mxu0 0
  %1331 = vmatpush1.bf16.msra.mxu0 0
  %1332 = vmatprep.subr.bf16.mxu0 0
  %1333 = vmatpush1.bf16.msra.mxu0 0
  %1334 = vmatprep.subr.bf16.mxu0 0
  %1335 = vmatpush1.bf16.msra.mxu0 0
  %1336 = vmatprep.subr.bf16.mxu0 0
  %1337 = vmatpush1.bf16.msra.mxu0 0
  %1338 = vmatprep.subr.bf16.mxu0 0
  %1339 = vmatpush1.bf16.msra.mxu0 0
  %1340 = vmatprep.subr.bf16.mxu0 0
  %1341 = vmatpush1.bf16.msra.mxu0 0
  %1342 = vmatprep.subr.bf16.mxu0 0
  %1343 = vmatpush1.bf16.msra.mxu0 0
  %1344 = vmatprep.subr.bf16.mxu0 0
  %1345 = vmatpush1.bf16.msra.mxu0 0
  %1346 = vmatprep.subr.bf16.mxu0 0
  %1347 = vmatpush1.bf16.msra.mxu0 0
  %1348 = vmatprep.subr.bf16.mxu0 0
  %1349 = vmatpush1.bf16.msra.mxu0 0
  %1350 = vmatprep.subr.bf16.mxu0 0
  %1351 = vmatpush1.bf16.msra.mxu0 0
  %1352 = vmatprep.subr.bf16.mxu0 0
  %1353 = vmatpush1.bf16.msra.mxu0 0
  %1354 = vmatprep.mubr.bf16.mxu0 0
  %1355 = vmatmul.mubr.bf16.gmra.mrb[0].mxu0 %v1320
  %v1356 = vpop.f32.mrb[0].mxu0
  %v1357 = vadd.f32 0.0, %v1356
  %v1358 = vpop.f32.mrb[0].mxu0
  %v1359 = vpop.f32.mrb[0].mxu0
  %v1360 = vpop.f32.mrb[0].mxu0
  %1361 = vdwg.mxu0
  %v1362 = vadd.f32 %v157, %v1357
  %v1363 = vxor.u32 %v1313, 2147483648
  %v1364 = vmul.f32 %v1363, 1.442695
  %v1365 = vpow.pop %v1364
  %v1366 = vadd.f32 %v1365, 1.0
  %v1367 = vrcp.pop %v1366
  %v1368 = vmul.f32 1.0, %v1367
  %v1369 = vtanh.pop %v1313
  %v1370 = vxor.u32 %v1362, 2147483648
  %v1371 = vmul.f32 %v1370, 1.442695
  %v1372 = vpow.pop %v1371
  %v1373 = vadd.f32 %v1372, 1.0
  %v1374 = vrcp.pop %v1373
  %v1375 = vmul.f32 1.0, %v1374
  %v1376 = vtanh.pop %v1362
  %v1378 = vrot.slane %v1235, 6
  %v1380 = vmul.f32 %v1368, %v1378
  %1382 = vrot.lane.b32.xlu0 %v1369, 64
  %v1383 = vpop.permute.xlu0 %1382
  %v1385 = vmul.f32 %v1368, %v1383
  %1387 = vrot.lane.b32.xlu0 %v1385, 32
  %v1388 = vpop.permute.xlu0 %1387
  %v1390 = vadd.f32 %v1380, %v1388
  %v1391 = vtanh.pop %v1390
  %1393 = vrot.lane.b32.xlu0 %v1391, 64
  %v1394 = vpop.permute.xlu0 %1393
  %v1396 = vmul.f32 %v1368, %v1394
  %v1398 = vrot.slane %v1255, 2
  %v1400 = vmul.f32 %v1375, %v1398
  %1402 = vrot.lane.b32.xlu0 %v1376, 64
  %v1403 = vpop.permute.xlu0 %1402
  %v1405 = vmul.f32 %v1375, %v1403
  %1407 = vrot.lane.b32.xlu0 %v1405, 32
  %v1408 = vpop.permute.xlu0 %1407
  %v1410 = vadd.f32 %v1400, %v1408
  %v1411 = vtanh.pop %v1410
  %1413 = vrot.lane.b32.xlu0 %v1411, 64
  %v1414 = vpop.permute.xlu0 %1413
  %v1416 = vmul.f32 %v1375, %v1414
  %1418 = vrot.lane.b32.xlu0 %v305, 32
  %v1419 = vpop.permute.xlu0 %1418
  %vm1421 = vcmask 254976
  %1422 = vst.msk [vmem:[#allocation2] sm:$0x3] %vm1421, %v1419
  %1424 = vrot.lane.b32.xlu0 %v1416, 32
  %v1425 = vpop.permute.xlu0 %1424
  %1427 = vst.msk [vmem:[#allocation2 + $0x10] sm:$0x3] %vm1421, %v1425
  %1429 = vrot.lane.b32.xlu0 %v459, 32
  %v1430 = vpop.permute.xlu0 %1429
  %vm1432 = vcmask 257026
  %1433 = vst.msk [vmem:[#allocation2] sm:$0xc] %vm1432, %v1430
  %1435 = vrot.lane.b32.xlu0 %v1261, 32
  %v1436 = vpop.permute.xlu0 %1435
  %1438 = vst.msk [vmem:[#allocation2 + $0x10] sm:$0xc] %vm1432, %v1436
  %1440 = vrot.lane.b32.xlu0 %v617, 32
  %v1441 = vpop.permute.xlu0 %1440
  %vm1443 = vcmask 259076
  %1444 = vst.msk [vmem:[#allocation2] sm:$0x30] %vm1443, %v1441
  %1446 = vrot.lane.b32.xlu0 %v1103, 32
  %v1447 = vpop.permute.xlu0 %1446
  %1449 = vst.msk [vmem:[#allocation2 + $0x10] sm:$0x30] %vm1443, %v1447
  %1451 = vrot.lane.b32.xlu0 %v772, 32
  %v1452 = vpop.permute.xlu0 %1451
  %vm1454 = vcmask 261126
  %1455 = vst.msk [vmem:[#allocation2] sm:$0xc0] %vm1454, %v1452
  %1457 = vrot.lane.b32.xlu0 %v946, 32
  %v1458 = vpop.permute.xlu0 %1457
  %1460 = vst.msk [vmem:[#allocation2 + $0x10] sm:$0xc0] %vm1454, %v1458
  %1462 = vrot.lane.b32.xlu0 %v926, 32
  %v1463 = vpop.permute.xlu0 %1462
  %1465 = vst.msk [vmem:[#allocation2 + $0x8] sm:$0x3] %vm1421, %v1463
  %1467 = vrot.lane.b32.xlu0 %v792, 32
  %v1468 = vpop.permute.xlu0 %1467
  %1470 = vst.msk [vmem:[#allocation2 + $0x18] sm:$0x3] %vm1421, %v1468
  %1472 = vrot.lane.b32.xlu0 %v1083, 32
  %v1473 = vpop.permute.xlu0 %1472
  %1475 = vst.msk [vmem:[#allocation2 + $0x8] sm:$0xc] %vm1432, %v1473
  %1477 = vrot.lane.b32.xlu0 %v637, 32
  %v1478 = vpop.permute.xlu0 %1477
  %1480 = vst.msk [vmem:[#allocation2 + $0x18] sm:$0xc] %vm1432, %v1478
  %1482 = vrot.lane.b32.xlu0 %v1241, 32
  %v1483 = vpop.permute.xlu0 %1482
  %1485 = vst.msk [vmem:[#allocation2 + $0x8] sm:$0x30] %vm1443, %v1483
  %1487 = vrot.lane.b32.xlu0 %v479, 32
  %v1488 = vpop.permute.xlu0 %1487
  %1490 = vst.msk [vmem:[#allocation2 + $0x18] sm:$0x30] %vm1443, %v1488
  %1492 = vrot.lane.b32.xlu0 %v1396, 32
  %v1493 = vpop.permute.xlu0 %1492
  %1495 = vst.msk [vmem:[#allocation2 + $0x8] sm:$0xc0] %vm1454, %v1493
  %1497 = vrot.lane.b32.xlu0 %v322, 32
  %v1498 = vpop.permute.xlu0 %1497
  %1500 = vst.msk [vmem:[#allocation2 + $0x18] sm:$0xc0] %vm1454, %v1498
  %v1501 = vld [vmem:[#allocation2] sm:$0xff]
  %v1502 = vld [vmem:[#allocation2 + $0x8] sm:$0xff]
  %v1503 = vld [vmem:[#allocation2 + $0x10] sm:$0xff]
  %v1504 = vld [vmem:[#allocation2 + $0x18] sm:$0xff]
  %1507 = vrot.lane.b32.xlu0 %v1503, 32
  %v1508 = vpop.permute.xlu0 %1507
  %1509 = vrot.lane.b32.xlu0 %v1504, 32
  %v1510 = vpop.permute.xlu0 %1509
  %v1513 = vsel %vm116, %v1501, %v1508
  %v1514 = vsel %vm116, %v1502, %v1510
  %v1515 = vpack.c.bf16 %v1514, %v1513
  %v1516 = vld [vmem:[%s7] sm:$0xf]
  %v1517 = vld [vmem:[%s7 + $0x4] sm:$0xf]
  %v1518 = vld [vmem:[%s7 + $0x8] sm:$0xf]
  %v1519 = vld [vmem:[%s7 + $0xc] sm:$0xf]
  %v1520 = vld [vmem:[%s7 + $0x10] sm:$0xf]
  %v1521 = vld [vmem:[%s7 + $0x14] sm:$0xf]
  %v1522 = vld [vmem:[%s7 + $0x18] sm:$0xf]
  %v1523 = vld [vmem:[%s7 + $0x1c] sm:$0xf]
  %v1524 = vld [vmem:[%s8] sm:$0x1]
  %v1526 = vlaneseq
  %v1527 = vshrl.u32 %v1526, 7
  %v1528 = vsub.s32 0, %v1527
  %v1529 = vrot.slane %v1524, %v1528
  %v1539 = vunpack.c.l.b16 %v1516
  %v1540 = vunpack.c.l.b16 %v1517
  %v1541 = vunpack.c.l.b16 %v1518
  %v1542 = vunpack.c.l.b16 %v1519
  %v1543 = vunpack.c.l.b16 %v1520
  %v1544 = vunpack.c.l.b16 %v1521
  %v1545 = vunpack.c.l.b16 %v1522
  %v1546 = vunpack.c.l.b16 %v1523
  %v1547 = vpack.c.b16 %v1540, %v1539
  %v1548 = vpack.c.b16 %v1542, %v1541
  %v1549 = vpack.c.b16 %v1544, %v1543
  %v1550 = vpack.c.b16 %v1546, %v1545
  %vm1555 = vcmask 523264
  %v1557 = vsel %vm1555, %v1515, 0
  %1559 = vmatprep.subr.bf16.mxu0 0
  %1560 = vmatpush1.bf16.msra.mxu0 %v1547
  %1561 = vmatprep.subr.bf16.mxu0 0
  %1562 = vmatpush1.bf16.msra.mxu0 %v1548
  %1563 = vmatprep.subr.bf16.mxu0 0
  %1564 = vmatpush1.bf16.msra.mxu0 %v1549
  %1565 = vmatprep.subr.bf16.mxu0 0
  %1566 = vmatpush1.bf16.msra.mxu0 %v1550
  %1567 = vmatprep.subr.bf16.mxu0 0
  %1568 = vmatpush1.bf16.msra.mxu0 0
  %1569 = vmatprep.subr.bf16.mxu0 0
  %1570 = vmatpush1.bf16.msra.mxu0 0
  %1571 = vmatprep.subr.bf16.mxu0 0
  %1572 = vmatpush1.bf16.msra.mxu0 0
  %1573 = vmatprep.subr.bf16.mxu0 0
  %1574 = vmatpush1.bf16.msra.mxu0 0
  %1575 = vmatprep.subr.bf16.mxu0 0
  %1576 = vmatpush1.bf16.msra.mxu0 0
  %1577 = vmatprep.subr.bf16.mxu0 0
  %1578 = vmatpush1.bf16.msra.mxu0 0
  %1579 = vmatprep.subr.bf16.mxu0 0
  %1580 = vmatpush1.bf16.msra.mxu0 0
  %1581 = vmatprep.subr.bf16.mxu0 0
  %1582 = vmatpush1.bf16.msra.mxu0 0
  %1583 = vmatprep.subr.bf16.mxu0 0
  %1584 = vmatpush1.bf16.msra.mxu0 0
  %1585 = vmatprep.subr.bf16.mxu0 0
  %1586 = vmatpush1.bf16.msra.mxu0 0
  %1587 = vmatprep.subr.bf16.mxu0 0
  %1588 = vmatpush1.bf16.msra.mxu0 0
  %1589 = vmatprep.subr.bf16.mxu0 0
  %1590 = vmatpush1.bf16.msra.mxu0 0
  %1591 = vmatprep.mubr.bf16.mxu0 0
  %1592 = vmatmul.mubr.bf16.gmra.mrb[0].mxu0 %v1557
  %v1593 = vpop.f32.mrb[0].mxu0
  %v1594 = vadd.f32 %v1529, %v1593
  %v1595 = vpop.f32.mrb[0].mxu0
  %v1596 = vpop.f32.mrb[0].mxu0
  %v1597 = vadd.f32 %v1529, %v1596
  %v1598 = vpop.f32.mrb[0].mxu0
  %1599 = vdwg.mxu0
  %v1600 = vmax.f32 %v1594, 0.0
  %v1601 = vmax.f32 %v1597, 0.0
  %v1602 = vpack.c.bf16 %v1601, %v1600
  %v1603 = vld [vmem:[%s9] sm:$0xf]
  %v1604 = vld [vmem:[%s9 + $0x4] sm:$0xf]
  %v1605 = vld [vmem:[%s9 + $0x8] sm:$0xf]
  %v1606 = vld [vmem:[%s9 + $0xc] sm:$0xf]
  %v1607 = vld [vmem:[%s9 + $0x10] sm:$0xf]
  %v1608 = vld [vmem:[%s9 + $0x14] sm:$0xf]
  %v1609 = vld [vmem:[%s9 + $0x18] sm:$0xf]
  %v1610 = vld [vmem:[%s9 + $0x1c] sm:$0xf]
  %v1619 = vunpack.c.l.b16 %v1603
  %v1620 = vunpack.c.l.b16 %v1604
  %v1621 = vunpack.c.l.b16 %v1605
  %v1622 = vunpack.c.l.b16 %v1606
  %v1623 = vunpack.c.l.b16 %v1607
  %v1624 = vunpack.c.l.b16 %v1608
  %v1625 = vunpack.c.l.b16 %v1609
  %v1626 = vunpack.c.l.b16 %v1610
  %v1627 = vpack.c.b16 %v1620, %v1619
  %v1628 = vpack.c.b16 %v1622, %v1621
  %v1629 = vpack.c.b16 %v1624, %v1623
  %v1630 = vpack.c.b16 %v1626, %v1625
  %v1636 = vsel %vm1555, %v1602, 0
  %1638 = vmatprep.subr.bf16.mxu0 0
  %1639 = vmatpush1.bf16.msra.mxu0 %v1627
  %1640 = vmatprep.subr.bf16.mxu0 0
  %1641 = vmatpush1.bf16.msra.mxu0 %v1628
  %1642 = vmatprep.subr.bf16.mxu0 0
  %1643 = vmatpush1.bf16.msra.mxu0 %v1629
  %1644 = vmatprep.subr.bf16.mxu0 0
  %1645 = vmatpush1.bf16.msra.mxu0 %v1630
  %1646 = vmatprep.subr.bf16.mxu0 0
  %1647 = vmatpush1.bf16.msra.mxu0 0
  %1648 = vmatprep.subr.bf16.mxu0 0
  %1649 = vmatpush1.bf16.msra.mxu0 0
  %1650 = vmatprep.subr.bf16.mxu0 0
  %1651 = vmatpush1.bf16.msra.mxu0 0
  %1652 = vmatprep.subr.bf16.mxu0 0
  %1653 = vmatpush1.bf16.msra.mxu0 0
  %1654 = vmatprep.subr.bf16.mxu0 0
  %1655 = vmatpush1.bf16.msra.mxu0 0
  %1656 = vmatprep.subr.bf16.mxu0 0
  %1657 = vmatpush1.bf16.msra.mxu0 0
  %1658 = vmatprep.subr.bf16.mxu0 0
  %1659 = vmatpush1.bf16.msra.mxu0 0
  %1660 = vmatprep.subr.bf16.mxu0 0
  %1661 = vmatpush1.bf16.msra.mxu0 0
  %1662 = vmatprep.subr.bf16.mxu0 0
  %1663 = vmatpush1.bf16.msra.mxu0 0
  %1664 = vmatprep.subr.bf16.mxu0 0
  %1665 = vmatpush1.bf16.msra.mxu0 0
  %1666 = vmatprep.subr.bf16.mxu0 0
  %1667 = vmatpush1.bf16.msra.mxu0 0
  %1668 = vmatprep.subr.bf16.mxu0 0
  %1669 = vmatpush1.bf16.msra.mxu0 0
  %1670 = vmatprep.mubr.bf16.mxu0 0
  %1671 = vmatmul.mubr.bf16.gmra.mrb[0].mxu0 %v1636
  %v1672 = vpop.f32.mrb[0].mxu0
  %v1673 = vadd.f32 0.0, %v1672
  %v1674 = vpop.f32.mrb[0].mxu0
  %v1675 = vpop.f32.mrb[0].mxu0
  %v1676 = vadd.f32 0.0, %v1675
  %v1677 = vpop.f32.mrb[0].mxu0
  %1678 = vdwg.mxu0
  %v1679 = vld [vmem:[%s2] sm:$0xf]
  %v1680 = vld [vmem:[%s2 + $0x4] sm:$0xf]
  %v1681 = vpack.c.bf16 %v1676, %v1673
  %v1682 = vld [vmem:[%s10] sm:$0x1]
  %v1684 = vlaneseq
  %v1685 = vshrl.u32 %v1684, 7
  %v1686 = vsub.s32 0, %v1685
  %v1687 = vrot.slane %v1682, %v1686
  %v1691 = vunpack.c.l.b16 %v1679
  %v1692 = vunpack.c.l.b16 %v1680
  %v1693 = vpack.c.b16 %v1692, %v1691
  %vm1694 = vcmask 130048
  %v1696 = vsel %vm1694, %v1693, 0
  %1698 = vmatprep.subr.bf16.mxu0 0
  %1699 = vmatpush1.bf16.msra.mxu0 %v1681
  %1700 = vmatprep.subr.bf16.mxu0 0
  %1701 = vmatpush1.bf16.msra.mxu0 0
  %1702 = vmatprep.subr.bf16.mxu0 0
  %1703 = vmatpush1.bf16.msra.mxu0 0
  %1704 = vmatprep.subr.bf16.mxu0 0
  %1705 = vmatpush1.bf16.msra.mxu0 0
  %1706 = vmatprep.subr.bf16.mxu0 0
  %1707 = vmatpush1.bf16.msra.mxu0 0
  %1708 = vmatprep.subr.bf16.mxu0 0
  %1709 = vmatpush1.bf16.msra.mxu0 0
  %1710 = vmatprep.subr.bf16.mxu0 0
  %1711 = vmatpush1.bf16.msra.mxu0 0
  %1712 = vmatprep.subr.bf16.mxu0 0
  %1713 = vmatpush1.bf16.msra.mxu0 0
  %1714 = vmatprep.subr.bf16.mxu0 0
  %1715 = vmatpush1.bf16.msra.mxu0 0
  %1716 = vmatprep.subr.bf16.mxu0 0
  %1717 = vmatpush1.bf16.msra.mxu0 0
  %1718 = vmatprep.subr.bf16.mxu0 0
  %1719 = vmatpush1.bf16.msra.mxu0 0
  %1720 = vmatprep.subr.bf16.mxu0 0
  %1721 = vmatpush1.bf16.msra.mxu0 0
  %1722 = vmatprep.subr.bf16.mxu0 0
  %1723 = vmatpush1.bf16.msra.mxu0 0
  %1724 = vmatprep.subr.bf16.mxu0 0
  %1725 = vmatpush1.bf16.msra.mxu0 0
  %1726 = vmatprep.subr.bf16.mxu0 0
  %1727 = vmatpush1.bf16.msra.mxu0 0
  %1728 = vmatprep.subr.bf16.mxu0 0
  %1729 = vmatpush1.bf16.msra.mxu0 0
  %1730 = vmatprep.mubr.bf16.mxu0 0
  %1731 = vmatmul.mubr.bf16.gmra.mrb[0].mxu0 %v1696
  %v1732 = vpop.f32.mrb[0].mxu0
  %v1733 = vadd.f32 %v1687, %v1732
  %v1734 = vpop.f32.mrb[0].mxu0
  %v1735 = vpop.f32.mrb[0].mxu0
  %v1736 = vadd.f32 %v1687, %v1735
  %v1737 = vpop.f32.mrb[0].mxu0
  %1738 = vdwg.mxu0
  %v1739 = vmax.f32 %v1733, 0.0
  %v1740 = vmax.f32 %v1736, 0.0
  %v1741 = vpack.c.bf16 %v1740, %v1739
  %v1742 = vld [vmem:[%s11] sm:$0xff]
  %v1743 = vld [vmem:[%s11 + $0x8] sm:$0xff]
  %v1744 = vld [vmem:[%s11 + $0x10] sm:$0xff]
  %v1745 = vld [vmem:[%s11 + $0x18] sm:$0xff]
  %v1746 = vld [vmem:[%s11 + $0x20] sm:$0xff]
  %v1747 = vld [vmem:[%s11 + $0x28] sm:$0xff]
  %v1748 = vld [vmem:[%s11 + $0x30] sm:$0xff]
  %v1749 = vld [vmem:[%s11 + $0x38] sm:$0xff]
  %v1750 = vld [vmem:[%s12] sm:$0xff]
  %v1751 = vld [vmem:[%s12 + $0x8] sm:$0xff]
  %v1752 = vld [vmem:[%s12 + $0x10] sm:$0xff]
  %v1753 = vld [vmem:[%s12 + $0x18] sm:$0xff]
  %v1754 = vld [vmem:[%s12 + $0x20] sm:$0xff]
  %v1755 = vld [vmem:[%s12 + $0x28] sm:$0xff]
  %v1756 = vld [vmem:[%s12 + $0x30] sm:$0xff]
  %v1757 = vld [vmem:[%s12 + $0x38] sm:$0xff]
  %v1758 = vld [vmem:[%s13] sm:$0xff]
  %v1759 = vld [vmem:[%s13 + $0x8] sm:$0xff]
  %v1760 = vld [vmem:[%s13 + $0x10] sm:$0xff]
  %v1761 = vld [vmem:[%s13 + $0x18] sm:$0xff]
  %v1762 = vld [vmem:[%s13 + $0x20] sm:$0xff]
  %v1763 = vld [vmem:[%s13 + $0x28] sm:$0xff]
  %v1764 = vld [vmem:[%s13 + $0x30] sm:$0xff]
  %v1765 = vld [vmem:[%s13 + $0x38] sm:$0xff]
  %v1766 = vld [vmem:[%s14] sm:$0xf]
  %v1768 = vlaneseq
  %v1769 = vshrl.u32 %v1768, 7
  %v1770 = vsub.s32 0, %v1769
  %v1771 = vrot.slane %v1766, %v1770
  %v1772 = vlaneseq
  %v1773 = vshrl.u32 %v1772, 7
  %v1774 = vsub.s32 1, %v1773
  %v1775 = vrot.slane %v1766, %v1774
  %v1776 = vlaneseq
  %v1777 = vshrl.u32 %v1776, 7
  %v1778 = vsub.s32 2, %v1777
  %v1779 = vrot.slane %v1766, %v1778
  %v1780 = vlaneseq
  %v1781 = vshrl.u32 %v1780, 7
  %v1782 = vsub.s32 3, %v1781
  %v1783 = vrot.slane %v1766, %v1782
  %v1796 = vunpack.c.l.b16 %v1742
  %v1797 = vunpack.c.h.b16 %v1742
  %v1798 = vunpack.c.l.b16 %v1743
  %v1799 = vunpack.c.h.b16 %v1743
  %v1800 = vunpack.c.l.b16 %v1744
  %v1801 = vunpack.c.h.b16 %v1744
  %v1802 = vunpack.c.l.b16 %v1745
  %v1803 = vunpack.c.h.b16 %v1745
  %v1804 = vunpack.c.l.b16 %v1746
  %v1805 = vunpack.c.h.b16 %v1746
  %v1806 = vunpack.c.l.b16 %v1747
  %v1807 = vunpack.c.h.b16 %v1747
  %v1808 = vunpack.c.l.b16 %v1748
  %v1809 = vunpack.c.h.b16 %v1748
  %v1810 = vunpack.c.l.b16 %v1749
  %v1811 = vunpack.c.h.b16 %v1749
  %v1812 = vpack.c.b16 %v1800, %v1796
  %v1813 = vpack.c.b16 %v1801, %v1797
  %v1814 = vpack.c.b16 %v1802, %v1798
  %v1815 = vpack.c.b16 %v1803, %v1799
  %v1816 = vpack.c.b16 %v1808, %v1804
  %v1817 = vpack.c.b16 %v1809, %v1805
  %v1818 = vpack.c.b16 %v1810, %v1806
  %v1819 = vpack.c.b16 %v1811, %v1807
  %v1829 = vsel %vm116, %v1741, 0
  %1831 = vmatprep.subr.bf16.mxu0 %v1813
  %1832 = vmatpush1.bf16.msra.mxu0 %v1812
  %1833 = vmatprep.subr.bf16.mxu0 %v1817
  %1834 = vmatpush1.bf16.msra.mxu0 %v1816
  %1835 = vmatprep.subr.bf16.mxu0 0
  %1836 = vmatpush1.bf16.msra.mxu0 0
  %1837 = vmatprep.subr.bf16.mxu0 0
  %1838 = vmatpush1.bf16.msra.mxu0 0
  %1839 = vmatprep.subr.bf16.mxu0 0
  %1840 = vmatpush1.bf16.msra.mxu0 0
  %1841 = vmatprep.subr.bf16.mxu0 0
  %1842 = vmatpush1.bf16.msra.mxu0 0
  %1843 = vmatprep.subr.bf16.mxu0 0
  %1844 = vmatpush1.bf16.msra.mxu0 0
  %1845 = vmatprep.subr.bf16.mxu0 0
  %1846 = vmatpush1.bf16.msra.mxu0 0
  %1847 = vmatprep.subr.bf16.mxu0 0
  %1848 = vmatpush1.bf16.msra.mxu0 0
  %1849 = vmatprep.subr.bf16.mxu0 0
  %1850 = vmatpush1.bf16.msra.mxu0 0
  %1851 = vmatprep.subr.bf16.mxu0 0
  %1852 = vmatpush1.bf16.msra.mxu0 0
  %1853 = vmatprep.subr.bf16.mxu0 0
  %1854 = vmatpush1.bf16.msra.mxu0 0
  %1855 = vmatprep.subr.bf16.mxu0 0
  %1856 = vmatpush1.bf16.msra.mxu0 0
  %1857 = vmatprep.subr.bf16.mxu0 0
  %1858 = vmatpush1.bf16.msra.mxu0 0
  %1859 = vmatprep.subr.bf16.mxu0 0
  %1860 = vmatpush1.bf16.msra.mxu0 0
  %1861 = vmatprep.subr.bf16.mxu0 0
  %1862 = vmatpush1.bf16.msra.mxu0 0
  %1863 = vmatprep.mubr.bf16.mxu0 0
  %1864 = vmatmul.mubr.bf16.gmra.mrb[0].mxu0 %v1829
  %v1865 = vpop.f32.mrb[0].mxu0
  %v1866 = vadd.f32 %v1771, %v1865
  %v1867 = vpop.f32.mrb[0].mxu0
  %v1868 = vadd.f32 %v1775, %v1867
  %v1869 = vpop.f32.mrb[0].mxu0
  %v1870 = vadd.f32 %v1771, %v1869
  %v1871 = vpop.f32.mrb[0].mxu0
  %v1872 = vadd.f32 %v1775, %v1871
  %1873 = vdwg.mxu0
  %1874 = vmatprep.subr.bf16.mxu0 %v1815
  %1875 = vmatpush1.bf16.msra.mxu0 %v1814
  %1876 = vmatprep.subr.bf16.mxu0 %v1819
  %1877 = vmatpush1.bf16.msra.mxu0 %v1818
  %1878 = vmatprep.subr.bf16.mxu0 0
  %1879 = vmatpush1.bf16.msra.mxu0 0
  %1880 = vmatprep.subr.bf16.mxu0 0
  %1881 = vmatpush1.bf16.msra.mxu0 0
  %1882 = vmatprep.subr.bf16.mxu0 0
  %1883 = vmatpush1.bf16.msra.mxu0 0
  %1884 = vmatprep.subr.bf16.mxu0 0
  %1885 = vmatpush1.bf16.msra.mxu0 0
  %1886 = vmatprep.subr.bf16.mxu0 0
  %1887 = vmatpush1.bf16.msra.mxu0 0
  %1888 = vmatprep.subr.bf16.mxu0 0
  %1889 = vmatpush1.bf16.msra.mxu0 0
  %1890 = vmatprep.subr.bf16.mxu0 0
  %1891 = vmatpush1.bf16.msra.mxu0 0
  %1892 = vmatprep.subr.bf16.mxu0 0
  %1893 = vmatpush1.bf16.msra.mxu0 0
  %1894 = vmatprep.subr.bf16.mxu0 0
  %1895 = vmatpush1.bf16.msra.mxu0 0
  %1896 = vmatprep.subr.bf16.mxu0 0
  %1897 = vmatpush1.bf16.msra.mxu0 0
  %1898 = vmatprep.subr.bf16.mxu0 0
  %1899 = vmatpush1.bf16.msra.mxu0 0
  %1900 = vmatprep.subr.bf16.mxu0 0
  %1901 = vmatpush1.bf16.msra.mxu0 0
  %1902 = vmatprep.subr.bf16.mxu0 0
  %1903 = vmatpush1.bf16.msra.mxu0 0
  %1904 = vmatprep.subr.bf16.mxu0 0
  %1905 = vmatpush1.bf16.msra.mxu0 0
  %1906 = vmatprep.mubr.bf16.mxu0 0
  %1907 = vmatmul.mubr.bf16.gmra.mrb[0].mxu0 %v1829
  %v1908 = vpop.f32.mrb[0].mxu0
  %v1909 = vadd.f32 %v1779, %v1908
  %v1910 = vpop.f32.mrb[0].mxu0
  %v1911 = vadd.f32 %v1783, %v1910
  %v1912 = vpop.f32.mrb[0].mxu0
  %v1913 = vadd.f32 %v1779, %v1912
  %v1914 = vpop.f32.mrb[0].mxu0
  %v1915 = vadd.f32 %v1783, %v1914
  %1916 = vdwg.mxu0
  %v1925 = vunpack.c.l.b16 %v1750
  %v1926 = vunpack.c.h.b16 %v1750
  %v1927 = vunpack.c.l.b16 %v1751
  %v1928 = vunpack.c.h.b16 %v1751
  %v1929 = vunpack.c.l.b16 %v1752
  %v1930 = vunpack.c.h.b16 %v1752
  %v1931 = vunpack.c.l.b16 %v1753
  %v1932 = vunpack.c.h.b16 %v1753
  %v1933 = vunpack.c.l.b16 %v1754
  %v1934 = vunpack.c.h.b16 %v1754
  %v1935 = vunpack.c.l.b16 %v1755
  %v1936 = vunpack.c.h.b16 %v1755
  %v1937 = vunpack.c.l.b16 %v1756
  %v1938 = vunpack.c.h.b16 %v1756
  %v1939 = vunpack.c.l.b16 %v1757
  %v1940 = vunpack.c.h.b16 %v1757
  %v1941 = vpack.c.b16 %v1927, %v1925
  %v1942 = vpack.c.b16 %v1928, %v1926
  %v1943 = vpack.c.b16 %v1931, %v1929
  %v1944 = vpack.c.b16 %v1932, %v1930
  %v1945 = vpack.c.b16 %v1935, %v1933
  %v1946 = vpack.c.b16 %v1936, %v1934
  %v1947 = vpack.c.b16 %v1939, %v1937
  %v1948 = vpack.c.b16 %v1940, %v1938
  %v1957 = vsel %vm1555, 0, 0
  %1959 = vmatprep.subr.bf16.mxu0 %v1942
  %1960 = vmatpush1.bf16.msra.mxu0 %v1941
  %1961 = vmatprep.subr.bf16.mxu0 %v1944
  %1962 = vmatpush1.bf16.msra.mxu0 %v1943
  %1963 = vmatprep.subr.bf16.mxu0 %v1946
  %1964 = vmatpush1.bf16.msra.mxu0 %v1945
  %1965 = vmatprep.subr.bf16.mxu0 %v1948
  %1966 = vmatpush1.bf16.msra.mxu0 %v1947
  %1967 = vmatprep.subr.bf16.mxu0 0
  %1968 = vmatpush1.bf16.msra.mxu0 0
  %1969 = vmatprep.subr.bf16.mxu0 0
  %1970 = vmatpush1.bf16.msra.mxu0 0
  %1971 = vmatprep.subr.bf16.mxu0 0
  %1972 = vmatpush1.bf16.msra.mxu0 0
  %1973 = vmatprep.subr.bf16.mxu0 0
  %1974 = vmatpush1.bf16.msra.mxu0 0
  %1975 = vmatprep.subr.bf16.mxu0 0
  %1976 = vmatpush1.bf16.msra.mxu0 0
  %1977 = vmatprep.subr.bf16.mxu0 0
  %1978 = vmatpush1.bf16.msra.mxu0 0
  %1979 = vmatprep.subr.bf16.mxu0 0
  %1980 = vmatpush1.bf16.msra.mxu0 0
  %1981 = vmatprep.subr.bf16.mxu0 0
  %1982 = vmatpush1.bf16.msra.mxu0 0
  %1983 = vmatprep.subr.bf16.mxu0 0
  %1984 = vmatpush1.bf16.msra.mxu0 0
  %1985 = vmatprep.subr.bf16.mxu0 0
  %1986 = vmatpush1.bf16.msra.mxu0 0
  %1987 = vmatprep.subr.bf16.mxu0 0
  %1988 = vmatpush1.bf16.msra.mxu0 0
  %1989 = vmatprep.subr.bf16.mxu0 0
  %1990 = vmatpush1.bf16.msra.mxu0 0
  %1991 = vmatprep.mubr.bf16.mxu0 0
  %1992 = vmatmul.mubr.bf16.gmra.mrb[0].mxu0 %v1957
  %v1993 = vpop.f32.mrb[0].mxu0
  %v1994 = vadd.f32 0.0, %v1993
  %v1995 = vpop.f32.mrb[0].mxu0
  %v1996 = vadd.f32 0.0, %v1995
  %v1997 = vpop.f32.mrb[0].mxu0
  %v1998 = vpop.f32.mrb[0].mxu0
  %1999 = vdwg.mxu0
  %v2000 = vadd.f32 %v1866, %v1994
  %v2001 = vadd.f32 %v1868, %v1996
  %v2010 = vunpack.c.l.b16 %v1758
  %v2011 = vunpack.c.h.b16 %v1758
  %v2012 = vunpack.c.l.b16 %v1759
  %v2013 = vunpack.c.h.b16 %v1759
  %v2014 = vunpack.c.l.b16 %v1760
  %v2015 = vunpack.c.h.b16 %v1760
  %v2016 = vunpack.c.l.b16 %v1761
  %v2017 = vunpack.c.h.b16 %v1761
  %v2018 = vunpack.c.l.b16 %v1762
  %v2019 = vunpack.c.h.b16 %v1762
  %v2020 = vunpack.c.l.b16 %v1763
  %v2021 = vunpack.c.h.b16 %v1763
  %v2022 = vunpack.c.l.b16 %v1764
  %v2023 = vunpack.c.h.b16 %v1764
  %v2024 = vunpack.c.l.b16 %v1765
  %v2025 = vunpack.c.h.b16 %v1765
  %v2026 = vpack.c.b16 %v2012, %v2010
  %v2027 = vpack.c.b16 %v2013, %v2011
  %v2028 = vpack.c.b16 %v2016, %v2014
  %v2029 = vpack.c.b16 %v2017, %v2015
  %v2030 = vpack.c.b16 %v2020, %v2018
  %v2031 = vpack.c.b16 %v2021, %v2019
  %v2032 = vpack.c.b16 %v2024, %v2022
  %v2033 = vpack.c.b16 %v2025, %v2023
  %2042 = vmatprep.subr.bf16.mxu0 %v2027
  %2043 = vmatpush1.bf16.msra.mxu0 %v2026
  %2044 = vmatprep.subr.bf16.mxu0 %v2029
  %2045 = vmatpush1.bf16.msra.mxu0 %v2028
  %2046 = vmatprep.subr.bf16.mxu0 %v2031
  %2047 = vmatpush1.bf16.msra.mxu0 %v2030
  %2048 = vmatprep.subr.bf16.mxu0 %v2033
  %2049 = vmatpush1.bf16.msra.mxu0 %v2032
  %2050 = vmatprep.subr.bf16.mxu0 0
  %2051 = vmatpush1.bf16.msra.mxu0 0
  %2052 = vmatprep.subr.bf16.mxu0 0
  %2053 = vmatpush1.bf16.msra.mxu0 0
  %2054 = vmatprep.subr.bf16.mxu0 0
  %2055 = vmatpush1.bf16.msra.mxu0 0
  %2056 = vmatprep.subr.bf16.mxu0 0
  %2057 = vmatpush1.bf16.msra.mxu0 0
  %2058 = vmatprep.subr.bf16.mxu0 0
  %2059 = vmatpush1.bf16.msra.mxu0 0
  %2060 = vmatprep.subr.bf16.mxu0 0
  %2061 = vmatpush1.bf16.msra.mxu0 0
  %2062 = vmatprep.subr.bf16.mxu0 0
  %2063 = vmatpush1.bf16.msra.mxu0 0
  %2064 = vmatprep.subr.bf16.mxu0 0
  %2065 = vmatpush1.bf16.msra.mxu0 0
  %2066 = vmatprep.subr.bf16.mxu0 0
  %2067 = vmatpush1.bf16.msra.mxu0 0
  %2068 = vmatprep.subr.bf16.mxu0 0
  %2069 = vmatpush1.bf16.msra.mxu0 0
  %2070 = vmatprep.subr.bf16.mxu0 0
  %2071 = vmatpush1.bf16.msra.mxu0 0
  %2072 = vmatprep.subr.bf16.mxu0 0
  %2073 = vmatpush1.bf16.msra.mxu0 0
  %2074 = vmatprep.mubr.bf16.mxu0 0
  %2075 = vmatmul.mubr.bf16.gmra.mrb[0].mxu0 %v1957
  %v2076 = vpop.f32.mrb[0].mxu0
  %v2077 = vadd.f32 0.0, %v2076
  %v2078 = vpop.f32.mrb[0].mxu0
  %v2079 = vadd.f32 0.0, %v2078
  %v2080 = vpop.f32.mrb[0].mxu0
  %v2081 = vpop.f32.mrb[0].mxu0
  %2082 = vdwg.mxu0
  %v2085 = vrot.slane %v2077, 2
  %v2086 = vrot.slane %v2079, 2
  %v2089 = vadd.f32 %v1913, %v2085
  %v2090 = vadd.f32 %v1915, %v2086
  %v2091 = vxor.u32 %v2000, 2147483648
  %v2092 = vxor.u32 %v2001, 2147483648
  %v2093 = vmul.f32 %v2091, 1.442695
  %v2094 = vpow.pop %v2093
  %v2095 = vmul.f32 %v2092, 1.442695
  %v2096 = vpow.pop %v2095
  %v2097 = vadd.f32 %v2094, 1.0
  %v2098 = vadd.f32 %v2096, 1.0
  %v2099 = vrcp.pop %v2097
  %v2100 = vmul.f32 1.0, %v2099
  %v2101 = vrcp.pop %v2098
  %v2102 = vmul.f32 1.0, %v2101
  %v2103 = vtanh.pop %v2001
  %v2104 = vxor.u32 %v2089, 2147483648
  %v2105 = vxor.u32 %v2090, 2147483648
  %v2106 = vmul.f32 %v2104, 1.442695
  %v2107 = vpow.pop %v2106
  %v2108 = vmul.f32 %v2105, 1.442695
  %v2109 = vpow.pop %v2108
  %v2110 = vadd.f32 %v2107, 1.0
  %v2111 = vadd.f32 %v2109, 1.0
  %v2112 = vrcp.pop %v2110
  %v2113 = vmul.f32 1.0, %v2112
  %v2114 = vrcp.pop %v2111
  %v2115 = vmul.f32 1.0, %v2114
  %v2116 = vtanh.pop %v2090
  %v2117 = vmul.f32 %v2100, 0.0
  %v2118 = vmul.f32 %v2100, %v2103
  %2120 = vrot.lane.b32.xlu0 %v2118, 64
  %v2121 = vpop.permute.xlu0 %2120
  %v2123 = vadd.f32 %v2117, %v2121
  %v2124 = vtanh.pop %v2123
  %v2125 = vmul.f32 %v2102, %v2124
  %v2126 = vmul.f32 %v2113, 0.0
  %v2127 = vmul.f32 %v2113, %v2116
  %2129 = vrot.lane.b32.xlu0 %v2127, 64
  %v2130 = vpop.permute.xlu0 %2129
  %v2132 = vadd.f32 %v2126, %v2130
  %v2133 = vtanh.pop %v2132
  %v2134 = vmul.f32 %v2115, %v2133
  %v2135 = vpack.c.bf16 %v2125, %v2125
  %2137 = vrot.lane.b32.xlu0 %v2135, 64
  %v2138 = vpop.permute.xlu0 %2137
  %v2140 = vsel %vm1555, %v2138, 0
  %2142 = vmatprep.subr.bf16.mxu0 %v1942
  %2143 = vmatpush1.bf16.msra.mxu0 %v1941
  %2144 = vmatprep.subr.bf16.mxu0 %v1944
  %2145 = vmatpush1.bf16.msra.mxu0 %v1943
  %2146 = vmatprep.subr.bf16.mxu0 %v1946
  %2147 = vmatpush1.bf16.msra.mxu0 %v1945
  %2148 = vmatprep.subr.bf16.mxu0 %v1948
  %2149 = vmatpush1.bf16.msra.mxu0 %v1947
  %2150 = vmatprep.subr.bf16.mxu0 0
  %2151 = vmatpush1.bf16.msra.mxu0 0
  %2152 = vmatprep.subr.bf16.mxu0 0
  %2153 = vmatpush1.bf16.msra.mxu0 0
  %2154 = vmatprep.subr.bf16.mxu0 0
  %2155 = vmatpush1.bf16.msra.mxu0 0
  %2156 = vmatprep.subr.bf16.mxu0 0
  %2157 = vmatpush1.bf16.msra.mxu0 0
  %2158 = vmatprep.subr.bf16.mxu0 0
  %2159 = vmatpush1.bf16.msra.mxu0 0
  %2160 = vmatprep.subr.bf16.mxu0 0
  %2161 = vmatpush1.bf16.msra.mxu0 0
  %2162 = vmatprep.subr.bf16.mxu0 0
  %2163 = vmatpush1.bf16.msra.mxu0 0
  %2164 = vmatprep.subr.bf16.mxu0 0
  %2165 = vmatpush1.bf16.msra.mxu0 0
  %2166 = vmatprep.subr.bf16.mxu0 0
  %2167 = vmatpush1.bf16.msra.mxu0 0
  %2168 = vmatprep.subr.bf16.mxu0 0
  %2169 = vmatpush1.bf16.msra.mxu0 0
  %2170 = vmatprep.subr.bf16.mxu0 0
  %2171 = vmatpush1.bf16.msra.mxu0 0
  %2172 = vmatprep.subr.bf16.mxu0 0
  %2173 = vmatpush1.bf16.msra.mxu0 0
  %2174 = vmatprep.mubr.bf16.mxu0 0
  %2175 = vmatmul.mubr.bf16.gmra.mrb[0].mxu0 %v2140
  %v2176 = vpop.f32.mrb[0].mxu0
  %v2177 = vadd.f32 0.0, %v2176
  %v2178 = vpop.f32.mrb[0].mxu0
  %v2179 = vadd.f32 0.0, %v2178
  %v2180 = vpop.f32.mrb[0].mxu0
  %v2181 = vpop.f32.mrb[0].mxu0
  %2182 = vdwg.mxu0
  %v2185 = vrot.slane %v2177, 6
  %v2186 = vrot.slane %v2179, 6
  %v2189 = vadd.f32 %v1866, %v2185
  %v2190 = vadd.f32 %v1868, %v2186
  %v2191 = vpack.c.bf16 %v2134, %v2134
  %v2193 = vrot.slane %v2191, 3
  %2194 = vrot.lane.b32.xlu0 %v2193, 64
  %v2195 = vpop.permute.xlu0 %2194
  %v2197 = vsel %vm1555, %v2195, 0
  %2199 = vmatprep.subr.bf16.mxu0 %v2027
  %2200 = vmatpush1.bf16.msra.mxu0 %v2026
  %2201 = vmatprep.subr.bf16.mxu0 %v2029
  %2202 = vmatpush1.bf16.msra.mxu0 %v2028
  %2203 = vmatprep.subr.bf16.mxu0 %v2031
  %2204 = vmatpush1.bf16.msra.mxu0 %v2030
  %2205 = vmatprep.subr.bf16.mxu0 %v2033
  %2206 = vmatpush1.bf16.msra.mxu0 %v2032
  %2207 = vmatprep.subr.bf16.mxu0 0
  %2208 = vmatpush1.bf16.msra.mxu0 0
  %2209 = vmatprep.subr.bf16.mxu0 0
  %2210 = vmatpush1.bf16.msra.mxu0 0
  %2211 = vmatprep.subr.bf16.mxu0 0
  %2212 = vmatpush1.bf16.msra.mxu0 0
  %2213 = vmatprep.subr.bf16.mxu0 0
  %2214 = vmatpush1.bf16.msra.mxu0 0
  %2215 = vmatprep.subr.bf16.mxu0 0
  %2216 = vmatpush1.bf16.msra.mxu0 0
  %2217 = vmatprep.subr.bf16.mxu0 0
  %2218 = vmatpush1.bf16.msra.mxu0 0
  %2219 = vmatprep.subr.bf16.mxu0 0
  %2220 = vmatpush1.bf16.msra.mxu0 0
  %2221 = vmatprep.subr.bf16.mxu0 0
  %2222 = vmatpush1.bf16.msra.mxu0 0
  %2223 = vmatprep.subr.bf16.mxu0 0
  %2224 = vmatpush1.bf16.msra.mxu0 0
  %2225 = vmatprep.subr.bf16.mxu0 0
  %2226 = vmatpush1.bf16.msra.mxu0 0
  %2227 = vmatprep.subr.bf16.mxu0 0
  %2228 = vmatpush1.bf16.msra.mxu0 0
  %2229 = vmatprep.subr.bf16.mxu0 0
  %2230 = vmatpush1.bf16.msra.mxu0 0
  %2231 = vmatprep.mubr.bf16.mxu0 0
  %2232 = vmatmul.mubr.bf16.gmra.mrb[0].mxu0 %v2197
  %v2233 = vpop.f32.mrb[0].mxu0
  %v2234 = vadd.f32 0.0, %v2233
  %v2235 = vpop.f32.mrb[0].mxu0
  %v2236 = vadd.f32 0.0, %v2235
  %v2237 = vpop.f32.mrb[0].mxu0
  %v2238 = vpop.f32.mrb[0].mxu0
  %2239 = vdwg.mxu0
  %v2242 = vrot.slane %v2234, 4
  %v2243 = vrot.slane %v2236, 4
  %v2246 = vadd.f32 %v1913, %v2242
  %v2247 = vadd.f32 %v1915, %v2243
  %v2248 = vxor.u32 %v2189, 2147483648
  %v2249 = vxor.u32 %v2190, 2147483648
  %v2250 = vmul.f32 %v2248, 1.442695
  %v2251 = vpow.pop %v2250
  %v2252 = vmul.f32 %v2249, 1.442695
  %v2253 = vpow.pop %v2252
  %v2254 = vadd.f32 %v2251, 1.0
  %v2255 = vadd.f32 %v2253, 1.0
  %v2256 = vrcp.pop %v2254
  %v2257 = vmul.f32 1.0, %v2256
  %v2258 = vrcp.pop %v2255
  %v2259 = vmul.f32 1.0, %v2258
  %v2260 = vtanh.pop %v2190
  %v2261 = vxor.u32 %v2246, 2147483648
  %v2262 = vxor.u32 %v2247, 2147483648
  %v2263 = vmul.f32 %v2261, 1.442695
  %v2264 = vpow.pop %v2263
  %v2265 = vmul.f32 %v2262, 1.442695
  %v2266 = vpow.pop %v2265
  %v2267 = vadd.f32 %v2264, 1.0
  %v2268 = vadd.f32 %v2266, 1.0
  %v2269 = vrcp.pop %v2267
  %v2270 = vmul.f32 1.0, %v2269
  %v2271 = vrcp.pop %v2268
  %v2272 = vmul.f32 1.0, %v2271
  %v2273 = vtanh.pop %v2247
  %v2275 = vrot.slane %v2123, 6
  %v2277 = vmul.f32 %v2257, %v2275
  %v2278 = vmul.f32 %v2257, %v2260
  %2280 = vrot.lane.b32.xlu0 %v2278, 64
  %v2281 = vpop.permute.xlu0 %2280
  %v2283 = vadd.f32 %v2277, %v2281
  %v2284 = vtanh.pop %v2283
  %v2285 = vmul.f32 %v2259, %v2284
  %v2287 = vrot.slane %v2132, 2
  %v2289 = vmul.f32 %v2270, %v2287
  %v2290 = vmul.f32 %v2270, %v2273
  %2292 = vrot.lane.b32.xlu0 %v2290, 64
  %v2293 = vpop.permute.xlu0 %2292
  %v2295 = vadd.f32 %v2289, %v2293
  %v2296 = vtanh.pop %v2295
  %v2297 = vmul.f32 %v2272, %v2296
  %v2298 = vpack.c.bf16 %v2285, %v2285
  %v2300 = vrot.slane %v2298, 1
  %2301 = vrot.lane.b32.xlu0 %v2300, 64
  %v2302 = vpop.permute.xlu0 %2301
  %v2304 = vsel %vm1555, %v2302, 0
  %2306 = vmatprep.subr.bf16.mxu0 %v1942
  %2307 = vmatpush1.bf16.msra.mxu0 %v1941
  %2308 = vmatprep.subr.bf16.mxu0 %v1944
  %2309 = vmatpush1.bf16.msra.mxu0 %v1943
  %2310 = vmatprep.subr.bf16.mxu0 %v1946
  %2311 = vmatpush1.bf16.msra.mxu0 %v1945
  %2312 = vmatprep.subr.bf16.mxu0 %v1948
  %2313 = vmatpush1.bf16.msra.mxu0 %v1947
  %2314 = vmatprep.subr.bf16.mxu0 0
  %2315 = vmatpush1.bf16.msra.mxu0 0
  %2316 = vmatprep.subr.bf16.mxu0 0
  %2317 = vmatpush1.bf16.msra.mxu0 0
  %2318 = vmatprep.subr.bf16.mxu0 0
  %2319 = vmatpush1.bf16.msra.mxu0 0
  %2320 = vmatprep.subr.bf16.mxu0 0
  %2321 = vmatpush1.bf16.msra.mxu0 0
  %2322 = vmatprep.subr.bf16.mxu0 0
  %2323 = vmatpush1.bf16.msra.mxu0 0
  %2324 = vmatprep.subr.bf16.mxu0 0
  %2325 = vmatpush1.bf16.msra.mxu0 0
  %2326 = vmatprep.subr.bf16.mxu0 0
  %2327 = vmatpush1.bf16.msra.mxu0 0
  %2328 = vmatprep.subr.bf16.mxu0 0
  %2329 = vmatpush1.bf16.msra.mxu0 0
  %2330 = vmatprep.subr.bf16.mxu0 0
  %2331 = vmatpush1.bf16.msra.mxu0 0
  %2332 = vmatprep.subr.bf16.mxu0 0
  %2333 = vmatpush1.bf16.msra.mxu0 0
  %2334 = vmatprep.subr.bf16.mxu0 0
  %2335 = vmatpush1.bf16.msra.mxu0 0
  %2336 = vmatprep.subr.bf16.mxu0 0
  %2337 = vmatpush1.bf16.msra.mxu0 0
  %2338 = vmatprep.mubr.bf16.mxu0 0
  %2339 = vmatmul.mubr.bf16.gmra.mrb[0].mxu0 %v2304
  %v2340 = vpop.f32.mrb[0].mxu0
  %v2341 = vadd.f32 0.0, %v2340
  %v2342 = vpop.f32.mrb[0].mxu0
  %v2343 = vadd.f32 0.0, %v2342
  %v2344 = vpop.f32.mrb[0].mxu0
  %v2345 = vpop.f32.mrb[0].mxu0
  %2346 = vdwg.mxu0
  %v2349 = vrot.slane %v2341, 4
  %v2350 = vrot.slane %v2343, 4
  %v2353 = vadd.f32 %v1866, %v2349
  %v2354 = vadd.f32 %v1868, %v2350
  %v2355 = vpack.c.bf16 %v2297, %v2297
  %v2357 = vrot.slane %v2355, 2
  %2358 = vrot.lane.b32.xlu0 %v2357, 64
  %v2359 = vpop.permute.xlu0 %2358
  %v2361 = vsel %vm1555, %v2359, 0
  %2363 = vmatprep.subr.bf16.mxu0 %v2027
  %2364 = vmatpush1.bf16.msra.mxu0 %v2026
  %2365 = vmatprep.subr.bf16.mxu0 %v2029
  %2366 = vmatpush1.bf16.msra.mxu0 %v2028
  %2367 = vmatprep.subr.bf16.mxu0 %v2031
  %2368 = vmatpush1.bf16.msra.mxu0 %v2030
  %2369 = vmatprep.subr.bf16.mxu0 %v2033
  %2370 = vmatpush1.bf16.msra.mxu0 %v2032
  %2371 = vmatprep.subr.bf16.mxu0 0
  %2372 = vmatpush1.bf16.msra.mxu0 0
  %2373 = vmatprep.subr.bf16.mxu0 0
  %2374 = vmatpush1.bf16.msra.mxu0 0
  %2375 = vmatprep.subr.bf16.mxu0 0
  %2376 = vmatpush1.bf16.msra.mxu0 0
  %2377 = vmatprep.subr.bf16.mxu0 0
  %2378 = vmatpush1.bf16.msra.mxu0 0
  %2379 = vmatprep.subr.bf16.mxu0 0
  %2380 = vmatpush1.bf16.msra.mxu0 0
  %2381 = vmatprep.subr.bf16.mxu0 0
  %2382 = vmatpush1.bf16.msra.mxu0 0
  %2383 = vmatprep.subr.bf16.mxu0 0
  %2384 = vmatpush1.bf16.msra.mxu0 0
  %2385 = vmatprep.subr.bf16.mxu0 0
  %2386 = vmatpush1.bf16.msra.mxu0 0
  %2387 = vmatprep.subr.bf16.mxu0 0
  %2388 = vmatpush1.bf16.msra.mxu0 0
  %2389 = vmatprep.subr.bf16.mxu0 0
  %2390 = vmatpush1.bf16.msra.mxu0 0
  %2391 = vmatprep.subr.bf16.mxu0 0
  %2392 = vmatpush1.bf16.msra.mxu0 0
  %2393 = vmatprep.subr.bf16.mxu0 0
  %2394 = vmatpush1.bf16.msra.mxu0 0
  %2395 = vmatprep.mubr.bf16.mxu0 0
  %2396 = vmatmul.mubr.bf16.gmra.mrb[0].mxu0 %v2361
  %v2397 = vpop.f32.mrb[0].mxu0
  %v2398 = vadd.f32 0.0, %v2397
  %v2399 = vpop.f32.mrb[0].mxu0
  %v2400 = vadd.f32 0.0, %v2399
  %v2401 = vpop.f32.mrb[0].mxu0
  %v2402 = vpop.f32.mrb[0].mxu0
  %2403 = vdwg.mxu0
  %v2406 = vrot.slane %v2398, 6
  %v2407 = vrot.slane %v2400, 6
  %v2410 = vadd.f32 %v1913, %v2406
  %v2411 = vadd.f32 %v1915, %v2407
  %v2412 = vxor.u32 %v2353, 2147483648
  %v2413 = vxor.u32 %v2354, 2147483648
  %v2414 = vmul.f32 %v2412, 1.442695
  %v2415 = vpow.pop %v2414
  %v2416 = vmul.f32 %v2413, 1.442695
  %v2417 = vpow.pop %v2416
  %v2418 = vadd.f32 %v2415, 1.0
  %v2419 = vadd.f32 %v2417, 1.0
  %v2420 = vrcp.pop %v2418
  %v2421 = vmul.f32 1.0, %v2420
  %v2422 = vrcp.pop %v2419
  %v2423 = vmul.f32 1.0, %v2422
  %v2424 = vtanh.pop %v2354
  %v2425 = vxor.u32 %v2410, 2147483648
  %v2426 = vxor.u32 %v2411, 2147483648
  %v2427 = vmul.f32 %v2425, 1.442695
  %v2428 = vpow.pop %v2427
  %v2429 = vmul.f32 %v2426, 1.442695
  %v2430 = vpow.pop %v2429
  %v2431 = vadd.f32 %v2428, 1.0
  %v2432 = vadd.f32 %v2430, 1.0
  %v2433 = vrcp.pop %v2431
  %v2434 = vmul.f32 1.0, %v2433
  %v2435 = vrcp.pop %v2432
  %v2436 = vmul.f32 1.0, %v2435
  %v2437 = vtanh.pop %v2411
  %v2439 = vrot.slane %v2283, 6
  %v2441 = vmul.f32 %v2421, %v2439
  %v2442 = vmul.f32 %v2421, %v2424
  %2444 = vrot.lane.b32.xlu0 %v2442, 64
  %v2445 = vpop.permute.xlu0 %2444
  %v2447 = vadd.f32 %v2441, %v2445
  %v2448 = vtanh.pop %v2447
  %v2449 = vmul.f32 %v2423, %v2448
  %v2451 = vrot.slane %v2295, 2
  %v2453 = vmul.f32 %v2434, %v2451
  %v2454 = vmul.f32 %v2434, %v2437
  %2456 = vrot.lane.b32.xlu0 %v2454, 64
  %v2457 = vpop.permute.xlu0 %2456
  %v2459 = vadd.f32 %v2453, %v2457
  %v2460 = vtanh.pop %v2459
  %v2461 = vmul.f32 %v2436, %v2460
  %v2462 = vpack.c.bf16 %v2449, %v2449
  %v2464 = vrot.slane %v2462, 2
  %2465 = vrot.lane.b32.xlu0 %v2464, 64
  %v2466 = vpop.permute.xlu0 %2465
  %v2468 = vsel %vm1555, %v2466, 0
  %2470 = vmatprep.subr.bf16.mxu0 %v1942
  %2471 = vmatpush1.bf16.msra.mxu0 %v1941
  %2472 = vmatprep.subr.bf16.mxu0 %v1944
  %2473 = vmatpush1.bf16.msra.mxu0 %v1943
  %2474 = vmatprep.subr.bf16.mxu0 %v1946
  %2475 = vmatpush1.bf16.msra.mxu0 %v1945
  %2476 = vmatprep.subr.bf16.mxu0 %v1948
  %2477 = vmatpush1.bf16.msra.mxu0 %v1947
  %2478 = vmatprep.subr.bf16.mxu0 0
  %2479 = vmatpush1.bf16.msra.mxu0 0
  %2480 = vmatprep.subr.bf16.mxu0 0
  %2481 = vmatpush1.bf16.msra.mxu0 0
  %2482 = vmatprep.subr.bf16.mxu0 0
  %2483 = vmatpush1.bf16.msra.mxu0 0
  %2484 = vmatprep.subr.bf16.mxu0 0
  %2485 = vmatpush1.bf16.msra.mxu0 0
  %2486 = vmatprep.subr.bf16.mxu0 0
  %2487 = vmatpush1.bf16.msra.mxu0 0
  %2488 = vmatprep.subr.bf16.mxu0 0
  %2489 = vmatpush1.bf16.msra.mxu0 0
  %2490 = vmatprep.subr.bf16.mxu0 0
  %2491 = vmatpush1.bf16.msra.mxu0 0
  %2492 = vmatprep.subr.bf16.mxu0 0
  %2493 = vmatpush1.bf16.msra.mxu0 0
  %2494 = vmatprep.subr.bf16.mxu0 0
  %2495 = vmatpush1.bf16.msra.mxu0 0
  %2496 = vmatprep.subr.bf16.mxu0 0
  %2497 = vmatpush1.bf16.msra.mxu0 0
  %2498 = vmatprep.subr.bf16.mxu0 0
  %2499 = vmatpush1.bf16.msra.mxu0 0
  %2500 = vmatprep.subr.bf16.mxu0 0
  %2501 = vmatpush1.bf16.msra.mxu0 0
  %2502 = vmatprep.mubr.bf16.mxu0 0
  %2503 = vmatmul.mubr.bf16.gmra.mrb[0].mxu0 %v2468
  %v2504 = vpop.f32.mrb[0].mxu0
  %v2505 = vadd.f32 0.0, %v2504
  %v2506 = vpop.f32.mrb[0].mxu0
  %v2507 = vadd.f32 0.0, %v2506
  %v2508 = vpop.f32.mrb[0].mxu0
  %v2509 = vpop.f32.mrb[0].mxu0
  %2510 = vdwg.mxu0
  %v2513 = vrot.slane %v2505, 2
  %v2514 = vrot.slane %v2507, 2
  %v2517 = vadd.f32 %v1866, %v2513
  %v2518 = vadd.f32 %v1868, %v2514
  %v2519 = vpack.c.bf16 %v2461, %v2461
  %v2521 = vrot.slane %v2519, 1
  %2522 = vrot.lane.b32.xlu0 %v2521, 64
  %v2523 = vpop.permute.xlu0 %2522
  %v2525 = vsel %vm1555, %v2523, 0
  %2527 = vmatprep.subr.bf16.mxu0 %v2027
  %2528 = vmatpush1.bf16.msra.mxu0 %v2026
  %2529 = vmatprep.subr.bf16.mxu0 %v2029
  %2530 = vmatpush1.bf16.msra.mxu0 %v2028
  %2531 = vmatprep.subr.bf16.mxu0 %v2031
  %2532 = vmatpush1.bf16.msra.mxu0 %v2030
  %2533 = vmatprep.subr.bf16.mxu0 %v2033
  %2534 = vmatpush1.bf16.msra.mxu0 %v2032
  %2535 = vmatprep.subr.bf16.mxu0 0
  %2536 = vmatpush1.bf16.msra.mxu0 0
  %2537 = vmatprep.subr.bf16.mxu0 0
  %2538 = vmatpush1.bf16.msra.mxu0 0
  %2539 = vmatprep.subr.bf16.mxu0 0
  %2540 = vmatpush1.bf16.msra.mxu0 0
  %2541 = vmatprep.subr.bf16.mxu0 0
  %2542 = vmatpush1.bf16.msra.mxu0 0
  %2543 = vmatprep.subr.bf16.mxu0 0
  %2544 = vmatpush1.bf16.msra.mxu0 0
  %2545 = vmatprep.subr.bf16.mxu0 0
  %2546 = vmatpush1.bf16.msra.mxu0 0
  %2547 = vmatprep.subr.bf16.mxu0 0
  %2548 = vmatpush1.bf16.msra.mxu0 0
  %2549 = vmatprep.subr.bf16.mxu0 0
  %2550 = vmatpush1.bf16.msra.mxu0 0
  %2551 = vmatprep.subr.bf16.mxu0 0
  %2552 = vmatpush1.bf16.msra.mxu0 0
  %2553 = vmatprep.subr.bf16.mxu0 0
  %2554 = vmatpush1.bf16.msra.mxu0 0
  %2555 = vmatprep.subr.bf16.mxu0 0
  %2556 = vmatpush1.bf16.msra.mxu0 0
  %2557 = vmatprep.subr.bf16.mxu0 0
  %2558 = vmatpush1.bf16.msra.mxu0 0
  %2559 = vmatprep.mubr.bf16.mxu0 0
  %2560 = vmatmul.mubr.bf16.gmra.mrb[0].mxu0 %v2525
  %v2561 = vpop.f32.mrb[0].mxu0
  %v2562 = vadd.f32 0.0, %v2561
  %v2563 = vpop.f32.mrb[0].mxu0
  %v2564 = vadd.f32 0.0, %v2563
  %v2565 = vpop.f32.mrb[0].mxu0
  %v2566 = vpop.f32.mrb[0].mxu0
  %2567 = vdwg.mxu0
  %v2568 = vadd.f32 %v1913, %v2562
  %v2569 = vadd.f32 %v1915, %v2564
  %v2570 = vxor.u32 %v2517, 2147483648
  %v2571 = vxor.u32 %v2518, 2147483648
  %v2572 = vmul.f32 %v2570, 1.442695
  %v2573 = vpow.pop %v2572
  %v2574 = vmul.f32 %v2571, 1.442695
  %v2575 = vpow.pop %v2574
  %v2576 = vadd.f32 %v2573, 1.0
  %v2577 = vadd.f32 %v2575, 1.0
  %v2578 = vrcp.pop %v2576
  %v2579 = vmul.f32 1.0, %v2578
  %v2580 = vrcp.pop %v2577
  %v2581 = vmul.f32 1.0, %v2580
  %v2582 = vtanh.pop %v2518
  %v2583 = vxor.u32 %v2568, 2147483648
  %v2584 = vxor.u32 %v2569, 2147483648
  %v2585 = vmul.f32 %v2583, 1.442695
  %v2586 = vpow.pop %v2585
  %v2587 = vmul.f32 %v2584, 1.442695
  %v2588 = vpow.pop %v2587
  %v2589 = vadd.f32 %v2586, 1.0
  %v2590 = vadd.f32 %v2588, 1.0
  %v2591 = vrcp.pop %v2589
  %v2592 = vmul.f32 1.0, %v2591
  %v2593 = vrcp.pop %v2590
  %v2594 = vmul.f32 1.0, %v2593
  %v2595 = vtanh.pop %v2569
  %v2597 = vrot.slane %v2447, 6
  %v2599 = vmul.f32 %v2579, %v2597
  %v2600 = vmul.f32 %v2579, %v2582
  %2602 = vrot.lane.b32.xlu0 %v2600, 64
  %v2603 = vpop.permute.xlu0 %2602
  %v2605 = vadd.f32 %v2599, %v2603
  %v2606 = vtanh.pop %v2605
  %v2607 = vmul.f32 %v2581, %v2606
  %v2609 = vrot.slane %v2459, 2
  %v2611 = vmul.f32 %v2592, %v2609
  %v2612 = vmul.f32 %v2592, %v2595
  %2614 = vrot.lane.b32.xlu0 %v2612, 64
  %v2615 = vpop.permute.xlu0 %2614
  %v2617 = vadd.f32 %v2611, %v2615
  %v2618 = vtanh.pop %v2617
  %v2619 = vmul.f32 %v2594, %v2618
  %v2620 = vpack.c.bf16 %v2607, %v2607
  %v2622 = vrot.slane %v2620, 3
  %2623 = vrot.lane.b32.xlu0 %v2622, 64
  %v2624 = vpop.permute.xlu0 %2623
  %v2626 = vsel %vm1555, %v2624, 0
  %2628 = vmatprep.subr.bf16.mxu0 %v1942
  %2629 = vmatpush1.bf16.msra.mxu0 %v1941
  %2630 = vmatprep.subr.bf16.mxu0 %v1944
  %2631 = vmatpush1.bf16.msra.mxu0 %v1943
  %2632 = vmatprep.subr.bf16.mxu0 %v1946
  %2633 = vmatpush1.bf16.msra.mxu0 %v1945
  %2634 = vmatprep.subr.bf16.mxu0 %v1948
  %2635 = vmatpush1.bf16.msra.mxu0 %v1947
  %2636 = vmatprep.subr.bf16.mxu0 0
  %2637 = vmatpush1.bf16.msra.mxu0 0
  %2638 = vmatprep.subr.bf16.mxu0 0
  %2639 = vmatpush1.bf16.msra.mxu0 0
  %2640 = vmatprep.subr.bf16.mxu0 0
  %2641 = vmatpush1.bf16.msra.mxu0 0
  %2642 = vmatprep.subr.bf16.mxu0 0
  %2643 = vmatpush1.bf16.msra.mxu0 0
  %2644 = vmatprep.subr.bf16.mxu0 0
  %2645 = vmatpush1.bf16.msra.mxu0 0
  %2646 = vmatprep.subr.bf16.mxu0 0
  %2647 = vmatpush1.bf16.msra.mxu0 0
  %2648 = vmatprep.subr.bf16.mxu0 0
  %2649 = vmatpush1.bf16.msra.mxu0 0
  %2650 = vmatprep.subr.bf16.mxu0 0
  %2651 = vmatpush1.bf16.msra.mxu0 0
  %2652 = vmatprep.subr.bf16.mxu0 0
  %2653 = vmatpush1.bf16.msra.mxu0 0
  %2654 = vmatprep.subr.bf16.mxu0 0
  %2655 = vmatpush1.bf16.msra.mxu0 0
  %2656 = vmatprep.subr.bf16.mxu0 0
  %2657 = vmatpush1.bf16.msra.mxu0 0
  %2658 = vmatprep.subr.bf16.mxu0 0
  %2659 = vmatpush1.bf16.msra.mxu0 0
  %2660 = vmatprep.mubr.bf16.mxu0 0
  %2661 = vmatmul.mubr.bf16.gmra.mrb[0].mxu0 %v2626
  %v2662 = vpop.f32.mrb[0].mxu0
  %v2663 = vadd.f32 0.0, %v2662
  %v2664 = vpop.f32.mrb[0].mxu0
  %v2665 = vadd.f32 0.0, %v2664
  %v2666 = vpop.f32.mrb[0].mxu0
  %v2667 = vpop.f32.mrb[0].mxu0
  %2668 = vdwg.mxu0
  %v2669 = vadd.f32 %v1870, %v2663
  %v2670 = vadd.f32 %v1872, %v2665
  %v2671 = vpack.c.bf16 %v2619, %v2619
  %2673 = vrot.lane.b32.xlu0 %v2671, 64
  %v2674 = vpop.permute.xlu0 %2673
  %v2676 = vsel %vm1555, %v2674, 0
  %2678 = vmatprep.subr.bf16.mxu0 %v2027
  %2679 = vmatpush1.bf16.msra.mxu0 %v2026
  %2680 = vmatprep.subr.bf16.mxu0 %v2029
  %2681 = vmatpush1.bf16.msra.mxu0 %v2028
  %2682 = vmatprep.subr.bf16.mxu0 %v2031
  %2683 = vmatpush1.bf16.msra.mxu0 %v2030
  %2684 = vmatprep.subr.bf16.mxu0 %v2033
  %2685 = vmatpush1.bf16.msra.mxu0 %v2032
  %2686 = vmatprep.subr.bf16.mxu0 0
  %2687 = vmatpush1.bf16.msra.mxu0 0
  %2688 = vmatprep.subr.bf16.mxu0 0
  %2689 = vmatpush1.bf16.msra.mxu0 0
  %2690 = vmatprep.subr.bf16.mxu0 0
  %2691 = vmatpush1.bf16.msra.mxu0 0
  %2692 = vmatprep.subr.bf16.mxu0 0
  %2693 = vmatpush1.bf16.msra.mxu0 0
  %2694 = vmatprep.subr.bf16.mxu0 0
  %2695 = vmatpush1.bf16.msra.mxu0 0
  %2696 = vmatprep.subr.bf16.mxu0 0
  %2697 = vmatpush1.bf16.msra.mxu0 0
  %2698 = vmatprep.subr.bf16.mxu0 0
  %2699 = vmatpush1.bf16.msra.mxu0 0
  %2700 = vmatprep.subr.bf16.mxu0 0
  %2701 = vmatpush1.bf16.msra.mxu0 0
  %2702 = vmatprep.subr.bf16.mxu0 0
  %2703 = vmatpush1.bf16.msra.mxu0 0
  %2704 = vmatprep.subr.bf16.mxu0 0
  %2705 = vmatpush1.bf16.msra.mxu0 0
  %2706 = vmatprep.subr.bf16.mxu0 0
  %2707 = vmatpush1.bf16.msra.mxu0 0
  %2708 = vmatprep.subr.bf16.mxu0 0
  %2709 = vmatpush1.bf16.msra.mxu0 0
  %2710 = vmatprep.mubr.bf16.mxu0 0
  %2711 = vmatmul.mubr.bf16.gmra.mrb[0].mxu0 %v2676
  %v2712 = vpop.f32.mrb[0].mxu0
  %v2713 = vadd.f32 0.0, %v2712
  %v2714 = vpop.f32.mrb[0].mxu0
  %v2715 = vadd.f32 0.0, %v2714
  %v2716 = vpop.f32.mrb[0].mxu0
  %v2717 = vpop.f32.mrb[0].mxu0
  %2718 = vdwg.mxu0
  %v2721 = vrot.slane %v2713, 2
  %v2722 = vrot.slane %v2715, 2
  %v2725 = vadd.f32 %v1909, %v2721
  %v2726 = vadd.f32 %v1911, %v2722
  %v2727 = vxor.u32 %v2669, 2147483648
  %v2728 = vxor.u32 %v2670, 2147483648
  %v2729 = vmul.f32 %v2727, 1.442695
  %v2730 = vpow.pop %v2729
  %v2731 = vmul.f32 %v2728, 1.442695
  %v2732 = vpow.pop %v2731
  %v2733 = vadd.f32 %v2730, 1.0
  %v2734 = vadd.f32 %v2732, 1.0
  %v2735 = vrcp.pop %v2733
  %v2736 = vmul.f32 1.0, %v2735
  %v2737 = vrcp.pop %v2734
  %v2738 = vmul.f32 1.0, %v2737
  %v2739 = vtanh.pop %v2670
  %v2740 = vxor.u32 %v2725, 2147483648
  %v2741 = vxor.u32 %v2726, 2147483648
  %v2742 = vmul.f32 %v2740, 1.442695
  %v2743 = vpow.pop %v2742
  %v2744 = vmul.f32 %v2741, 1.442695
  %v2745 = vpow.pop %v2744
  %v2746 = vadd.f32 %v2743, 1.0
  %v2747 = vadd.f32 %v2745, 1.0
  %v2748 = vrcp.pop %v2746
  %v2749 = vmul.f32 1.0, %v2748
  %v2750 = vrcp.pop %v2747
  %v2751 = vmul.f32 1.0, %v2750
  %v2752 = vtanh.pop %v2726
  %v2754 = vrot.slane %v2605, 6
  %v2756 = vmul.f32 %v2736, %v2754
  %v2757 = vmul.f32 %v2736, %v2739
  %2759 = vrot.lane.b32.xlu0 %v2757, 64
  %v2760 = vpop.permute.xlu0 %2759
  %v2762 = vadd.f32 %v2756, %v2760
  %v2763 = vtanh.pop %v2762
  %v2764 = vmul.f32 %v2738, %v2763
  %v2766 = vrot.slane %v2617, 2
  %v2768 = vmul.f32 %v2749, %v2766
  %v2769 = vmul.f32 %v2749, %v2752
  %2771 = vrot.lane.b32.xlu0 %v2769, 64
  %v2772 = vpop.permute.xlu0 %2771
  %v2774 = vadd.f32 %v2768, %v2772
  %v2775 = vtanh.pop %v2774
  %v2776 = vmul.f32 %v2751, %v2775
  %v2777 = vpack.c.bf16 %v2764, %v2764
  %2779 = vrot.lane.b32.xlu0 %v2777, 64
  %v2780 = vpop.permute.xlu0 %2779
  %v2782 = vsel %vm1555, %v2780, 0
  %2784 = vmatprep.subr.bf16.mxu0 %v1942
  %2785 = vmatpush1.bf16.msra.mxu0 %v1941
  %2786 = vmatprep.subr.bf16.mxu0 %v1944
  %2787 = vmatpush1.bf16.msra.mxu0 %v1943
  %2788 = vmatprep.subr.bf16.mxu0 %v1946
  %2789 = vmatpush1.bf16.msra.mxu0 %v1945
  %2790 = vmatprep.subr.bf16.mxu0 %v1948
  %2791 = vmatpush1.bf16.msra.mxu0 %v1947
  %2792 = vmatprep.subr.bf16.mxu0 0
  %2793 = vmatpush1.bf16.msra.mxu0 0
  %2794 = vmatprep.subr.bf16.mxu0 0
  %2795 = vmatpush1.bf16.msra.mxu0 0
  %2796 = vmatprep.subr.bf16.mxu0 0
  %2797 = vmatpush1.bf16.msra.mxu0 0
  %2798 = vmatprep.subr.bf16.mxu0 0
  %2799 = vmatpush1.bf16.msra.mxu0 0
  %2800 = vmatprep.subr.bf16.mxu0 0
  %2801 = vmatpush1.bf16.msra.mxu0 0
  %2802 = vmatprep.subr.bf16.mxu0 0
  %2803 = vmatpush1.bf16.msra.mxu0 0
  %2804 = vmatprep.subr.bf16.mxu0 0
  %2805 = vmatpush1.bf16.msra.mxu0 0
  %2806 = vmatprep.subr.bf16.mxu0 0
  %2807 = vmatpush1.bf16.msra.mxu0 0
  %2808 = vmatprep.subr.bf16.mxu0 0
  %2809 = vmatpush1.bf16.msra.mxu0 0
  %2810 = vmatprep.subr.bf16.mxu0 0
  %2811 = vmatpush1.bf16.msra.mxu0 0
  %2812 = vmatprep.subr.bf16.mxu0 0
  %2813 = vmatpush1.bf16.msra.mxu0 0
  %2814 = vmatprep.subr.bf16.mxu0 0
  %2815 = vmatpush1.bf16.msra.mxu0 0
  %2816 = vmatprep.mubr.bf16.mxu0 0
  %2817 = vmatmul.mubr.bf16.gmra.mrb[0].mxu0 %v2782
  %v2818 = vpop.f32.mrb[0].mxu0
  %v2819 = vadd.f32 0.0, %v2818
  %v2820 = vpop.f32.mrb[0].mxu0
  %v2821 = vadd.f32 0.0, %v2820
  %v2822 = vpop.f32.mrb[0].mxu0
  %v2823 = vpop.f32.mrb[0].mxu0
  %2824 = vdwg.mxu0
  %v2827 = vrot.slane %v2819, 6
  %v2828 = vrot.slane %v2821, 6
  %v2831 = vadd.f32 %v1870, %v2827
  %v2832 = vadd.f32 %v1872, %v2828
  %v2833 = vpack.c.bf16 %v2776, %v2776
  %v2835 = vrot.slane %v2833, 3
  %2836 = vrot.lane.b32.xlu0 %v2835, 64
  %v2837 = vpop.permute.xlu0 %2836
  %v2839 = vsel %vm1555, %v2837, 0
  %2841 = vmatprep.subr.bf16.mxu0 %v2027
  %2842 = vmatpush1.bf16.msra.mxu0 %v2026
  %2843 = vmatprep.subr.bf16.mxu0 %v2029
  %2844 = vmatpush1.bf16.msra.mxu0 %v2028
  %2845 = vmatprep.subr.bf16.mxu0 %v2031
  %2846 = vmatpush1.bf16.msra.mxu0 %v2030
  %2847 = vmatprep.subr.bf16.mxu0 %v2033
  %2848 = vmatpush1.bf16.msra.mxu0 %v2032
  %2849 = vmatprep.subr.bf16.mxu0 0
  %2850 = vmatpush1.bf16.msra.mxu0 0
  %2851 = vmatprep.subr.bf16.mxu0 0
  %2852 = vmatpush1.bf16.msra.mxu0 0
  %2853 = vmatprep.subr.bf16.mxu0 0
  %2854 = vmatpush1.bf16.msra.mxu0 0
  %2855 = vmatprep.subr.bf16.mxu0 0
  %2856 = vmatpush1.bf16.msra.mxu0 0
  %2857 = vmatprep.subr.bf16.mxu0 0
  %2858 = vmatpush1.bf16.msra.mxu0 0
  %2859 = vmatprep.subr.bf16.mxu0 0
  %2860 = vmatpush1.bf16.msra.mxu0 0
  %2861 = vmatprep.subr.bf16.mxu0 0
  %2862 = vmatpush1.bf16.msra.mxu0 0
  %2863 = vmatprep.subr.bf16.mxu0 0
  %2864 = vmatpush1.bf16.msra.mxu0 0
  %2865 = vmatprep.subr.bf16.mxu0 0
  %2866 = vmatpush1.bf16.msra.mxu0 0
  %2867 = vmatprep.subr.bf16.mxu0 0
  %2868 = vmatpush1.bf16.msra.mxu0 0
  %2869 = vmatprep.subr.bf16.mxu0 0
  %2870 = vmatpush1.bf16.msra.mxu0 0
  %2871 = vmatprep.subr.bf16.mxu0 0
  %2872 = vmatpush1.bf16.msra.mxu0 0
  %2873 = vmatprep.mubr.bf16.mxu0 0
  %2874 = vmatmul.mubr.bf16.gmra.mrb[0].mxu0 %v2839
  %v2875 = vpop.f32.mrb[0].mxu0
  %v2876 = vadd.f32 0.0, %v2875
  %v2877 = vpop.f32.mrb[0].mxu0
  %v2878 = vadd.f32 0.0, %v2877
  %v2879 = vpop.f32.mrb[0].mxu0
  %v2880 = vpop.f32.mrb[0].mxu0
  %2881 = vdwg.mxu0
  %v2884 = vrot.slane %v2876, 4
  %v2885 = vrot.slane %v2878, 4
  %v2888 = vadd.f32 %v1909, %v2884
  %v2889 = vadd.f32 %v1911, %v2885
  %v2890 = vxor.u32 %v2831, 2147483648
  %v2891 = vxor.u32 %v2832, 2147483648
  %v2892 = vmul.f32 %v2890, 1.442695
  %v2893 = vpow.pop %v2892
  %v2894 = vmul.f32 %v2891, 1.442695
  %v2895 = vpow.pop %v2894
  %v2896 = vadd.f32 %v2893, 1.0
  %v2897 = vadd.f32 %v2895, 1.0
  %v2898 = vrcp.pop %v2896
  %v2899 = vmul.f32 1.0, %v2898
  %v2900 = vrcp.pop %v2897
  %v2901 = vmul.f32 1.0, %v2900
  %v2902 = vtanh.pop %v2832
  %v2903 = vxor.u32 %v2888, 2147483648
  %v2904 = vxor.u32 %v2889, 2147483648
  %v2905 = vmul.f32 %v2903, 1.442695
  %v2906 = vpow.pop %v2905
  %v2907 = vmul.f32 %v2904, 1.442695
  %v2908 = vpow.pop %v2907
  %v2909 = vadd.f32 %v2906, 1.0
  %v2910 = vadd.f32 %v2908, 1.0
  %v2911 = vrcp.pop %v2909
  %v2912 = vmul.f32 1.0, %v2911
  %v2913 = vrcp.pop %v2910
  %v2914 = vmul.f32 1.0, %v2913
  %v2915 = vtanh.pop %v2889
  %v2917 = vrot.slane %v2762, 6
  %v2919 = vmul.f32 %v2899, %v2917
  %v2920 = vmul.f32 %v2899, %v2902
  %2922 = vrot.lane.b32.xlu0 %v2920, 64
  %v2923 = vpop.permute.xlu0 %2922
  %v2925 = vadd.f32 %v2919, %v2923
  %v2926 = vtanh.pop %v2925
  %v2927 = vmul.f32 %v2901, %v2926
  %v2929 = vrot.slane %v2774, 2
  %v2931 = vmul.f32 %v2912, %v2929
  %v2932 = vmul.f32 %v2912, %v2915
  %2934 = vrot.lane.b32.xlu0 %v2932, 64
  %v2935 = vpop.permute.xlu0 %2934
  %v2937 = vadd.f32 %v2931, %v2935
  %v2938 = vtanh.pop %v2937
  %v2939 = vmul.f32 %v2914, %v2938
  %v2940 = vpack.c.bf16 %v2927, %v2927
  %v2942 = vrot.slane %v2940, 1
  %2943 = vrot.lane.b32.xlu0 %v2942, 64
  %v2944 = vpop.permute.xlu0 %2943
  %v2946 = vsel %vm1555, %v2944, 0
  %2948 = vmatprep.subr.bf16.mxu0 %v1942
  %2949 = vmatpush1.bf16.msra.mxu0 %v1941
  %2950 = vmatprep.subr.bf16.mxu0 %v1944
  %2951 = vmatpush1.bf16.msra.mxu0 %v1943
  %2952 = vmatprep.subr.bf16.mxu0 %v1946
  %2953 = vmatpush1.bf16.msra.mxu0 %v1945
  %2954 = vmatprep.subr.bf16.mxu0 %v1948
  %2955 = vmatpush1.bf16.msra.mxu0 %v1947
  %2956 = vmatprep.subr.bf16.mxu0 0
  %2957 = vmatpush1.bf16.msra.mxu0 0
  %2958 = vmatprep.subr.bf16.mxu0 0
  %2959 = vmatpush1.bf16.msra.mxu0 0
  %2960 = vmatprep.subr.bf16.mxu0 0
  %2961 = vmatpush1.bf16.msra.mxu0 0
  %2962 = vmatprep.subr.bf16.mxu0 0
  %2963 = vmatpush1.bf16.msra.mxu0 0
  %2964 = vmatprep.subr.bf16.mxu0 0
  %2965 = vmatpush1.bf16.msra.mxu0 0
  %2966 = vmatprep.subr.bf16.mxu0 0
  %2967 = vmatpush1.bf16.msra.mxu0 0
  %2968 = vmatprep.subr.bf16.mxu0 0
  %2969 = vmatpush1.bf16.msra.mxu0 0
  %2970 = vmatprep.subr.bf16.mxu0 0
  %2971 = vmatpush1.bf16.msra.mxu0 0
  %2972 = vmatprep.subr.bf16.mxu0 0
  %2973 = vmatpush1.bf16.msra.mxu0 0
  %2974 = vmatprep.subr.bf16.mxu0 0
  %2975 = vmatpush1.bf16.msra.mxu0 0
  %2976 = vmatprep.subr.bf16.mxu0 0
  %2977 = vmatpush1.bf16.msra.mxu0 0
  %2978 = vmatprep.subr.bf16.mxu0 0
  %2979 = vmatpush1.bf16.msra.mxu0 0
  %2980 = vmatprep.mubr.bf16.mxu0 0
  %2981 = vmatmul.mubr.bf16.gmra.mrb[0].mxu0 %v2946
  %v2982 = vpop.f32.mrb[0].mxu0
  %v2983 = vadd.f32 0.0, %v2982
  %v2984 = vpop.f32.mrb[0].mxu0
  %v2985 = vadd.f32 0.0, %v2984
  %v2986 = vpop.f32.mrb[0].mxu0
  %v2987 = vpop.f32.mrb[0].mxu0
  %2988 = vdwg.mxu0
  %v2991 = vrot.slane %v2983, 4
  %v2992 = vrot.slane %v2985, 4
  %v2995 = vadd.f32 %v1870, %v2991
  %v2996 = vadd.f32 %v1872, %v2992
  %v2997 = vpack.c.bf16 %v2939, %v2939
  %v2999 = vrot.slane %v2997, 2
  %3000 = vrot.lane.b32.xlu0 %v2999, 64
  %v3001 = vpop.permute.xlu0 %3000
  %v3003 = vsel %vm1555, %v3001, 0
  %3005 = vmatprep.subr.bf16.mxu0 %v2027
  %3006 = vmatpush1.bf16.msra.mxu0 %v2026
  %3007 = vmatprep.subr.bf16.mxu0 %v2029
  %3008 = vmatpush1.bf16.msra.mxu0 %v2028
  %3009 = vmatprep.subr.bf16.mxu0 %v2031
  %3010 = vmatpush1.bf16.msra.mxu0 %v2030
  %3011 = vmatprep.subr.bf16.mxu0 %v2033
  %3012 = vmatpush1.bf16.msra.mxu0 %v2032
  %3013 = vmatprep.subr.bf16.mxu0 0
  %3014 = vmatpush1.bf16.msra.mxu0 0
  %3015 = vmatprep.subr.bf16.mxu0 0
  %3016 = vmatpush1.bf16.msra.mxu0 0
  %3017 = vmatprep.subr.bf16.mxu0 0
  %3018 = vmatpush1.bf16.msra.mxu0 0
  %3019 = vmatprep.subr.bf16.mxu0 0
  %3020 = vmatpush1.bf16.msra.mxu0 0
  %3021 = vmatprep.subr.bf16.mxu0 0
  %3022 = vmatpush1.bf16.msra.mxu0 0
  %3023 = vmatprep.subr.bf16.mxu0 0
  %3024 = vmatpush1.bf16.msra.mxu0 0
  %3025 = vmatprep.subr.bf16.mxu0 0
  %3026 = vmatpush1.bf16.msra.mxu0 0
  %3027 = vmatprep.subr.bf16.mxu0 0
  %3028 = vmatpush1.bf16.msra.mxu0 0
  %3029 = vmatprep.subr.bf16.mxu0 0
  %3030 = vmatpush1.bf16.msra.mxu0 0
  %3031 = vmatprep.subr.bf16.mxu0 0
  %3032 = vmatpush1.bf16.msra.mxu0 0
  %3033 = vmatprep.subr.bf16.mxu0 0
  %3034 = vmatpush1.bf16.msra.mxu0 0
  %3035 = vmatprep.subr.bf16.mxu0 0
  %3036 = vmatpush1.bf16.msra.mxu0 0
  %3037 = vmatprep.mubr.bf16.mxu0 0
  %3038 = vmatmul.mubr.bf16.gmra.mrb[0].mxu0 %v3003
  %v3039 = vpop.f32.mrb[0].mxu0
  %v3040 = vadd.f32 0.0, %v3039
  %v3041 = vpop.f32.mrb[0].mxu0
  %v3042 = vadd.f32 0.0, %v3041
  %v3043 = vpop.f32.mrb[0].mxu0
  %v3044 = vpop.f32.mrb[0].mxu0
  %3045 = vdwg.mxu0
  %v3048 = vrot.slane %v3040, 6
  %v3049 = vrot.slane %v3042, 6
  %v3052 = vadd.f32 %v1909, %v3048
  %v3053 = vadd.f32 %v1911, %v3049
  %v3054 = vxor.u32 %v2995, 2147483648
  %v3055 = vxor.u32 %v2996, 2147483648
  %v3056 = vmul.f32 %v3054, 1.442695
  %v3057 = vpow.pop %v3056
  %v3058 = vmul.f32 %v3055, 1.442695
  %v3059 = vpow.pop %v3058
  %v3060 = vadd.f32 %v3057, 1.0
  %v3061 = vadd.f32 %v3059, 1.0
  %v3062 = vrcp.pop %v3060
  %v3063 = vmul.f32 1.0, %v3062
  %v3064 = vrcp.pop %v3061
  %v3065 = vmul.f32 1.0, %v3064
  %v3066 = vtanh.pop %v2996
  %v3067 = vxor.u32 %v3052, 2147483648
  %v3068 = vxor.u32 %v3053, 2147483648
  %v3069 = vmul.f32 %v3067, 1.442695
  %v3070 = vpow.pop %v3069
  %v3071 = vmul.f32 %v3068, 1.442695
  %v3072 = vpow.pop %v3071
  %v3073 = vadd.f32 %v3070, 1.0
  %v3074 = vadd.f32 %v3072, 1.0
  %v3075 = vrcp.pop %v3073
  %v3076 = vmul.f32 1.0, %v3075
  %v3077 = vrcp.pop %v3074
  %v3078 = vmul.f32 1.0, %v3077
  %v3079 = vtanh.pop %v3053
  %v3081 = vrot.slane %v2925, 6
  %v3083 = vmul.f32 %v3063, %v3081
  %v3084 = vmul.f32 %v3063, %v3066
  %3086 = vrot.lane.b32.xlu0 %v3084, 64
  %v3087 = vpop.permute.xlu0 %3086
  %v3089 = vadd.f32 %v3083, %v3087
  %v3090 = vtanh.pop %v3089
  %v3091 = vmul.f32 %v3065, %v3090
  %v3093 = vrot.slane %v2937, 2
  %v3095 = vmul.f32 %v3076, %v3093
  %v3096 = vmul.f32 %v3076, %v3079
  %3098 = vrot.lane.b32.xlu0 %v3096, 64
  %v3099 = vpop.permute.xlu0 %3098
  %v3101 = vadd.f32 %v3095, %v3099
  %v3102 = vtanh.pop %v3101
  %v3103 = vmul.f32 %v3078, %v3102
  %v3104 = vpack.c.bf16 %v3091, %v3091
  %v3106 = vrot.slane %v3104, 2
  %3107 = vrot.lane.b32.xlu0 %v3106, 64
  %v3108 = vpop.permute.xlu0 %3107
  %v3110 = vsel %vm1555, %v3108, 0
  %3112 = vmatprep.subr.bf16.mxu0 %v1942
  %3113 = vmatpush1.bf16.msra.mxu0 %v1941
  %3114 = vmatprep.subr.bf16.mxu0 %v1944
  %3115 = vmatpush1.bf16.msra.mxu0 %v1943
  %3116 = vmatprep.subr.bf16.mxu0 %v1946
  %3117 = vmatpush1.bf16.msra.mxu0 %v1945
  %3118 = vmatprep.subr.bf16.mxu0 %v1948
  %3119 = vmatpush1.bf16.msra.mxu0 %v1947
  %3120 = vmatprep.subr.bf16.mxu0 0
  %3121 = vmatpush1.bf16.msra.mxu0 0
  %3122 = vmatprep.subr.bf16.mxu0 0
  %3123 = vmatpush1.bf16.msra.mxu0 0
  %3124 = vmatprep.subr.bf16.mxu0 0
  %3125 = vmatpush1.bf16.msra.mxu0 0
  %3126 = vmatprep.subr.bf16.mxu0 0
  %3127 = vmatpush1.bf16.msra.mxu0 0
  %3128 = vmatprep.subr.bf16.mxu0 0
  %3129 = vmatpush1.bf16.msra.mxu0 0
  %3130 = vmatprep.subr.bf16.mxu0 0
  %3131 = vmatpush1.bf16.msra.mxu0 0
  %3132 = vmatprep.subr.bf16.mxu0 0
  %3133 = vmatpush1.bf16.msra.mxu0 0
  %3134 = vmatprep.subr.bf16.mxu0 0
  %3135 = vmatpush1.bf16.msra.mxu0 0
  %3136 = vmatprep.subr.bf16.mxu0 0
  %3137 = vmatpush1.bf16.msra.mxu0 0
  %3138 = vmatprep.subr.bf16.mxu0 0
  %3139 = vmatpush1.bf16.msra.mxu0 0
  %3140 = vmatprep.subr.bf16.mxu0 0
  %3141 = vmatpush1.bf16.msra.mxu0 0
  %3142 = vmatprep.subr.bf16.mxu0 0
  %3143 = vmatpush1.bf16.msra.mxu0 0
  %3144 = vmatprep.mubr.bf16.mxu0 0
  %3145 = vmatmul.mubr.bf16.gmra.mrb[0].mxu0 %v3110
  %v3146 = vpop.f32.mrb[0].mxu0
  %v3147 = vadd.f32 0.0, %v3146
  %v3148 = vpop.f32.mrb[0].mxu0
  %v3149 = vadd.f32 0.0, %v3148
  %v3150 = vpop.f32.mrb[0].mxu0
  %v3151 = vpop.f32.mrb[0].mxu0
  %3152 = vdwg.mxu0
  %v3155 = vrot.slane %v3147, 2
  %v3156 = vrot.slane %v3149, 2
  %v3159 = vadd.f32 %v1870, %v3155
  %v3160 = vadd.f32 %v1872, %v3156
  %v3161 = vpack.c.bf16 %v3103, %v3103
  %v3163 = vrot.slane %v3161, 1
  %3164 = vrot.lane.b32.xlu0 %v3163, 64
  %v3165 = vpop.permute.xlu0 %3164
  %v3167 = vsel %vm1555, %v3165, 0
  %3169 = vmatprep.subr.bf16.mxu0 %v2027
  %3170 = vmatpush1.bf16.msra.mxu0 %v2026
  %3171 = vmatprep.subr.bf16.mxu0 %v2029
  %3172 = vmatpush1.bf16.msra.mxu0 %v2028
  %3173 = vmatprep.subr.bf16.mxu0 %v2031
  %3174 = vmatpush1.bf16.msra.mxu0 %v2030
  %3175 = vmatprep.subr.bf16.mxu0 %v2033
  %3176 = vmatpush1.bf16.msra.mxu0 %v2032
  %3177 = vmatprep.subr.bf16.mxu0 0
  %3178 = vmatpush1.bf16.msra.mxu0 0
  %3179 = vmatprep.subr.bf16.mxu0 0
  %3180 = vmatpush1.bf16.msra.mxu0 0
  %3181 = vmatprep.subr.bf16.mxu0 0
  %3182 = vmatpush1.bf16.msra.mxu0 0
  %3183 = vmatprep.subr.bf16.mxu0 0
  %3184 = vmatpush1.bf16.msra.mxu0 0
  %3185 = vmatprep.subr.bf16.mxu0 0
  %3186 = vmatpush1.bf16.msra.mxu0 0
  %3187 = vmatprep.subr.bf16.mxu0 0
  %3188 = vmatpush1.bf16.msra.mxu0 0
  %3189 = vmatprep.subr.bf16.mxu0 0
  %3190 = vmatpush1.bf16.msra.mxu0 0
  %3191 = vmatprep.subr.bf16.mxu0 0
  %3192 = vmatpush1.bf16.msra.mxu0 0
  %3193 = vmatprep.subr.bf16.mxu0 0
  %3194 = vmatpush1.bf16.msra.mxu0 0
  %3195 = vmatprep.subr.bf16.mxu0 0
  %3196 = vmatpush1.bf16.msra.mxu0 0
  %3197 = vmatprep.subr.bf16.mxu0 0
  %3198 = vmatpush1.bf16.msra.mxu0 0
  %3199 = vmatprep.subr.bf16.mxu0 0
  %3200 = vmatpush1.bf16.msra.mxu0 0
  %3201 = vmatprep.mubr.bf16.mxu0 0
  %3202 = vmatmul.mubr.bf16.gmra.mrb[0].mxu0 %v3167
  %v3203 = vpop.f32.mrb[0].mxu0
  %v3204 = vadd.f32 0.0, %v3203
  %v3205 = vpop.f32.mrb[0].mxu0
  %v3206 = vadd.f32 0.0, %v3205
  %v3207 = vpop.f32.mrb[0].mxu0
  %v3208 = vpop.f32.mrb[0].mxu0
  %3209 = vdwg.mxu0
  %v3210 = vadd.f32 %v1909, %v3204
  %v3211 = vadd.f32 %v1911, %v3206
  %v3212 = vxor.u32 %v3159, 2147483648
  %v3213 = vxor.u32 %v3160, 2147483648
  %v3214 = vmul.f32 %v3212, 1.442695
  %v3215 = vpow.pop %v3214
  %v3216 = vmul.f32 %v3213, 1.442695
  %v3217 = vpow.pop %v3216
  %v3218 = vadd.f32 %v3215, 1.0
  %v3219 = vadd.f32 %v3217, 1.0
  %v3220 = vrcp.pop %v3218
  %v3221 = vmul.f32 1.0, %v3220
  %v3222 = vrcp.pop %v3219
  %v3223 = vmul.f32 1.0, %v3222
  %v3224 = vtanh.pop %v3160
  %v3225 = vxor.u32 %v3210, 2147483648
  %v3226 = vxor.u32 %v3211, 2147483648
  %v3227 = vmul.f32 %v3225, 1.442695
  %v3228 = vpow.pop %v3227
  %v3229 = vmul.f32 %v3226, 1.442695
  %v3230 = vpow.pop %v3229
  %v3231 = vadd.f32 %v3228, 1.0
  %v3232 = vadd.f32 %v3230, 1.0
  %v3233 = vrcp.pop %v3231
  %v3234 = vmul.f32 1.0, %v3233
  %v3235 = vrcp.pop %v3232
  %v3236 = vmul.f32 1.0, %v3235
  %v3237 = vtanh.pop %v3211
  %v3239 = vrot.slane %v3089, 6
  %v3241 = vmul.f32 %v3221, %v3239
  %v3242 = vmul.f32 %v3221, %v3224
  %3244 = vrot.lane.b32.xlu0 %v3242, 64
  %v3245 = vpop.permute.xlu0 %3244
  %v3247 = vadd.f32 %v3241, %v3245
  %v3248 = vtanh.pop %v3247
  %v3249 = vmul.f32 %v3223, %v3248
  %v3251 = vrot.slane %v3101, 2
  %v3253 = vmul.f32 %v3234, %v3251
  %v3254 = vmul.f32 %v3234, %v3237
  %3256 = vrot.lane.b32.xlu0 %v3254, 64
  %v3257 = vpop.permute.xlu0 %3256
  %v3259 = vadd.f32 %v3253, %v3257
  %v3260 = vtanh.pop %v3259
  %v3261 = vmul.f32 %v3236, %v3260
  %v3262 = vld [vmem:[%s0] sm:$0x3]
  %vm3263 = vcmp.eq.s32.totalorder %v3262, 0
  %v3264 = vsel %vm3263, 1, 0
  %3265 = vset.pattern.permute.xlu0 0
  %3266 = vperm.xlu0 %3265, %v3264
  %v3267 = vpop.permute.xlu0 %3266
  %vm3268 = vcmp.eq.s32.totalorder %v3267, 1
  %v3269 = vsel %vm3268, %v2125, 0.0
  %v3270 = vsel %vm3268, %v3261, 0.0
  %vm3271 = vcmp.eq.s32.totalorder %v3262, 1
  %v3272 = vsel %vm3271, 1, 0
  %3273 = vset.pattern.permute.xlu0 0
  %3274 = vperm.xlu0 %3273, %v3272
  %v3275 = vpop.permute.xlu0 %3274
  %vm3276 = vcmp.eq.s32.totalorder %v3275, 1
  %v3278 = vrot.slane %v2285, 2
  %3279 = vrot.lane.b32.xlu0 %v3278, 64
  %v3280 = vpop.permute.xlu0 %3279
  %3283 = vrot.lane.b32.xlu0 %v3269, 64
  %v3284 = vpop.permute.xlu0 %3283
  %v3286 = vsel %vm3276, %v3280, %v3284
  %v3288 = vrot.slane %v3103, 2
  %3289 = vrot.lane.b32.xlu0 %v3288, 64
  %v3290 = vpop.permute.xlu0 %3289
  %3293 = vrot.lane.b32.xlu0 %v3270, 64
  %v3294 = vpop.permute.xlu0 %3293
  %v3296 = vsel %vm3276, %v3290, %v3294
  %vm3297 = vcmp.eq.s32.totalorder %v3262, 2
  %v3298 = vsel %vm3297, 1, 0
  %3299 = vset.pattern.permute.xlu0 0
  %3300 = vperm.xlu0 %3299, %v3298
  %v3301 = vpop.permute.xlu0 %3300
  %vm3302 = vcmp.eq.s32.totalorder %v3301, 1
  %v3304 = vrot.slane %v2449, 4
  %3305 = vrot.lane.b32.xlu0 %v3304, 64
  %v3306 = vpop.permute.xlu0 %3305
  %v3308 = vsel %vm3302, %v3306, %v3286
  %v3310 = vrot.slane %v2939, 4
  %3311 = vrot.lane.b32.xlu0 %v3310, 64
  %v3312 = vpop.permute.xlu0 %3311
  %v3314 = vsel %vm3302, %v3312, %v3296
  %vm3315 = vcmp.eq.s32.totalorder %v3262, 3
  %v3316 = vsel %vm3315, 1, 0
  %3317 = vset.pattern.permute.xlu0 0
  %3318 = vperm.xlu0 %3317, %v3316
  %v3319 = vpop.permute.xlu0 %3318
  %vm3320 = vcmp.eq.s32.totalorder %v3319, 1
  %v3322 = vrot.slane %v2607, 6
  %3323 = vrot.lane.b32.xlu0 %v3322, 64
  %v3324 = vpop.permute.xlu0 %3323
  %v3326 = vsel %vm3320, %v3324, %v3308
  %v3328 = vrot.slane %v2776, 6
  %3329 = vrot.lane.b32.xlu0 %v3328, 64
  %v3330 = vpop.permute.xlu0 %3329
  %v3332 = vsel %vm3320, %v3330, %v3314
  %vm3333 = vcmp.eq.s32.totalorder %v3262, 4
  %v3334 = vsel %vm3333, 1, 0
  %3335 = vset.pattern.permute.xlu0 0
  %3336 = vperm.xlu0 %3335, %v3334
  %v3337 = vpop.permute.xlu0 %3336
  %vm3338 = vcmp.eq.s32.totalorder %v3337, 1
  %3340 = vrot.lane.b32.xlu0 %v3326, 64
  %v3341 = vpop.permute.xlu0 %3340
  %v3343 = vsel %vm3338, %v2764, %v3341
  %3345 = vrot.lane.b32.xlu0 %v3332, 64
  %v3346 = vpop.permute.xlu0 %3345
  %v3348 = vsel %vm3338, %v2619, %v3346
  %vm3349 = vcmp.eq.s32.totalorder %v3262, 5
  %v3350 = vsel %vm3349, 1, 0
  %3351 = vset.pattern.permute.xlu0 0
  %3352 = vperm.xlu0 %3351, %v3350
  %v3353 = vpop.permute.xlu0 %3352
  %vm3354 = vcmp.eq.s32.totalorder %v3353, 1
  %v3356 = vrot.slane %v2927, 2
  %3357 = vrot.lane.b32.xlu0 %v3356, 64
  %v3358 = vpop.permute.xlu0 %3357
  %3361 = vrot.lane.b32.xlu0 %v3343, 64
  %v3362 = vpop.permute.xlu0 %3361
  %v3364 = vsel %vm3354, %v3358, %v3362
  %v3366 = vrot.slane %v2461, 2
  %3367 = vrot.lane.b32.xlu0 %v3366, 64
  %v3368 = vpop.permute.xlu0 %3367
  %3371 = vrot.lane.b32.xlu0 %v3348, 64
  %v3372 = vpop.permute.xlu0 %3371
  %v3374 = vsel %vm3354, %v3368, %v3372
  %vm3375 = vcmp.eq.s32.totalorder %v3262, 6
  %v3376 = vsel %vm3375, 1, 0
  %3377 = vset.pattern.permute.xlu0 0
  %3378 = vperm.xlu0 %3377, %v3376
  %v3379 = vpop.permute.xlu0 %3378
  %vm3380 = vcmp.eq.s32.totalorder %v3379, 1
  %v3382 = vrot.slane %v3091, 4
  %3383 = vrot.lane.b32.xlu0 %v3382, 64
  %v3384 = vpop.permute.xlu0 %3383
  %v3386 = vsel %vm3380, %v3384, %v3364
  %v3388 = vrot.slane %v2297, 4
  %3389 = vrot.lane.b32.xlu0 %v3388, 64
  %v3390 = vpop.permute.xlu0 %3389
  %v3392 = vsel %vm3380, %v3390, %v3374
  %vm3393 = vcmp.eq.s32.totalorder %v3262, 7
  %v3394 = vsel %vm3393, 1, 0
  %3395 = vset.pattern.permute.xlu0 0
  %3396 = vperm.xlu0 %3395, %v3394
  %v3397 = vpop.permute.xlu0 %3396
  %vm3398 = vcmp.eq.s32.totalorder %v3397, 1
  %v3400 = vrot.slane %v3249, 6
  %3401 = vrot.lane.b32.xlu0 %v3400, 64
  %v3402 = vpop.permute.xlu0 %3401
  %v3404 = vsel %vm3398, %v3402, %v3386
  %v3406 = vrot.slane %v2134, 6
  %3407 = vrot.lane.b32.xlu0 %v3406, 64
  %v3408 = vpop.permute.xlu0 %3407
  %v3410 = vsel %vm3398, %v3408, %v3392
  %3412 = vrot.lane.b32.xlu0 %v3410, 64
  %v3413 = vpop.permute.xlu0 %3412
  %v3415 = vsel %vm1555, %v3404, %v3413
  %v3416 = vpack.c.bf16 %v3415, %v3415
  %v3417 = vld [vmem:[%s15] sm:$0xf]
  %v3418 = vld [vmem:[%s15 + $0x4] sm:$0xf]
  %v3419 = vld [vmem:[%s15 + $0x8] sm:$0xf]
  %v3420 = vld [vmem:[%s15 + $0xc] sm:$0xf]
  %v3421 = vld [vmem:[%s15 + $0x10] sm:$0xf]
  %v3422 = vld [vmem:[%s15 + $0x14] sm:$0xf]
  %v3423 = vld [vmem:[%s15 + $0x18] sm:$0xf]
  %v3424 = vld [vmem:[%s15 + $0x1c] sm:$0xf]
  %v3425 = vld [vmem:[%s15 + $0x20] sm:$0xf]
  %v3426 = vld [vmem:[%s15 + $0x24] sm:$0xf]
  %v3427 = vld [vmem:[%s15 + $0x28] sm:$0xf]
  %v3428 = vld [vmem:[%s15 + $0x2c] sm:$0xf]
  %v3429 = vld [vmem:[%s15 + $0x30] sm:$0xf]
  %v3430 = vld [vmem:[%s15 + $0x34] sm:$0xf]
  %v3431 = vld [vmem:[%s15 + $0x38] sm:$0xf]
  %v3432 = vld [vmem:[%s15 + $0x3c] sm:$0xf]
  %v3433 = vld [vmem:[%s16] sm:$0x1]
  %v3435 = vlaneseq
  %v3436 = vshrl.u32 %v3435, 7
  %v3437 = vsub.s32 0, %v3436
  %v3438 = vrot.slane %v3433, %v3437
  %v3456 = vunpack.c.l.b16 %v3417
  %v3457 = vunpack.c.l.b16 %v3418
  %v3458 = vunpack.c.l.b16 %v3419
  %v3459 = vunpack.c.l.b16 %v3420
  %v3460 = vunpack.c.l.b16 %v3421
  %v3461 = vunpack.c.l.b16 %v3422
  %v3462 = vunpack.c.l.b16 %v3423
  %v3463 = vunpack.c.l.b16 %v3424
  %v3464 = vunpack.c.l.b16 %v3425
  %v3465 = vunpack.c.l.b16 %v3426
  %v3466 = vunpack.c.l.b16 %v3427
  %v3467 = vunpack.c.l.b16 %v3428
  %v3468 = vunpack.c.l.b16 %v3429
  %v3469 = vunpack.c.l.b16 %v3430
  %v3470 = vunpack.c.l.b16 %v3431
  %v3471 = vunpack.c.l.b16 %v3432
  %v3472 = vpack.c.b16 %v3457, %v3456
  %v3473 = vpack.c.b16 %v3459, %v3458
  %v3474 = vpack.c.b16 %v3461, %v3460
  %v3475 = vpack.c.b16 %v3463, %v3462
  %v3476 = vpack.c.b16 %v3465, %v3464
  %v3477 = vpack.c.b16 %v3467, %v3466
  %v3478 = vpack.c.b16 %v3469, %v3468
  %v3479 = vpack.c.b16 %v3471, %v3470
  %3488 = vmatprep.subr.bf16.mxu0 0
  %3489 = vmatpush1.bf16.msra.mxu0 %v3472
  %3490 = vmatprep.subr.bf16.mxu0 0
  %3491 = vmatpush1.bf16.msra.mxu0 %v3473
  %3492 = vmatprep.subr.bf16.mxu0 0
  %3493 = vmatpush1.bf16.msra.mxu0 %v3474
  %3494 = vmatprep.subr.bf16.mxu0 0
  %3495 = vmatpush1.bf16.msra.mxu0 %v3475
  %3496 = vmatprep.subr.bf16.mxu0 0
  %3497 = vmatpush1.bf16.msra.mxu0 %v3476
  %3498 = vmatprep.subr.bf16.mxu0 0
  %3499 = vmatpush1.bf16.msra.mxu0 %v3477
  %3500 = vmatprep.subr.bf16.mxu0 0
  %3501 = vmatpush1.bf16.msra.mxu0 %v3478
  %3502 = vmatprep.subr.bf16.mxu0 0
  %3503 = vmatpush1.bf16.msra.mxu0 %v3479
  %3504 = vmatprep.subr.bf16.mxu0 0
  %3505 = vmatpush1.bf16.msra.mxu0 0
  %3506 = vmatprep.subr.bf16.mxu0 0
  %3507 = vmatpush1.bf16.msra.mxu0 0
  %3508 = vmatprep.subr.bf16.mxu0 0
  %3509 = vmatpush1.bf16.msra.mxu0 0
  %3510 = vmatprep.subr.bf16.mxu0 0
  %3511 = vmatpush1.bf16.msra.mxu0 0
  %3512 = vmatprep.subr.bf16.mxu0 0
  %3513 = vmatpush1.bf16.msra.mxu0 0
  %3514 = vmatprep.subr.bf16.mxu0 0
  %3515 = vmatpush1.bf16.msra.mxu0 0
  %3516 = vmatprep.subr.bf16.mxu0 0
  %3517 = vmatpush1.bf16.msra.mxu0 0
  %3518 = vmatprep.subr.bf16.mxu0 0
  %3519 = vmatpush1.bf16.msra.mxu0 0
  %3520 = vmatprep.mubr.bf16.mxu0 0
  %3521 = vmatmul.mubr.bf16.gmra.mrb[0].mxu0 %v3416
  %v3522 = vpop.f32.mrb[0].mxu0
  %v3523 = vadd.f32 %v3438, %v3522
  %v3524 = vpop.f32.mrb[0].mxu0
  %v3525 = vpop.f32.mrb[0].mxu0
  %v3526 = vpop.f32.mrb[0].mxu0
  %3527 = vdwg.mxu0
  %v3528 = vmax.f32 %v3523, 0.0
  %v3529 = vpack.c.bf16 %v3528, %v3528
  %v3530 = vld [vmem:[%s17] sm:$0xf]
  %v3531 = vld [vmem:[%s17 + $0x4] sm:$0xf]
  %v3532 = vld [vmem:[%s17 + $0x8] sm:$0xf]
  %v3533 = vld [vmem:[%s17 + $0xc] sm:$0xf]
  %v3534 = vld [vmem:[#allocation3] sm:$0x1]
  %v3536 = vlaneseq
  %v3537 = vshrl.u32 %v3536, 7
  %v3538 = vsub.s32 0, %v3537
  %v3539 = vrot.slane %v3534, %v3538
  %v3545 = vunpack.c.l.b16 %v3530
  %v3546 = vunpack.c.l.b16 %v3531
  %v3547 = vunpack.c.l.b16 %v3532
  %v3548 = vunpack.c.l.b16 %v3533
  %v3549 = vpack.c.b16 %v3546, %v3545
  %v3550 = vpack.c.b16 %v3548, %v3547
  %v3554 = vsel %vm116, %v3529, 0
  %3556 = vmatprep.subr.bf16.mxu0 0
  %3557 = vmatpush1.bf16.msra.mxu0 %v3549
  %3558 = vmatprep.subr.bf16.mxu0 0
  %3559 = vmatpush1.bf16.msra.mxu0 %v3550
  %3560 = vmatprep.subr.bf16.mxu0 0
  %3561 = vmatpush1.bf16.msra.mxu0 0
  %3562 = vmatprep.subr.bf16.mxu0 0
  %3563 = vmatpush1.bf16.msra.mxu0 0
  %3564 = vmatprep.subr.bf16.mxu0 0
  %3565 = vmatpush1.bf16.msra.mxu0 0
  %3566 = vmatprep.subr.bf16.mxu0 0
  %3567 = vmatpush1.bf16.msra.mxu0 0
  %3568 = vmatprep.subr.bf16.mxu0 0
  %3569 = vmatpush1.bf16.msra.mxu0 0
  %3570 = vmatprep.subr.bf16.mxu0 0
  %3571 = vmatpush1.bf16.msra.mxu0 0
  %3572 = vmatprep.subr.bf16.mxu0 0
  %3573 = vmatpush1.bf16.msra.mxu0 0
  %3574 = vmatprep.subr.bf16.mxu0 0
  %3575 = vmatpush1.bf16.msra.mxu0 0
  %3576 = vmatprep.subr.bf16.mxu0 0
  %3577 = vmatpush1.bf16.msra.mxu0 0
  %3578 = vmatprep.subr.bf16.mxu0 0
  %3579 = vmatpush1.bf16.msra.mxu0 0
  %3580 = vmatprep.subr.bf16.mxu0 0
  %3581 = vmatpush1.bf16.msra.mxu0 0
  %3582 = vmatprep.subr.bf16.mxu0 0
  %3583 = vmatpush1.bf16.msra.mxu0 0
  %3584 = vmatprep.subr.bf16.mxu0 0
  %3585 = vmatpush1.bf16.msra.mxu0 0
  %3586 = vmatprep.subr.bf16.mxu0 0
  %3587 = vmatpush1.bf16.msra.mxu0 0
  %3588 = vmatprep.mubr.bf16.mxu0 0
  %3589 = vmatmul.mubr.bf16.gmra.mrb[0].mxu0 %v3554
  %v3590 = vpop.f32.mrb[0].mxu0
  %v3591 = vadd.f32 %v3539, %v3590
  %v3592 = vpop.f32.mrb[0].mxu0
  %v3593 = vpop.f32.mrb[0].mxu0
  %v3594 = vpop.f32.mrb[0].mxu0
  %3595 = vdwg.mxu0
  %vm3596 = vcmask 1024
  %3597 = vst.msk [vmem:[%s19] sm:$0x3] %vm3596, %v3591
  // Predicated region
  $region78: #{graph_state_2eep_forward.1} parent=0 // pred_check
    _
  $region79: #{graph_state_2eep_forward.1} parent=0 // pred_check_branch
    %3599 = sbr.rel (0) target = $region81
  $region80: #{graph_state_2eep_forward.1} parent=0 // pred_region
    _
  $region81: #{graph_state_2eep_forward.1} parent=0 // pred_fallthru
    _
  // Predicated region
  $region82: #{graph_state_2eep_forward.1} parent=0 // pred_check
    _
  $region83: #{graph_state_2eep_forward.1} parent=0 // pred_check_branch
    %3601 = sbr.rel (0) target = $region85
  $region84: #{graph_state_2eep_forward.1} parent=0 // pred_region
    _
  $region85: #{graph_state_2eep_forward.1} parent=0 // pred_fallthru
    _

</llo_original>
